<compile_context>
chip_gen: v7x
topology: tpu7x:2x2x1
jax: 0.10.0
libtpu: 0.0.40
codegen_flags: <defaults>
</compile_context>

<pallas_src>
import functools
import math

import jax
import jax.numpy as jnp
from jax import lax
from jax.experimental import pallas as pl
from jax.experimental.pallas import tpu as pltpu


def _gated_xattn_kernel(hs_ref, enc_ref, mask_ref,
                        wq_ref, bq_ref, wkv_ref, bkv_ref, wo_ref, bo_ref,
                        gate_ref,
                        *rest,
                        num_heads, head_dim, hidden, apply_gate, emit_attn,
                        compute_dtype, exp_dtype):
    n_out = 2 if emit_attn else 1
    out_ref = rest[0]
    attnw_ref = rest[1] if emit_attn else None
    kv_ref, ctx_ref = rest[n_out], rest[n_out + 1]

    cdt = compute_dtype
    qi = pl.program_id(1)

    # K/V projection: only once per batch element (qi == 0); result is cached in a VMEM
    # scratch that persists across the inner ("arbitrary") qi grid axis.
    @pl.when(qi == 0)
    def _():
        enc = enc_ref[0]                                                    # (Tk, H)
        kv = jnp.dot(enc, wkv_ref[...],
                     preferred_element_type=jnp.float32) + bkv_ref[...]     # (Tk, 2H) f32 acc
        kv_ref[...] = kv.astype(cdt)

    hs = hs_ref[0]                        # (tq, H) compute dtype
    mask = mask_ref[0, 0]                 # (1, Tk) f32 additive, broadcasts over queries
    scale = jnp.float32(1.0 / math.sqrt(head_dim))

    # Q projection: f32 accumulation; 1/sqrt(head_dim) folded into q (Tq*H mults) instead of
    # scaling every (tq, Tk) score tile.
    q = (jnp.dot(hs, wq_ref[...], preferred_element_type=jnp.float32) + bq_ref[...]) * scale
    q = q.astype(cdt)
    kv = kv_ref[...]                      # (Tk, 2H) compute dtype (cached K | V)

    # QK^T: contract the last dim of BOTH operands -> no explicit k.T (no XLU transpose).
    qk_dims = (((1,), (1,)), ((), ()))

    for h in range(num_heads):            # static, unrolled over heads
        ksl = slice(h * head_dim, (h + 1) * head_dim)
        vsl = slice(hidden + h * head_dim, hidden + (h + 1) * head_dim)
        s = lax.dot_general(q[:, ksl], kv[:, ksl], qk_dims,
                            preferred_element_type=jnp.float32)             # (tq, Tk) f32
        s = s + mask
        s = s - jnp.max(s, axis=-1, keepdims=True)      # stable softmax, f32 reductions
        # bf16 exp uses the v6e/v7x EUP bf16 path (exp_dtype == f32 keeps this a no-op).
        e = jnp.exp(s.astype(exp_dtype)).astype(jnp.float32)
        p = e * pl.reciprocal(jnp.sum(e, axis=-1, keepdims=True), approx=True)
        if emit_attn:
            attnw_ref[0, h] = p.astype(attnw_ref.dtype)
        ctx = jnp.dot(p.astype(cdt), kv[:, vsl], preferred_element_type=jnp.float32)
        # merge-heads: lane-offset store into the (tq, H) VMEM scratch
        # (masked lane stores when head_dim % 128 != 0).
        ctx_ref[:, ksl] = ctx.astype(cdt)

    # Fused merge-heads + output projection: a single (tq, H) @ (H, H) MXU pass.
    o = jnp.dot(ctx_ref[...], wo_ref[...], preferred_element_type=jnp.float32) + bo_ref[...]
    if apply_gate:
        o = o * gate_ref[0, 0]            # tanh(gate) precomputed, SMEM scalar
    out_ref[0] = o.astype(out_ref.dtype)


def _vmem_capacity_bytes():
    try:
        return int(pltpu.get_tpu_info().vmem_capacity_bytes)
    except Exception:
        return 64 * 1024 * 1024           # conservative: v7x per-TC VMEM


def _tile_bytes(tq, Tk, H, NH, cdt_size, out_size, emit_attn):
    """Approximate VMEM footprint for one grid step (double-buffered where applicable)."""
    b = 2 * tq * H * (cdt_size + out_size)               # hs in + out blocks (double-buffered)
    if emit_attn:
        b += 2 * NH * tq * Tk * out_size                 # attention-weight out block
    b += Tk * H * cdt_size + Tk * 4                      # enc block (single-buffered) + mask
    b += 4 * H * H * cdt_size + 4 * H * 4                # Wq/Wkv/Wo (single-buffered) + biases
    b += 2 * Tk * H * cdt_size + tq * H * cdt_size       # kv / ctx VMEM scratch
    b += 4 * (2 * tq * H + 2 * Tk * H + 3 * tq * Tk)     # live f32 intermediates (q, kv, s/e/p)
    return b


def _pick_q_tile(Tq, fits, max_tile):
    """Largest sublane-aligned divisor of Tq within the VMEM budget (full Tq allowed)."""
    cands = []
    if Tq <= max_tile:
        cands.append(Tq)
    for c in (512, 256, 128, 64, 32, 16, 8):
        if c <= max_tile and c < Tq and Tq % c == 0:
            cands.append(c)
    if not cands:
        # TODO(synk): pad + mask Tq when it has no sublane-aligned divisor <= max_tile.
        return Tq
    for tq in cands:
        if fits(tq):
            return tq
    return cands[-1]


def _make_spec(shape, index_map, *, single_buffer=False):
    """BlockSpec; constant-index blocks are single-buffered to halve their VMEM footprint."""
    if single_buffer:
        try:
            return pl.BlockSpec(shape, index_map, pipeline_mode=pl.Buffered(1))
        except (AttributeError, TypeError):
            pass
    return pl.BlockSpec(shape, index_map)


def gated_cross_attention_block(hidden_states, attention_mask, head_mask,
                                encoder_hidden_states, encoder_attention_mask,
                                output_attentions, params, *, num_heads,
                                know_norm="", compute_dtype=jnp.bfloat16,
                                bf16_softmax_exp=True):
    # attention_mask / head_mask are accepted for signature fidelity but (like the PyTorch
    # module) unused.  Unlike the PyTorch module, attention weights are only materialized
    # (and returned) when output_attentions is truthy -- otherwise None is returned, which
    # removes the (B, NH, Tq, Tk) HBM writeback entirely.
    del attention_mask, head_mask

    B, Tq, H = hidden_states.shape
    _, Tk, _ = encoder_hidden_states.shape
    head_dim = H // num_heads
    apply_gate_in_kernel = (know_norm != "var")
    out_dtype = hidden_states.dtype
    emit_attn = bool(output_attentions)

    cdt = jnp.dtype(compute_dtype)
    # bf16 exp only pays off where the EUP has a bf16 path (v6e/v7x); disable on v5e.
    exp_dtype = cdt if (bf16_softmax_exp and cdt == jnp.bfloat16) else jnp.float32

    # Cast MXU inputs (activations + weights) to the compute dtype in the wrapper so the
    # weight DMA bytes are also halved for bf16; biases / mask stay f32.
    hs_c = hidden_states.astype(cdt)
    enc_c = encoder_hidden_states.astype(cdt)
    mask_f = encoder_attention_mask.astype(jnp.float32)
    wq_c = params["wq"].astype(cdt)
    # Wk / Wv fused into one (H, 2H) weight -> single enc @ Wkv MXU pass in the kernel.
    wkv_c = jnp.concatenate([params["wk"], params["wv"]], axis=1).astype(cdt)
    wo_c = params["wo"].astype(cdt)
    bq = params["bq"].astype(jnp.float32).reshape(1, H)
    bkv = jnp.concatenate([params["bk"].reshape(1, H),
                           params["bv"].reshape(1, H)], axis=1).astype(jnp.float32)
    bo = params["bo"].astype(jnp.float32).reshape(1, H)
    gate_t = jnp.tanh(jnp.asarray(params["gate"], jnp.float32)).reshape(1, 1)

    odt_size = jnp.dtype(out_dtype).itemsize
    vmem_cap = _vmem_capacity_bytes()
    vmem_budget = int(0.8 * vmem_cap)
    max_tile = 256 if vmem_cap <= 64 * 1024 * 1024 else 512

    def fits(t):
        return _tile_bytes(t, Tk, H, num_heads, cdt.itemsize, odt_size, emit_attn) <= vmem_budget

    tq = _pick_q_tile(Tq, fits, max_tile)
    nqt = Tq // tq if Tq % tq == 0 else 1
    if tq == Tq:
        nqt = 1
    grid = (B, nqt)

    kernel = functools.partial(
        _gated_xattn_kernel, num_heads=num_heads, head_dim=head_dim, hidden=H,
        apply_gate=apply_gate_in_kernel, emit_attn=emit_attn,
        compute_dtype=cdt, exp_dtype=exp_dtype)

    out_shapes = [jax.ShapeDtypeStruct((B, Tq, H), out_dtype)]
    if emit_attn:
        # TODO(synk): for large NH*tq*Tk (v7x) split this output over a head grid axis.
        out_shapes.append(jax.ShapeDtypeStruct((B, num_heads, Tq, Tk), out_dtype))

    # Advisory cost estimate for XLA scheduling around the custom call.
    flops = B * (4 * Tk * H * H + 4 * Tq * H * H + 4 * Tq * Tk * H)
    transcendentals = B * num_heads * Tq * (Tk + 1)
    in_bytes = (hs_c.size * cdt.itemsize + enc_c.size * cdt.itemsize   # enc fetched once per b
                + mask_f.size * 4
                + (wq_c.size + wkv_c.size + wo_c.size) * cdt.itemsize
                + (bq.size + bkv.size + bo.size) * 4 + 4)
    out_bytes = B * Tq * H * odt_size
    if emit_attn:
        out_bytes += B * num_heads * Tq * Tk * odt_size
    cost = pl.CostEstimate(flops=int(flops), transcendentals=int(transcendentals),
                           bytes_accessed=int(in_bytes + out_bytes))

    step_bytes = _tile_bytes(tq, Tk, H, num_heads, cdt.itemsize, odt_size, emit_attn)
    vmem_limit = int(min(int(0.85 * vmem_cap), max(32 * 1024 * 1024, 2 * step_bytes)))

    def _call(single_buffer):
        x_spec = pl.BlockSpec((1, tq, H), lambda b, qi: (b, qi, 0))
        e_spec = _make_spec((1, Tk, H), lambda b, qi: (b, 0, 0), single_buffer=single_buffer)
        m_spec = pl.BlockSpec((1, 1, 1, Tk), lambda b, qi: (b, 0, 0, 0))
        wq_spec = _make_spec((H, H), lambda b, qi: (0, 0), single_buffer=single_buffer)
        wkv_spec = _make_spec((H, 2 * H), lambda b, qi: (0, 0), single_buffer=single_buffer)
        wo_spec = _make_spec((H, H), lambda b, qi: (0, 0), single_buffer=single_buffer)
        bq_spec = _make_spec((1, H), lambda b, qi: (0, 0), single_buffer=single_buffer)
        bkv_spec = _make_spec((1, 2 * H), lambda b, qi: (0, 0), single_buffer=single_buffer)
        bo_spec = _make_spec((1, H), lambda b, qi: (0, 0), single_buffer=single_buffer)
        g_spec = pl.BlockSpec(memory_space=pltpu.MemorySpace.SMEM)   # tanh(gate) scalar

        out_specs = [pl.BlockSpec((1, tq, H), lambda b, qi: (b, qi, 0))]
        if emit_attn:
            out_specs.append(
                pl.BlockSpec((1, num_heads, tq, Tk), lambda b, qi: (b, 0, qi, 0)))

        return pl.pallas_call(
            kernel,
            out_shape=out_shapes,
            grid_spec=pltpu.PrefetchScalarGridSpec(
                num_scalar_prefetch=0,
                grid=grid,
                in_specs=[
                    x_spec,               # hidden_states (query)
                    e_spec,               # encoder_hidden_states (key/value)
                    m_spec,               # additive encoder attention mask
                    wq_spec, bq_spec,     # Wq, bq
                    wkv_spec, bkv_spec,   # Wkv = [Wk | Wv], bkv
                    wo_spec, bo_spec,     # Wo, bo
                    g_spec,               # tanh(attn_gate) scalar in SMEM
                ],
                out_specs=out_specs,
                scratch_shapes=[
                    pltpu.VMEM((Tk, 2 * H), cdt),   # cached K|V projection (per batch elem)
                    pltpu.VMEM((tq, H), cdt),       # merged-heads context for fused Wo matmul
                ]),
            compiler_params=pltpu.CompilerParams(
                # b stays the leading "parallel" axis (megacore); qi is "arbitrary" because
                # the K/V scratch carries state across query tiles of one batch element.
                dimension_semantics=("parallel", "arbitrary"),
                vmem_limit_bytes=vmem_limit),
            cost_estimate=cost,
        )(hs_c, enc_c, mask_f, wq_c, bq, wkv_c, bkv, wo_c, bo, gate_t)

    try:
        results = _call(single_buffer=True)
    except Exception:
        # pipeline_mode=pl.Buffered(1) not supported by this jax/libtpu -> default buffering.
        results = _call(single_buffer=False)

    out = results[0]
    attn_w = results[1] if emit_attn else None

    if know_norm == "var":
        # scale_to_variance + gate as glue (global reductions over the full tensors).
        target_var = jnp.var(hidden_states)            # torch.var(unbiased=False)
        src_mean = jnp.mean(out)
        src_std = jnp.std(out, ddof=1)                 # torch.std default (unbiased=True)
        out = (out - src_mean) / src_std * jnp.sqrt(target_var)
        out = out * gate_t[0, 0]
    return out, attn_w


def _reference_forward(hidden_states, enc, mask, params, num_heads, know_norm=""):
    """Pure-JAX (f32) mirror of the PyTorch forward (eval mode) for verification."""
    H = hidden_states.shape[-1]
    hd = H // num_heads

    def lin(x, w, b):
        return x @ w + b

    q = lin(hidden_states, params["wq"], params["bq"])
    k = lin(enc, params["wk"], params["bk"])
    v = lin(enc, params["wv"], params["bv"])

    def split(t):
        B, T, _ = t.shape
        return t.reshape(B, T, num_heads, hd).transpose(0, 2, 1, 3)

    q, k, v = split(q), split(k), split(v)
    s = (q @ jnp.swapaxes(k, -1, -2)) / jnp.sqrt(jnp.float32(hd))
    s = s + mask
    p = jax.nn.softmax(s, axis=-1)
    o = p @ v
    B = o.shape[0]
    o = o.transpose(0, 2, 1, 3).reshape(B, -1, H)
    o = lin(o, params["wo"], params["bo"])
    if know_norm == "var":
        tv = jnp.var(hidden_states)
        o = (o - jnp.mean(o)) / jnp.std(o, ddof=1) * jnp.sqrt(tv)
    o = o * jnp.tanh(params["gate"][0, 0])
    return o, p


if __name__ == "__main__":
    B, Tq, Tk, H, NH = 2, 8, 8, 32, 4

    key = jax.random.PRNGKey(0)
    ks = jax.random.split(key, 10)

    def init_w(k):   # already transposed to (in, out) so the kernel does x @ W
        return jax.random.normal(k, (H, H), jnp.float32) * 0.05

    def init_b(k):
        return jax.random.normal(k, (1, H), jnp.float32) * 0.01

    params = {
        "wq": init_w(ks[0]), "bq": init_b(ks[1]),
        "wk": init_w(ks[2]), "bk": init_b(ks[3]),
        "wv": init_w(ks[4]), "bv": init_b(ks[5]),
        "wo": init_w(ks[6]), "bo": init_b(ks[7]),
        # PyTorch initializes attn_gate to 0.0 (tanh(0)=0 zeroes the output);
        # use a nonzero deterministic value so the gated path is exercised.
        "gate": jnp.full((1, 1), 0.3, jnp.float32),
    }

    hidden_states = jax.random.normal(ks[8], (B, Tq, H), jnp.float32)
    encoder_hidden_states = jax.random.normal(ks[9], (B, Tk, H), jnp.float32)

    # additive encoder attention mask: mask out the last 2 keys of batch element 1
    encoder_attention_mask = jnp.zeros((B, 1, 1, Tk), jnp.float32)
    encoder_attention_mask = encoder_attention_mask.at[1, 0, 0, -2:].set(-1e9)

    ref_out, ref_w = _reference_forward(hidden_states, encoder_hidden_states,
                                        encoder_attention_mask, params, NH, "")

    # 1) f32 compute path, attention weights requested.
    out, attn_w = gated_cross_attention_block(
        hidden_states, None, None, encoder_hidden_states, encoder_attention_mask,
        True, params, num_heads=NH, know_norm="", compute_dtype=jnp.float32)
    out = jax.block_until_ready(out)
    attn_w = jax.block_until_ready(attn_w)
    assert out.shape == (B, Tq, H) and attn_w.shape == (B, NH, Tq, Tk)
    assert jnp.allclose(out, ref_out, atol=2e-3, rtol=1e-2)
    assert jnp.allclose(attn_w, ref_w, atol=5e-3, rtol=5e-2)

    # 2) bf16 compute path (bf16 exp on v6e/v7x), no attention-weight writeback.
    out_bf, attn_none = gated_cross_attention_block(
        hidden_states, None, None, encoder_hidden_states, encoder_attention_mask,
        False, params, num_heads=NH, know_norm="", compute_dtype=jnp.bfloat16)
    out_bf = jax.block_until_ready(out_bf)
    assert attn_none is None
    assert jnp.allclose(out_bf, ref_out, atol=8e-3, rtol=8e-2)

    # 3) know_norm == 'var' path (scale_to_variance glue + gate outside the kernel).
    out_var, _ = gated_cross_attention_block(
        hidden_states, None, None, encoder_hidden_states, encoder_attention_mask,
        False, params, num_heads=NH, know_norm="var", compute_dtype=jnp.float32)
    out_var = jax.block_until_ready(out_var)
    ref_var, _ = _reference_forward(hidden_states, encoder_hidden_states,
                                    encoder_attention_mask, params, NH, "var")
    assert jnp.allclose(out_var, ref_var, atol=3e-2, rtol=3e-2)

    print("KERNEL_OK")
</pallas_src>

<mosaic_0001>
module attributes {stable_mosaic.version = 11 : i64} {
  func.func @_gated_xattn_kernel(%arg0: i32, %arg1: i32, %arg2: memref<1x8x32xf32, #tpu.memory_space<vmem>>, %arg3: memref<1x8x32xf32, #tpu.memory_space<vmem>>, %arg4: memref<1x1x1x8xf32, #tpu.memory_space<vmem>>, %arg5: memref<32x32xf32, #tpu.memory_space<vmem>>, %arg6: memref<1x32xf32, #tpu.memory_space<vmem>>, %arg7: memref<32x64xf32, #tpu.memory_space<vmem>>, %arg8: memref<1x64xf32, #tpu.memory_space<vmem>>, %arg9: memref<32x32xf32, #tpu.memory_space<vmem>>, %arg10: memref<1x32xf32, #tpu.memory_space<vmem>>, %arg11: memref<1x1xf32, #tpu.memory_space<smem>>, %arg12: memref<1x8x32xf32, #tpu.memory_space<vmem>>, %arg13: memref<1x4x8x8xf32, #tpu.memory_space<vmem>>, %arg14: memref<8x64xf32, #tpu.memory_space<vmem>>, %arg15: memref<8x32xf32, #tpu.memory_space<vmem>>) attributes {dimension_semantics = [#tpu.dimension_semantics<parallel>, #tpu.dimension_semantics<arbitrary>], iteration_bounds = array<i64: 2, 1>, scalar_prefetch = 0 : i64, scratch_operands = 2 : i64, tpu.core_type = #tpu.core_type<tc>, window_params = [{transform_indices = @transform_0, window_bounds = array<i64: 1, 8, 32>}, {pipeline_mode = #tpu.pipeline_mode<synchronous>, transform_indices = @transform_1, window_bounds = array<i64: 1, 8, 32>}, {transform_indices = @transform_2, window_bounds = array<i64: 1, 1, 1, 8>}, {pipeline_mode = #tpu.pipeline_mode<synchronous>, transform_indices = @transform_3, window_bounds = array<i64: 32, 32>}, {pipeline_mode = #tpu.pipeline_mode<synchronous>, transform_indices = @transform_4, window_bounds = array<i64: 1, 32>}, {pipeline_mode = #tpu.pipeline_mode<synchronous>, transform_indices = @transform_5, window_bounds = array<i64: 32, 64>}, {pipeline_mode = #tpu.pipeline_mode<synchronous>, transform_indices = @transform_6, window_bounds = array<i64: 1, 64>}, {pipeline_mode = #tpu.pipeline_mode<synchronous>, transform_indices = @transform_7, window_bounds = array<i64: 32, 32>}, {pipeline_mode = #tpu.pipeline_mode<synchronous>, transform_indices = @transform_8, window_bounds = array<i64: 1, 32>}, {transform_indices = @transform_9, window_bounds = array<i64: 1, 1>}, {transform_indices = @transform_10, window_bounds = array<i64: 1, 8, 32>}, {transform_indices = @transform_11, window_bounds = array<i64: 1, 4, 8, 8>}]} {
    %c0_i32 = arith.constant 0 : i32
    %0 = arith.cmpi eq, %arg1, %c0_i32 : i32
    %1 = arith.extui %0 : i1 to i32
    %c0_i32_0 = arith.constant 0 : i32
    %2 = arith.cmpi ne, %1, %c0_i32_0 : i32
    scf.if %2 {
      %c0_60 = arith.constant 0 : index
      %c0_61 = arith.constant 0 : index
      %c0_62 = arith.constant 0 : index
      %111 = vector.load %arg3[%c0_60, %c0_61, %c0_62] : memref<1x8x32xf32, #tpu.memory_space<vmem>>, vector<1x8x32xf32>
      %112 = vector.shape_cast %111 : vector<1x8x32xf32> to vector<8x32xf32>
      %c0_63 = arith.constant 0 : index
      %c0_64 = arith.constant 0 : index
      %113 = vector.load %arg7[%c0_63, %c0_64] : memref<32x64xf32, #tpu.memory_space<vmem>>, vector<32x64xf32>
      %cst_65 = arith.constant dense<0.000000e+00> : vector<8x64xf32>
      %114 = tpu.matmul %112, %113, %cst_65 {dimension_numbers = #tpu.dot_dimension_numbers<[1], [0], [0], [1], [0, 0, 1, 1], [], []>} : vector<8x32xf32>, vector<32x64xf32>, vector<8x64xf32> -> vector<8x64xf32>
      %c0_66 = arith.constant 0 : index
      %c0_67 = arith.constant 0 : index
      %115 = vector.load %arg8[%c0_66, %c0_67] : memref<1x64xf32, #tpu.memory_space<vmem>>, vector<1x64xf32>
      %116 = vector.broadcast %115 : vector<1x64xf32> to vector<8x64xf32>
      %117 = arith.addf %114, %116 : vector<8x64xf32>
      %c0_68 = arith.constant 0 : index
      %c0_69 = arith.constant 0 : index
      %118 = vector.load %arg14[%c0_68, %c0_69] : memref<8x64xf32, #tpu.memory_space<vmem>>, vector<8x64xf32>
      tpu.vector_store %arg14[%c0_68, %c0_69], %117 {strides = array<i32>} : memref<8x64xf32, #tpu.memory_space<vmem>>, vector<8x64xf32>,
    } else {
    }
    %c0 = arith.constant 0 : index
    %c0_1 = arith.constant 0 : index
    %c0_2 = arith.constant 0 : index
    %3 = vector.load %arg2[%c0, %c0_1, %c0_2] : memref<1x8x32xf32, #tpu.memory_space<vmem>>, vector<1x8x32xf32>
    %4 = vector.shape_cast %3 : vector<1x8x32xf32> to vector<8x32xf32>
    %c0_3 = arith.constant 0 : index
    %c0_4 = arith.constant 0 : index
    %c0_5 = arith.constant 0 : index
    %c0_6 = arith.constant 0 : index
    %5 = vector.load %arg4[%c0_3, %c0_4, %c0_5, %c0_6] : memref<1x1x1x8xf32, #tpu.memory_space<vmem>>, vector<1x1x1x8xf32>
    %6 = vector.shape_cast %5 : vector<1x1x1x8xf32> to vector<1x8xf32>
    %c0_7 = arith.constant 0 : index
    %c0_8 = arith.constant 0 : index
    %7 = vector.load %arg5[%c0_7, %c0_8] : memref<32x32xf32, #tpu.memory_space<vmem>>, vector<32x32xf32>
    %cst = arith.constant dense<0.000000e+00> : vector<8x32xf32>
    %8 = tpu.matmul %4, %7, %cst {dimension_numbers = #tpu.dot_dimension_numbers<[1], [0], [0], [1], [0, 0, 1, 1], [], []>} : vector<8x32xf32>, vector<32x32xf32>, vector<8x32xf32> -> vector<8x32xf32>
    %c0_9 = arith.constant 0 : index
    %c0_10 = arith.constant 0 : index
    %9 = vector.load %arg6[%c0_9, %c0_10] : memref<1x32xf32, #tpu.memory_space<vmem>>, vector<1x32xf32>
    %10 = vector.broadcast %9 : vector<1x32xf32> to vector<8x32xf32>
    %11 = arith.addf %8, %10 : vector<8x32xf32>
    %cst_11 = arith.constant 0.353553385 : f32
    %12 = vector.broadcast %cst_11 : f32 to vector<8x32xf32>
    %13 = arith.mulf %11, %12 : vector<8x32xf32>
    %c0_12 = arith.constant 0 : index
    %c0_13 = arith.constant 0 : index
    %14 = vector.load %arg14[%c0_12, %c0_13] : memref<8x64xf32, #tpu.memory_space<vmem>>, vector<8x64xf32>
    %15 = vector.extract_strided_slice %13 {offsets = [0, 0], sizes = [8, 8], strides = [1, 1]} : vector<8x32xf32> to vector<8x8xf32>
    %16 = vector.extract_strided_slice %14 {offsets = [0, 0], sizes = [8, 8], strides = [1, 1]} : vector<8x64xf32> to vector<8x8xf32>
    %cst_14 = arith.constant dense<0.000000e+00> : vector<8x8xf32>
    %17 = tpu.matmul %15, %16, %cst_14 {dimension_numbers = #tpu.dot_dimension_numbers<[1], [1], [0], [0], [0, 0, 1, 0], [], []>} : vector<8x8xf32>, vector<8x8xf32>, vector<8x8xf32> -> vector<8x8xf32>
    %18 = vector.broadcast %6 : vector<1x8xf32> to vector<8x8xf32>
    %19 = arith.addf %17, %18 : vector<8x8xf32>
    %cst_15 = arith.constant dense<0xFF800000> : vector<8xf32>
    %20 = vector.multi_reduction <maximumf>, %19, %cst_15 [1] : vector<8x8xf32> to vector<8xf32>
    %21 = vector.shape_cast %20 : vector<8xf32> to vector<8x1xf32>
    %22 = vector.broadcast %21 : vector<8x1xf32> to vector<8x8xf32>
    %23 = arith.subf %19, %22 : vector<8x8xf32>
    %24 = math.exp %23 : vector<8x8xf32>
    %cst_16 = arith.constant dense<0.000000e+00> : vector<8xf32>
    %25 = vector.multi_reduction <add>, %24, %cst_16 [1] : vector<8x8xf32> to vector<8xf32>
    %26 = vector.shape_cast %25 : vector<8xf32> to vector<8x1xf32>
    %27 = tpu.reciprocal %26 {approx = true} : vector<8x1xf32> -> vector<8x1xf32>
    %28 = vector.broadcast %27 : vector<8x1xf32> to vector<8x8xf32>
    %29 = arith.mulf %24, %28 : vector<8x8xf32>
    %c0_17 = arith.constant 0 : index
    %c0_18 = arith.constant 0 : index
    %c0_19 = arith.constant 0 : index
    %c0_20 = arith.constant 0 : index
    %30 = vector.load %arg13[%c0_17, %c0_18, %c0_19, %c0_20] : memref<1x4x8x8xf32, #tpu.memory_space<vmem>>, vector<1x1x8x8xf32>
    %31 = vector.shape_cast %30 : vector<1x1x8x8xf32> to vector<8x8xf32>
    %32 = vector.shape_cast %29 : vector<8x8xf32> to vector<1x1x8x8xf32>
    tpu.vector_store %arg13[%c0_17, %c0_18, %c0_19, %c0_20], %32 {strides = array<i32>} : memref<1x4x8x8xf32, #tpu.memory_space<vmem>>, vector<1x1x8x8xf32>,
    %33 = vector.extract_strided_slice %14 {offsets = [0, 32], sizes = [8, 8], strides = [1, 1]} : vector<8x64xf32> to vector<8x8xf32>
    %cst_21 = arith.constant dense<0.000000e+00> : vector<8x8xf32>
    %34 = tpu.matmul %29, %33, %cst_21 {dimension_numbers = #tpu.dot_dimension_numbers<[1], [0], [0], [1], [0, 0, 1, 1], [], []>} : vector<8x8xf32>, vector<8x8xf32>, vector<8x8xf32> -> vector<8x8xf32>
    %c0_22 = arith.constant 0 : index
    %c0_23 = arith.constant 0 : index
    %35 = vector.load %arg15[%c0_22, %c0_23] : memref<8x32xf32, #tpu.memory_space<vmem>>, vector<8x8xf32>
    tpu.vector_store %arg15[%c0_22, %c0_23], %34 {strides = array<i32>} : memref<8x32xf32, #tpu.memory_space<vmem>>, vector<8x8xf32>,
    %36 = vector.extract_strided_slice %13 {offsets = [0, 8], sizes = [8, 8], strides = [1, 1]} : vector<8x32xf32> to vector<8x8xf32>
    %37 = vector.extract_strided_slice %14 {offsets = [0, 8], sizes = [8, 8], strides = [1, 1]} : vector<8x64xf32> to vector<8x8xf32>
    %cst_24 = arith.constant dense<0.000000e+00> : vector<8x8xf32>
    %38 = tpu.matmul %36, %37, %cst_24 {dimension_numbers = #tpu.dot_dimension_numbers<[1], [1], [0], [0], [0, 0, 1, 0], [], []>} : vector<8x8xf32>, vector<8x8xf32>, vector<8x8xf32> -> vector<8x8xf32>
    %39 = vector.broadcast %6 : vector<1x8xf32> to vector<8x8xf32>
    %40 = arith.addf %38, %39 : vector<8x8xf32>
    %cst_25 = arith.constant dense<0xFF800000> : vector<8xf32>
    %41 = vector.multi_reduction <maximumf>, %40, %cst_25 [1] : vector<8x8xf32> to vector<8xf32>
    %42 = vector.shape_cast %41 : vector<8xf32> to vector<8x1xf32>
    %43 = vector.broadcast %42 : vector<8x1xf32> to vector<8x8xf32>
    %44 = arith.subf %40, %43 : vector<8x8xf32>
    %45 = math.exp %44 : vector<8x8xf32>
    %cst_26 = arith.constant dense<0.000000e+00> : vector<8xf32>
    %46 = vector.multi_reduction <add>, %45, %cst_26 [1] : vector<8x8xf32> to vector<8xf32>
    %47 = vector.shape_cast %46 : vector<8xf32> to vector<8x1xf32>
    %48 = tpu.reciprocal %47 {approx = true} : vector<8x1xf32> -> vector<8x1xf32>
    %49 = vector.broadcast %48 : vector<8x1xf32> to vector<8x8xf32>
    %50 = arith.mulf %45, %49 : vector<8x8xf32>
    %c0_27 = arith.constant 0 : index
    %c1 = arith.constant 1 : index
    %c0_28 = arith.constant 0 : index
    %c0_29 = arith.constant 0 : index
    %51 = vector.load %arg13[%c0_27, %c1, %c0_28, %c0_29] : memref<1x4x8x8xf32, #tpu.memory_space<vmem>>, vector<1x1x8x8xf32>
    %52 = vector.shape_cast %51 : vector<1x1x8x8xf32> to vector<8x8xf32>
    %53 = vector.shape_cast %50 : vector<8x8xf32> to vector<1x1x8x8xf32>
    tpu.vector_store %arg13[%c0_27, %c1, %c0_28, %c0_29], %53 {strides = array<i32>} : memref<1x4x8x8xf32, #tpu.memory_space<vmem>>, vector<1x1x8x8xf32>,
    %54 = vector.extract_strided_slice %14 {offsets = [0, 40], sizes = [8, 8], strides = [1, 1]} : vector<8x64xf32> to vector<8x8xf32>
    %cst_30 = arith.constant dense<0.000000e+00> : vector<8x8xf32>
    %55 = tpu.matmul %50, %54, %cst_30 {dimension_numbers = #tpu.dot_dimension_numbers<[1], [0], [0], [1], [0, 0, 1, 1], [], []>} : vector<8x8xf32>, vector<8x8xf32>, vector<8x8xf32> -> vector<8x8xf32>
    %c0_31 = arith.constant 0 : index
    %c8 = arith.constant 8 : index
    %56 = vector.load %arg15[%c0_31, %c8] : memref<8x32xf32, #tpu.memory_space<vmem>>, vector<8x8xf32>
    tpu.vector_store %arg15[%c0_31, %c8], %55 {strides = array<i32>} : memref<8x32xf32, #tpu.memory_space<vmem>>, vector<8x8xf32>,
    %57 = vector.extract_strided_slice %13 {offsets = [0, 16], sizes = [8, 8], strides = [1, 1]} : vector<8x32xf32> to vector<8x8xf32>
    %58 = vector.extract_strided_slice %14 {offsets = [0, 16], sizes = [8, 8], strides = [1, 1]} : vector<8x64xf32> to vector<8x8xf32>
    %cst_32 = arith.constant dense<0.000000e+00> : vector<8x8xf32>
    %59 = tpu.matmul %57, %58, %cst_32 {dimension_numbers = #tpu.dot_dimension_numbers<[1], [1], [0], [0], [0, 0, 1, 0], [], []>} : vector<8x8xf32>, vector<8x8xf32>, vector<8x8xf32> -> vector<8x8xf32>
    %60 = vector.broadcast %6 : vector<1x8xf32> to vector<8x8xf32>
    %61 = arith.addf %59, %60 : vector<8x8xf32>
    %cst_33 = arith.constant dense<0xFF800000> : vector<8xf32>
    %62 = vector.multi_reduction <maximumf>, %61, %cst_33 [1] : vector<8x8xf32> to vector<8xf32>
    %63 = vector.shape_cast %62 : vector<8xf32> to vector<8x1xf32>
    %64 = vector.broadcast %63 : vector<8x1xf32> to vector<8x8xf32>
    %65 = arith.subf %61, %64 : vector<8x8xf32>
    %66 = math.exp %65 : vector<8x8xf32>
    %cst_34 = arith.constant dense<0.000000e+00> : vector<8xf32>
    %67 = vector.multi_reduction <add>, %66, %cst_34 [1] : vector<8x8xf32> to vector<8xf32>
    %68 = vector.shape_cast %67 : vector<8xf32> to vector<8x1xf32>
    %69 = tpu.reciprocal %68 {approx = true} : vector<8x1xf32> -> vector<8x1xf32>
    %70 = vector.broadcast %69 : vector<8x1xf32> to vector<8x8xf32>
    %71 = arith.mulf %66, %70 : vector<8x8xf32>
    %c0_35 = arith.constant 0 : index
    %c2 = arith.constant 2 : index
    %c0_36 = arith.constant 0 : index
    %c0_37 = arith.constant 0 : index
    %72 = vector.load %arg13[%c0_35, %c2, %c0_36, %c0_37] : memref<1x4x8x8xf32, #tpu.memory_space<vmem>>, vector<1x1x8x8xf32>
    %73 = vector.shape_cast %72 : vector<1x1x8x8xf32> to vector<8x8xf32>
    %74 = vector.shape_cast %71 : vector<8x8xf32> to vector<1x1x8x8xf32>
    tpu.vector_store %arg13[%c0_35, %c2, %c0_36, %c0_37], %74 {strides = array<i32>} : memref<1x4x8x8xf32, #tpu.memory_space<vmem>>, vector<1x1x8x8xf32>,
    %75 = vector.extract_strided_slice %14 {offsets = [0, 48], sizes = [8, 8], strides = [1, 1]} : vector<8x64xf32> to vector<8x8xf32>
    %cst_38 = arith.constant dense<0.000000e+00> : vector<8x8xf32>
    %76 = tpu.matmul %71, %75, %cst_38 {dimension_numbers = #tpu.dot_dimension_numbers<[1], [0], [0], [1], [0, 0, 1, 1], [], []>} : vector<8x8xf32>, vector<8x8xf32>, vector<8x8xf32> -> vector<8x8xf32>
    %c0_39 = arith.constant 0 : index
    %c16 = arith.constant 16 : index
    %77 = vector.load %arg15[%c0_39, %c16] : memref<8x32xf32, #tpu.memory_space<vmem>>, vector<8x8xf32>
    tpu.vector_store %arg15[%c0_39, %c16], %76 {strides = array<i32>} : memref<8x32xf32, #tpu.memory_space<vmem>>, vector<8x8xf32>,
    %78 = vector.extract_strided_slice %13 {offsets = [0, 24], sizes = [8, 8], strides = [1, 1]} : vector<8x32xf32> to vector<8x8xf32>
    %79 = vector.extract_strided_slice %14 {offsets = [0, 24], sizes = [8, 8], strides = [1, 1]} : vector<8x64xf32> to vector<8x8xf32>
    %cst_40 = arith.constant dense<0.000000e+00> : vector<8x8xf32>
    %80 = tpu.matmul %78, %79, %cst_40 {dimension_numbers = #tpu.dot_dimension_numbers<[1], [1], [0], [0], [0, 0, 1, 0], [], []>} : vector<8x8xf32>, vector<8x8xf32>, vector<8x8xf32> -> vector<8x8xf32>
    %81 = vector.broadcast %6 : vector<1x8xf32> to vector<8x8xf32>
    %82 = arith.addf %80, %81 : vector<8x8xf32>
    %cst_41 = arith.constant dense<0xFF800000> : vector<8xf32>
    %83 = vector.multi_reduction <maximumf>, %82, %cst_41 [1] : vector<8x8xf32> to vector<8xf32>
    %84 = vector.shape_cast %83 : vector<8xf32> to vector<8x1xf32>
    %85 = vector.broadcast %84 : vector<8x1xf32> to vector<8x8xf32>
    %86 = arith.subf %82, %85 : vector<8x8xf32>
    %87 = math.exp %86 : vector<8x8xf32>
    %cst_42 = arith.constant dense<0.000000e+00> : vector<8xf32>
    %88 = vector.multi_reduction <add>, %87, %cst_42 [1] : vector<8x8xf32> to vector<8xf32>
    %89 = vector.shape_cast %88 : vector<8xf32> to vector<8x1xf32>
    %90 = tpu.reciprocal %89 {approx = true} : vector<8x1xf32> -> vector<8x1xf32>
    %91 = vector.broadcast %90 : vector<8x1xf32> to vector<8x8xf32>
    %92 = arith.mulf %87, %91 : vector<8x8xf32>
    %c0_43 = arith.constant 0 : index
    %c3 = arith.constant 3 : index
    %c0_44 = arith.constant 0 : index
    %c0_45 = arith.constant 0 : index
    %93 = vector.load %arg13[%c0_43, %c3, %c0_44, %c0_45] : memref<1x4x8x8xf32, #tpu.memory_space<vmem>>, vector<1x1x8x8xf32>
    %94 = vector.shape_cast %93 : vector<1x1x8x8xf32> to vector<8x8xf32>
    %95 = vector.shape_cast %92 : vector<8x8xf32> to vector<1x1x8x8xf32>
    tpu.vector_store %arg13[%c0_43, %c3, %c0_44, %c0_45], %95 {strides = array<i32>} : memref<1x4x8x8xf32, #tpu.memory_space<vmem>>, vector<1x1x8x8xf32>,
    %96 = vector.extract_strided_slice %14 {offsets = [0, 56], sizes = [8, 8], strides = [1, 1]} : vector<8x64xf32> to vector<8x8xf32>
    %cst_46 = arith.constant dense<0.000000e+00> : vector<8x8xf32>
    %97 = tpu.matmul %92, %96, %cst_46 {dimension_numbers = #tpu.dot_dimension_numbers<[1], [0], [0], [1], [0, 0, 1, 1], [], []>} : vector<8x8xf32>, vector<8x8xf32>, vector<8x8xf32> -> vector<8x8xf32>
    %c0_47 = arith.constant 0 : index
    %c24 = arith.constant 24 : index
    %98 = vector.load %arg15[%c0_47, %c24] : memref<8x32xf32, #tpu.memory_space<vmem>>, vector<8x8xf32>
    tpu.vector_store %arg15[%c0_47, %c24], %97 {strides = array<i32>} : memref<8x32xf32, #tpu.memory_space<vmem>>, vector<8x8xf32>,
    %c0_48 = arith.constant 0 : index
    %c0_49 = arith.constant 0 : index
    %99 = vector.load %arg15[%c0_48, %c0_49] : memref<8x32xf32, #tpu.memory_space<vmem>>, vector<8x32xf32>
    %c0_50 = arith.constant 0 : index
    %c0_51 = arith.constant 0 : index
    %100 = vector.load %arg9[%c0_50, %c0_51] : memref<32x32xf32, #tpu.memory_space<vmem>>, vector<32x32xf32>
    %cst_52 = arith.constant dense<0.000000e+00> : vector<8x32xf32>
    %101 = tpu.matmul %99, %100, %cst_52 {dimension_numbers = #tpu.dot_dimension_numbers<[1], [0], [0], [1], [0, 0, 1, 1], [], []>} : vector<8x32xf32>, vector<32x32xf32>, vector<8x32xf32> -> vector<8x32xf32>
    %c0_53 = arith.constant 0 : index
    %c0_54 = arith.constant 0 : index
    %102 = vector.load %arg10[%c0_53, %c0_54] : memref<1x32xf32, #tpu.memory_space<vmem>>, vector<1x32xf32>
    %103 = vector.broadcast %102 : vector<1x32xf32> to vector<8x32xf32>
    %104 = arith.addf %101, %103 : vector<8x32xf32>
    %c0_55 = arith.constant 0 : index
    %c0_56 = arith.constant 0 : index
    %105 = memref.load %arg11[%c0_55, %c0_56] : memref<1x1xf32, #tpu.memory_space<smem>>
    %106 = vector.broadcast %105 : f32 to vector<8x32xf32>
    %107 = arith.mulf %104, %106 : vector<8x32xf32>
    %c0_57 = arith.constant 0 : index
    %c0_58 = arith.constant 0 : index
    %c0_59 = arith.constant 0 : index
    %108 = vector.load %arg12[%c0_57, %c0_58, %c0_59] : memref<1x8x32xf32, #tpu.memory_space<vmem>>, vector<1x8x32xf32>
    %109 = vector.shape_cast %108 : vector<1x8x32xf32> to vector<8x32xf32>
    %110 = vector.shape_cast %107 : vector<8x32xf32> to vector<1x8x32xf32>
    tpu.vector_store %arg12[%c0_57, %c0_58, %c0_59], %110 {strides = array<i32>} : memref<1x8x32xf32, #tpu.memory_space<vmem>>, vector<1x8x32xf32>,
    return
  }
  func.func @transform_0(%arg0: i32, %arg1: i32) -> (i32, i32, i32) {
    %c0_i32 = arith.constant 0 : i32
    %c0_i32_0 = arith.constant 0 : i32
    return %arg0, %arg1, %c0_i32 : i32, i32, i32
  }
  func.func @transform_1(%arg0: i32, %arg1: i32) -> (i32, i32, i32) {
    %c0_i32 = arith.constant 0 : i32
    %c0_i32_0 = arith.constant 0 : i32
    %c0_i32_1 = arith.constant 0 : i32
    return %arg0, %c0_i32, %c0_i32_0 : i32, i32, i32
  }
  func.func @transform_2(%arg0: i32, %arg1: i32) -> (i32, i32, i32, i32) {
    %c0_i32 = arith.constant 0 : i32
    %c0_i32_0 = arith.constant 0 : i32
    %c0_i32_1 = arith.constant 0 : i32
    %c0_i32_2 = arith.constant 0 : i32
    return %arg0, %c0_i32, %c0_i32_0, %c0_i32_1 : i32, i32, i32, i32
  }
  func.func @transform_3(%arg0: i32, %arg1: i32) -> (i32, i32) {
    %c0_i32 = arith.constant 0 : i32
    %c0_i32_0 = arith.constant 0 : i32
    %c0_i32_1 = arith.constant 0 : i32
    return %c0_i32, %c0_i32_0 : i32, i32
  }
  func.func @transform_4(%arg0: i32, %arg1: i32) -> (i32, i32) {
    %c0_i32 = arith.constant 0 : i32
    %c0_i32_0 = arith.constant 0 : i32
    %c0_i32_1 = arith.constant 0 : i32
    return %c0_i32, %c0_i32_0 : i32, i32
  }
  func.func @transform_5(%arg0: i32, %arg1: i32) -> (i32, i32) {
    %c0_i32 = arith.constant 0 : i32
    %c0_i32_0 = arith.constant 0 : i32
    %c0_i32_1 = arith.constant 0 : i32
    return %c0_i32, %c0_i32_0 : i32, i32
  }
  func.func @transform_6(%arg0: i32, %arg1: i32) -> (i32, i32) {
    %c0_i32 = arith.constant 0 : i32
    %c0_i32_0 = arith.constant 0 : i32
    %c0_i32_1 = arith.constant 0 : i32
    return %c0_i32, %c0_i32_0 : i32, i32
  }
  func.func @transform_7(%arg0: i32, %arg1: i32) -> (i32, i32) {
    %c0_i32 = arith.constant 0 : i32
    %c0_i32_0 = arith.constant 0 : i32
    %c0_i32_1 = arith.constant 0 : i32
    return %c0_i32, %c0_i32_0 : i32, i32
  }
  func.func @transform_8(%arg0: i32, %arg1: i32) -> (i32, i32) {
    %c0_i32 = arith.constant 0 : i32
    %c0_i32_0 = arith.constant 0 : i32
    %c0_i32_1 = arith.constant 0 : i32
    return %c0_i32, %c0_i32_0 : i32, i32
  }
  func.func @transform_9(%arg0: i32, %arg1: i32) -> (i32, i32) {
    %c0_i32 = arith.constant 0 : i32
    %c0_i32_0 = arith.constant 0 : i32
    %c0_i32_1 = arith.constant 0 : i32
    return %c0_i32, %c0_i32_0 : i32, i32
  }
  func.func @transform_10(%arg0: i32, %arg1: i32) -> (i32, i32, i32) {
    %c0_i32 = arith.constant 0 : i32
    %c0_i32_0 = arith.constant 0 : i32
    return %arg0, %arg1, %c0_i32 : i32, i32, i32
  }
  func.func @transform_11(%arg0: i32, %arg1: i32) -> (i32, i32, i32, i32) {
    %c0_i32 = arith.constant 0 : i32
    %c0_i32_0 = arith.constant 0 : i32
    %c0_i32_1 = arith.constant 0 : i32
    return %arg0, %c0_i32, %arg1, %c0_i32_0 : i32, i32, i32, i32
  }
}

module attributes {stable_mosaic.version = 11 : i64} {
  func.func @_gated_xattn_kernel(%arg0: i32, %arg1: i32, %arg2: memref<1x8x32xf32, #tpu.memory_space<vmem>>, %arg3: memref<1x8x32xf32, #tpu.memory_space<vmem>>, %arg4: memref<1x1x1x8xf32, #tpu.memory_space<vmem>>, %arg5: memref<32x32xf32, #tpu.memory_space<vmem>>, %arg6: memref<1x32xf32, #tpu.memory_space<vmem>>, %arg7: memref<32x64xf32, #tpu.memory_space<vmem>>, %arg8: memref<1x64xf32, #tpu.memory_space<vmem>>, %arg9: memref<32x32xf32, #tpu.memory_space<vmem>>, %arg10: memref<1x32xf32, #tpu.memory_space<vmem>>, %arg11: memref<1x1xf32, #tpu.memory_space<smem>>, %arg12: memref<1x8x32xf32, #tpu.memory_space<vmem>>, %arg13: memref<1x4x8x8xf32, #tpu.memory_space<vmem>>, %arg14: memref<8x64xf32, #tpu.memory_space<vmem>>, %arg15: memref<8x32xf32, #tpu.memory_space<vmem>>) attributes {dimension_semantics = [#tpu.dimension_semantics<parallel>, #tpu.dimension_semantics<arbitrary>], iteration_bounds = array<i64: 2, 1>, scalar_prefetch = 0 : i64, scratch_operands = 2 : i64, tpu.core_type = #tpu.core_type<tc>, window_params = [{transform_indices = @transform_0, window_bounds = array<i64: 1, 8, 32>}, {transform_indices = @transform_1, window_bounds = array<i64: 1, 8, 32>}, {transform_indices = @transform_2, window_bounds = array<i64: 1, 1, 1, 8>}, {pipeline_mode = #tpu.pipeline_mode<synchronous>, transform_indices = @transform_3, window_bounds = array<i64: 32, 32>}, {pipeline_mode = #tpu.pipeline_mode<synchronous>, transform_indices = @transform_4, window_bounds = array<i64: 1, 32>}, {pipeline_mode = #tpu.pipeline_mode<synchronous>, transform_indices = @transform_5, window_bounds = array<i64: 32, 64>}, {pipeline_mode = #tpu.pipeline_mode<synchronous>, transform_indices = @transform_6, window_bounds = array<i64: 1, 64>}, {pipeline_mode = #tpu.pipeline_mode<synchronous>, transform_indices = @transform_7, window_bounds = array<i64: 32, 32>}, {pipeline_mode = #tpu.pipeline_mode<synchronous>, transform_indices = @transform_8, window_bounds = array<i64: 1, 32>}, {transform_indices = @transform_9, window_bounds = array<i64: 1, 1>}, {transform_indices = @transform_10, window_bounds = array<i64: 1, 8, 32>}, {transform_indices = @transform_11, window_bounds = array<i64: 1, 4, 8, 8>}]} {
    %c0_i32 = arith.constant 0 : i32
    %0 = arith.cmpi eq, %arg1, %c0_i32 : i32
    %1 = arith.extui %0 : i1 to i32
    %c0_i32_0 = arith.constant 0 : i32
    %2 = arith.cmpi ne, %1, %c0_i32_0 : i32
    scf.if %2 {
      %c0_60 = arith.constant 0 : index
      %c0_61 = arith.constant 0 : index
      %c0_62 = arith.constant 0 : index
      %111 = vector.load %arg3[%c0_60, %c0_61, %c0_62] : memref<1x8x32xf32, #tpu.memory_space<vmem>>, vector<1x8x32xf32>
      %112 = vector.shape_cast %111 : vector<1x8x32xf32> to vector<8x32xf32>
      %c0_63 = arith.constant 0 : index
      %c0_64 = arith.constant 0 : index
      %113 = vector.load %arg7[%c0_63, %c0_64] : memref<32x64xf32, #tpu.memory_space<vmem>>, vector<32x64xf32>
      %cst_65 = arith.constant dense<0.000000e+00> : vector<8x64xf32>
      %114 = tpu.matmul %112, %113, %cst_65 {dimension_numbers = #tpu.dot_dimension_numbers<[1], [0], [0], [1], [0, 0, 1, 1], [], []>} : vector<8x32xf32>, vector<32x64xf32>, vector<8x64xf32> -> vector<8x64xf32>
      %c0_66 = arith.constant 0 : index
      %c0_67 = arith.constant 0 : index
      %115 = vector.load %arg8[%c0_66, %c0_67] : memref<1x64xf32, #tpu.memory_space<vmem>>, vector<1x64xf32>
      %116 = vector.broadcast %115 : vector<1x64xf32> to vector<8x64xf32>
      %117 = arith.addf %114, %116 : vector<8x64xf32>
      %c0_68 = arith.constant 0 : index
      %c0_69 = arith.constant 0 : index
      %118 = vector.load %arg14[%c0_68, %c0_69] : memref<8x64xf32, #tpu.memory_space<vmem>>, vector<8x64xf32>
      tpu.vector_store %arg14[%c0_68, %c0_69], %117 {strides = array<i32>} : memref<8x64xf32, #tpu.memory_space<vmem>>, vector<8x64xf32>,
    } else {
    }
    %c0 = arith.constant 0 : index
    %c0_1 = arith.constant 0 : index
    %c0_2 = arith.constant 0 : index
    %3 = vector.load %arg2[%c0, %c0_1, %c0_2] : memref<1x8x32xf32, #tpu.memory_space<vmem>>, vector<1x8x32xf32>
    %4 = vector.shape_cast %3 : vector<1x8x32xf32> to vector<8x32xf32>
    %c0_3 = arith.constant 0 : index
    %c0_4 = arith.constant 0 : index
    %c0_5 = arith.constant 0 : index
    %c0_6 = arith.constant 0 : index
    %5 = vector.load %arg4[%c0_3, %c0_4, %c0_5, %c0_6] : memref<1x1x1x8xf32, #tpu.memory_space<vmem>>, vector<1x1x1x8xf32>
    %6 = vector.shape_cast %5 : vector<1x1x1x8xf32> to vector<1x8xf32>
    %c0_7 = arith.constant 0 : index
    %c0_8 = arith.constant 0 : index
    %7 = vector.load %arg5[%c0_7, %c0_8] : memref<32x32xf32, #tpu.memory_space<vmem>>, vector<32x32xf32>
    %cst = arith.constant dense<0.000000e+00> : vector<8x32xf32>
    %8 = tpu.matmul %4, %7, %cst {dimension_numbers = #tpu.dot_dimension_numbers<[1], [0], [0], [1], [0, 0, 1, 1], [], []>} : vector<8x32xf32>, vector<32x32xf32>, vector<8x32xf32> -> vector<8x32xf32>
    %c0_9 = arith.constant 0 : index
    %c0_10 = arith.constant 0 : index
    %9 = vector.load %arg6[%c0_9, %c0_10] : memref<1x32xf32, #tpu.memory_space<vmem>>, vector<1x32xf32>
    %10 = vector.broadcast %9 : vector<1x32xf32> to vector<8x32xf32>
    %11 = arith.addf %8, %10 : vector<8x32xf32>
    %cst_11 = arith.constant 0.353553385 : f32
    %12 = vector.broadcast %cst_11 : f32 to vector<8x32xf32>
    %13 = arith.mulf %11, %12 : vector<8x32xf32>
    %c0_12 = arith.constant 0 : index
    %c0_13 = arith.constant 0 : index
    %14 = vector.load %arg14[%c0_12, %c0_13] : memref<8x64xf32, #tpu.memory_space<vmem>>, vector<8x64xf32>
    %15 = vector.extract_strided_slice %13 {offsets = [0, 0], sizes = [8, 8], strides = [1, 1]} : vector<8x32xf32> to vector<8x8xf32>
    %16 = vector.extract_strided_slice %14 {offsets = [0, 0], sizes = [8, 8], strides = [1, 1]} : vector<8x64xf32> to vector<8x8xf32>
    %cst_14 = arith.constant dense<0.000000e+00> : vector<8x8xf32>
    %17 = tpu.matmul %15, %16, %cst_14 {dimension_numbers = #tpu.dot_dimension_numbers<[1], [1], [0], [0], [0, 0, 1, 0], [], []>} : vector<8x8xf32>, vector<8x8xf32>, vector<8x8xf32> -> vector<8x8xf32>
    %18 = vector.broadcast %6 : vector<1x8xf32> to vector<8x8xf32>
    %19 = arith.addf %17, %18 : vector<8x8xf32>
    %cst_15 = arith.constant dense<0xFF800000> : vector<8xf32>
    %20 = vector.multi_reduction <maximumf>, %19, %cst_15 [1] : vector<8x8xf32> to vector<8xf32>
    %21 = vector.shape_cast %20 : vector<8xf32> to vector<8x1xf32>
    %22 = vector.broadcast %21 : vector<8x1xf32> to vector<8x8xf32>
    %23 = arith.subf %19, %22 : vector<8x8xf32>
    %24 = math.exp %23 : vector<8x8xf32>
    %cst_16 = arith.constant dense<0.000000e+00> : vector<8xf32>
    %25 = vector.multi_reduction <add>, %24, %cst_16 [1] : vector<8x8xf32> to vector<8xf32>
    %26 = vector.shape_cast %25 : vector<8xf32> to vector<8x1xf32>
    %27 = tpu.reciprocal %26 {approx = true} : vector<8x1xf32> -> vector<8x1xf32>
    %28 = vector.broadcast %27 : vector<8x1xf32> to vector<8x8xf32>
    %29 = arith.mulf %24, %28 : vector<8x8xf32>
    %c0_17 = arith.constant 0 : index
    %c0_18 = arith.constant 0 : index
    %c0_19 = arith.constant 0 : index
    %c0_20 = arith.constant 0 : index
    %30 = vector.load %arg13[%c0_17, %c0_18, %c0_19, %c0_20] : memref<1x4x8x8xf32, #tpu.memory_space<vmem>>, vector<1x1x8x8xf32>
    %31 = vector.shape_cast %30 : vector<1x1x8x8xf32> to vector<8x8xf32>
    %32 = vector.shape_cast %29 : vector<8x8xf32> to vector<1x1x8x8xf32>
    tpu.vector_store %arg13[%c0_17, %c0_18, %c0_19, %c0_20], %32 {strides = array<i32>} : memref<1x4x8x8xf32, #tpu.memory_space<vmem>>, vector<1x1x8x8xf32>,
    %33 = vector.extract_strided_slice %14 {offsets = [0, 32], sizes = [8, 8], strides = [1, 1]} : vector<8x64xf32> to vector<8x8xf32>
    %cst_21 = arith.constant dense<0.000000e+00> : vector<8x8xf32>
    %34 = tpu.matmul %29, %33, %cst_21 {dimension_numbers = #tpu.dot_dimension_numbers<[1], [0], [0], [1], [0, 0, 1, 1], [], []>} : vector<8x8xf32>, vector<8x8xf32>, vector<8x8xf32> -> vector<8x8xf32>
    %c0_22 = arith.constant 0 : index
    %c0_23 = arith.constant 0 : index
    %35 = vector.load %arg15[%c0_22, %c0_23] : memref<8x32xf32, #tpu.memory_space<vmem>>, vector<8x8xf32>
    tpu.vector_store %arg15[%c0_22, %c0_23], %34 {strides = array<i32>} : memref<8x32xf32, #tpu.memory_space<vmem>>, vector<8x8xf32>,
    %36 = vector.extract_strided_slice %13 {offsets = [0, 8], sizes = [8, 8], strides = [1, 1]} : vector<8x32xf32> to vector<8x8xf32>
    %37 = vector.extract_strided_slice %14 {offsets = [0, 8], sizes = [8, 8], strides = [1, 1]} : vector<8x64xf32> to vector<8x8xf32>
    %cst_24 = arith.constant dense<0.000000e+00> : vector<8x8xf32>
    %38 = tpu.matmul %36, %37, %cst_24 {dimension_numbers = #tpu.dot_dimension_numbers<[1], [1], [0], [0], [0, 0, 1, 0], [], []>} : vector<8x8xf32>, vector<8x8xf32>, vector<8x8xf32> -> vector<8x8xf32>
    %39 = vector.broadcast %6 : vector<1x8xf32> to vector<8x8xf32>
    %40 = arith.addf %38, %39 : vector<8x8xf32>
    %cst_25 = arith.constant dense<0xFF800000> : vector<8xf32>
    %41 = vector.multi_reduction <maximumf>, %40, %cst_25 [1] : vector<8x8xf32> to vector<8xf32>
    %42 = vector.shape_cast %41 : vector<8xf32> to vector<8x1xf32>
    %43 = vector.broadcast %42 : vector<8x1xf32> to vector<8x8xf32>
    %44 = arith.subf %40, %43 : vector<8x8xf32>
    %45 = math.exp %44 : vector<8x8xf32>
    %cst_26 = arith.constant dense<0.000000e+00> : vector<8xf32>
    %46 = vector.multi_reduction <add>, %45, %cst_26 [1] : vector<8x8xf32> to vector<8xf32>
    %47 = vector.shape_cast %46 : vector<8xf32> to vector<8x1xf32>
    %48 = tpu.reciprocal %47 {approx = true} : vector<8x1xf32> -> vector<8x1xf32>
    %49 = vector.broadcast %48 : vector<8x1xf32> to vector<8x8xf32>
    %50 = arith.mulf %45, %49 : vector<8x8xf32>
    %c0_27 = arith.constant 0 : index
    %c1 = arith.constant 1 : index
    %c0_28 = arith.constant 0 : index
    %c0_29 = arith.constant 0 : index
    %51 = vector.load %arg13[%c0_27, %c1, %c0_28, %c0_29] : memref<1x4x8x8xf32, #tpu.memory_space<vmem>>, vector<1x1x8x8xf32>
    %52 = vector.shape_cast %51 : vector<1x1x8x8xf32> to vector<8x8xf32>
    %53 = vector.shape_cast %50 : vector<8x8xf32> to vector<1x1x8x8xf32>
    tpu.vector_store %arg13[%c0_27, %c1, %c0_28, %c0_29], %53 {strides = array<i32>} : memref<1x4x8x8xf32, #tpu.memory_space<vmem>>, vector<1x1x8x8xf32>,
    %54 = vector.extract_strided_slice %14 {offsets = [0, 40], sizes = [8, 8], strides = [1, 1]} : vector<8x64xf32> to vector<8x8xf32>
    %cst_30 = arith.constant dense<0.000000e+00> : vector<8x8xf32>
    %55 = tpu.matmul %50, %54, %cst_30 {dimension_numbers = #tpu.dot_dimension_numbers<[1], [0], [0], [1], [0, 0, 1, 1], [], []>} : vector<8x8xf32>, vector<8x8xf32>, vector<8x8xf32> -> vector<8x8xf32>
    %c0_31 = arith.constant 0 : index
    %c8 = arith.constant 8 : index
    %56 = vector.load %arg15[%c0_31, %c8] : memref<8x32xf32, #tpu.memory_space<vmem>>, vector<8x8xf32>
    tpu.vector_store %arg15[%c0_31, %c8], %55 {strides = array<i32>} : memref<8x32xf32, #tpu.memory_space<vmem>>, vector<8x8xf32>,
    %57 = vector.extract_strided_slice %13 {offsets = [0, 16], sizes = [8, 8], strides = [1, 1]} : vector<8x32xf32> to vector<8x8xf32>
    %58 = vector.extract_strided_slice %14 {offsets = [0, 16], sizes = [8, 8], strides = [1, 1]} : vector<8x64xf32> to vector<8x8xf32>
    %cst_32 = arith.constant dense<0.000000e+00> : vector<8x8xf32>
    %59 = tpu.matmul %57, %58, %cst_32 {dimension_numbers = #tpu.dot_dimension_numbers<[1], [1], [0], [0], [0, 0, 1, 0], [], []>} : vector<8x8xf32>, vector<8x8xf32>, vector<8x8xf32> -> vector<8x8xf32>
    %60 = vector.broadcast %6 : vector<1x8xf32> to vector<8x8xf32>
    %61 = arith.addf %59, %60 : vector<8x8xf32>
    %cst_33 = arith.constant dense<0xFF800000> : vector<8xf32>
    %62 = vector.multi_reduction <maximumf>, %61, %cst_33 [1] : vector<8x8xf32> to vector<8xf32>
    %63 = vector.shape_cast %62 : vector<8xf32> to vector<8x1xf32>
    %64 = vector.broadcast %63 : vector<8x1xf32> to vector<8x8xf32>
    %65 = arith.subf %61, %64 : vector<8x8xf32>
    %66 = math.exp %65 : vector<8x8xf32>
    %cst_34 = arith.constant dense<0.000000e+00> : vector<8xf32>
    %67 = vector.multi_reduction <add>, %66, %cst_34 [1] : vector<8x8xf32> to vector<8xf32>
    %68 = vector.shape_cast %67 : vector<8xf32> to vector<8x1xf32>
    %69 = tpu.reciprocal %68 {approx = true} : vector<8x1xf32> -> vector<8x1xf32>
    %70 = vector.broadcast %69 : vector<8x1xf32> to vector<8x8xf32>
    %71 = arith.mulf %66, %70 : vector<8x8xf32>
    %c0_35 = arith.constant 0 : index
    %c2 = arith.constant 2 : index
    %c0_36 = arith.constant 0 : index
    %c0_37 = arith.constant 0 : index
    %72 = vector.load %arg13[%c0_35, %c2, %c0_36, %c0_37] : memref<1x4x8x8xf32, #tpu.memory_space<vmem>>, vector<1x1x8x8xf32>
    %73 = vector.shape_cast %72 : vector<1x1x8x8xf32> to vector<8x8xf32>
    %74 = vector.shape_cast %71 : vector<8x8xf32> to vector<1x1x8x8xf32>
    tpu.vector_store %arg13[%c0_35, %c2, %c0_36, %c0_37], %74 {strides = array<i32>} : memref<1x4x8x8xf32, #tpu.memory_space<vmem>>, vector<1x1x8x8xf32>,
    %75 = vector.extract_strided_slice %14 {offsets = [0, 48], sizes = [8, 8], strides = [1, 1]} : vector<8x64xf32> to vector<8x8xf32>
    %cst_38 = arith.constant dense<0.000000e+00> : vector<8x8xf32>
    %76 = tpu.matmul %71, %75, %cst_38 {dimension_numbers = #tpu.dot_dimension_numbers<[1], [0], [0], [1], [0, 0, 1, 1], [], []>} : vector<8x8xf32>, vector<8x8xf32>, vector<8x8xf32> -> vector<8x8xf32>
    %c0_39 = arith.constant 0 : index
    %c16 = arith.constant 16 : index
    %77 = vector.load %arg15[%c0_39, %c16] : memref<8x32xf32, #tpu.memory_space<vmem>>, vector<8x8xf32>
    tpu.vector_store %arg15[%c0_39, %c16], %76 {strides = array<i32>} : memref<8x32xf32, #tpu.memory_space<vmem>>, vector<8x8xf32>,
    %78 = vector.extract_strided_slice %13 {offsets = [0, 24], sizes = [8, 8], strides = [1, 1]} : vector<8x32xf32> to vector<8x8xf32>
    %79 = vector.extract_strided_slice %14 {offsets = [0, 24], sizes = [8, 8], strides = [1, 1]} : vector<8x64xf32> to vector<8x8xf32>
    %cst_40 = arith.constant dense<0.000000e+00> : vector<8x8xf32>
    %80 = tpu.matmul %78, %79, %cst_40 {dimension_numbers = #tpu.dot_dimension_numbers<[1], [1], [0], [0], [0, 0, 1, 0], [], []>} : vector<8x8xf32>, vector<8x8xf32>, vector<8x8xf32> -> vector<8x8xf32>
    %81 = vector.broadcast %6 : vector<1x8xf32> to vector<8x8xf32>
    %82 = arith.addf %80, %81 : vector<8x8xf32>
    %cst_41 = arith.constant dense<0xFF800000> : vector<8xf32>
    %83 = vector.multi_reduction <maximumf>, %82, %cst_41 [1] : vector<8x8xf32> to vector<8xf32>
    %84 = vector.shape_cast %83 : vector<8xf32> to vector<8x1xf32>
    %85 = vector.broadcast %84 : vector<8x1xf32> to vector<8x8xf32>
    %86 = arith.subf %82, %85 : vector<8x8xf32>
    %87 = math.exp %86 : vector<8x8xf32>
    %cst_42 = arith.constant dense<0.000000e+00> : vector<8xf32>
    %88 = vector.multi_reduction <add>, %87, %cst_42 [1] : vector<8x8xf32> to vector<8xf32>
    %89 = vector.shape_cast %88 : vector<8xf32> to vector<8x1xf32>
    %90 = tpu.reciprocal %89 {approx = true} : vector<8x1xf32> -> vector<8x1xf32>
    %91 = vector.broadcast %90 : vector<8x1xf32> to vector<8x8xf32>
    %92 = arith.mulf %87, %91 : vector<8x8xf32>
    %c0_43 = arith.constant 0 : index
    %c3 = arith.constant 3 : index
    %c0_44 = arith.constant 0 : index
    %c0_45 = arith.constant 0 : index
    %93 = vector.load %arg13[%c0_43, %c3, %c0_44, %c0_45] : memref<1x4x8x8xf32, #tpu.memory_space<vmem>>, vector<1x1x8x8xf32>
    %94 = vector.shape_cast %93 : vector<1x1x8x8xf32> to vector<8x8xf32>
    %95 = vector.shape_cast %92 : vector<8x8xf32> to vector<1x1x8x8xf32>
    tpu.vector_store %arg13[%c0_43, %c3, %c0_44, %c0_45], %95 {strides = array<i32>} : memref<1x4x8x8xf32, #tpu.memory_space<vmem>>, vector<1x1x8x8xf32>,
    %96 = vector.extract_strided_slice %14 {offsets = [0, 56], sizes = [8, 8], strides = [1, 1]} : vector<8x64xf32> to vector<8x8xf32>
    %cst_46 = arith.constant dense<0.000000e+00> : vector<8x8xf32>
    %97 = tpu.matmul %92, %96, %cst_46 {dimension_numbers = #tpu.dot_dimension_numbers<[1], [0], [0], [1], [0, 0, 1, 1], [], []>} : vector<8x8xf32>, vector<8x8xf32>, vector<8x8xf32> -> vector<8x8xf32>
    %c0_47 = arith.constant 0 : index
    %c24 = arith.constant 24 : index
    %98 = vector.load %arg15[%c0_47, %c24] : memref<8x32xf32, #tpu.memory_space<vmem>>, vector<8x8xf32>
    tpu.vector_store %arg15[%c0_47, %c24], %97 {strides = array<i32>} : memref<8x32xf32, #tpu.memory_space<vmem>>, vector<8x8xf32>,
    %c0_48 = arith.constant 0 : index
    %c0_49 = arith.constant 0 : index
    %99 = vector.load %arg15[%c0_48, %c0_49] : memref<8x32xf32, #tpu.memory_space<vmem>>, vector<8x32xf32>
    %c0_50 = arith.constant 0 : index
    %c0_51 = arith.constant 0 : index
    %100 = vector.load %arg9[%c0_50, %c0_51] : memref<32x32xf32, #tpu.memory_space<vmem>>, vector<32x32xf32>
    %cst_52 = arith.constant dense<0.000000e+00> : vector<8x32xf32>
    %101 = tpu.matmul %99, %100, %cst_52 {dimension_numbers = #tpu.dot_dimension_numbers<[1], [0], [0], [1], [0, 0, 1, 1], [], []>} : vector<8x32xf32>, vector<32x32xf32>, vector<8x32xf32> -> vector<8x32xf32>
    %c0_53 = arith.constant 0 : index
    %c0_54 = arith.constant 0 : index
    %102 = vector.load %arg10[%c0_53, %c0_54] : memref<1x32xf32, #tpu.memory_space<vmem>>, vector<1x32xf32>
    %103 = vector.broadcast %102 : vector<1x32xf32> to vector<8x32xf32>
    %104 = arith.addf %101, %103 : vector<8x32xf32>
    %c0_55 = arith.constant 0 : index
    %c0_56 = arith.constant 0 : index
    %105 = memref.load %arg11[%c0_55, %c0_56] : memref<1x1xf32, #tpu.memory_space<smem>>
    %106 = vector.broadcast %105 : f32 to vector<8x32xf32>
    %107 = arith.mulf %104, %106 : vector<8x32xf32>
    %c0_57 = arith.constant 0 : index
    %c0_58 = arith.constant 0 : index
    %c0_59 = arith.constant 0 : index
    %108 = vector.load %arg12[%c0_57, %c0_58, %c0_59] : memref<1x8x32xf32, #tpu.memory_space<vmem>>, vector<1x8x32xf32>
    %109 = vector.shape_cast %108 : vector<1x8x32xf32> to vector<8x32xf32>
    %110 = vector.shape_cast %107 : vector<8x32xf32> to vector<1x8x32xf32>
    tpu.vector_store %arg12[%c0_57, %c0_58, %c0_59], %110 {strides = array<i32>} : memref<1x8x32xf32, #tpu.memory_space<vmem>>, vector<1x8x32xf32>,
    return
  }
  func.func @transform_0(%arg0: i32, %arg1: i32) -> (i32, i32, i32) {
    %c0_i32 = arith.constant 0 : i32
    %c0_i32_0 = arith.constant 0 : i32
    return %arg0, %arg1, %c0_i32 : i32, i32, i32
  }
  func.func @transform_1(%arg0: i32, %arg1: i32) -> (i32, i32, i32) {
    %c0_i32 = arith.constant 0 : i32
    %c0_i32_0 = arith.constant 0 : i32
    %c0_i32_1 = arith.constant 0 : i32
    return %arg0, %c0_i32, %c0_i32_0 : i32, i32, i32
  }
  func.func @transform_2(%arg0: i32, %arg1: i32) -> (i32, i32, i32, i32) {
    %c0_i32 = arith.constant 0 : i32
    %c0_i32_0 = arith.constant 0 : i32
    %c0_i32_1 = arith.constant 0 : i32
    %c0_i32_2 = arith.constant 0 : i32
    return %arg0, %c0_i32, %c0_i32_0, %c0_i32_1 : i32, i32, i32, i32
  }
  func.func @transform_3(%arg0: i32, %arg1: i32) -> (i32, i32) {
    %c0_i32 = arith.constant 0 : i32
    %c0_i32_0 = arith.constant 0 : i32
    %c0_i32_1 = arith.constant 0 : i32
    return %c0_i32, %c0_i32_0 : i32, i32
  }
  func.func @transform_4(%arg0: i32, %arg1: i32) -> (i32, i32) {
    %c0_i32 = arith.constant 0 : i32
    %c0_i32_0 = arith.constant 0 : i32
    %c0_i32_1 = arith.constant 0 : i32
    return %c0_i32, %c0_i32_0 : i32, i32
  }
  func.func @transform_5(%arg0: i32, %arg1: i32) -> (i32, i32) {
    %c0_i32 = arith.constant 0 : i32
    %c0_i32_0 = arith.constant 0 : i32
    %c0_i32_1 = arith.constant 0 : i32
    return %c0_i32, %c0_i32_0 : i32, i32
  }
  func.func @transform_6(%arg0: i32, %arg1: i32) -> (i32, i32) {
    %c0_i32 = arith.constant 0 : i32
    %c0_i32_0 = arith.constant 0 : i32
    %c0_i32_1 = arith.constant 0 : i32
    return %c0_i32, %c0_i32_0 : i32, i32
  }
  func.func @transform_7(%arg0: i32, %arg1: i32) -> (i32, i32) {
    %c0_i32 = arith.constant 0 : i32
    %c0_i32_0 = arith.constant 0 : i32
    %c0_i32_1 = arith.constant 0 : i32
    return %c0_i32, %c0_i32_0 : i32, i32
  }
  func.func @transform_8(%arg0: i32, %arg1: i32) -> (i32, i32) {
    %c0_i32 = arith.constant 0 : i32
    %c0_i32_0 = arith.constant 0 : i32
    %c0_i32_1 = arith.constant 0 : i32
    return %c0_i32, %c0_i32_0 : i32, i32
  }
  func.func @transform_9(%arg0: i32, %arg1: i32) -> (i32, i32) {
    %c0_i32 = arith.constant 0 : i32
    %c0_i32_0 = arith.constant 0 : i32
    %c0_i32_1 = arith.constant 0 : i32
    return %c0_i32, %c0_i32_0 : i32, i32
  }
  func.func @transform_10(%arg0: i32, %arg1: i32) -> (i32, i32, i32) {
    %c0_i32 = arith.constant 0 : i32
    %c0_i32_0 = arith.constant 0 : i32
    return %arg0, %arg1, %c0_i32 : i32, i32, i32
  }
  func.func @transform_11(%arg0: i32, %arg1: i32) -> (i32, i32, i32, i32) {
    %c0_i32 = arith.constant 0 : i32
    %c0_i32_0 = arith.constant 0 : i32
    %c0_i32_1 = arith.constant 0 : i32
    return %arg0, %c0_i32, %arg1, %c0_i32_0 : i32, i32, i32, i32
  }
}

</mosaic_0001>

<llo_original>
// kernel: tpu_custom_call.1
$region0: #{tpu_custom_call.1}
  #allocation0 [shape = 'u32[]', space=smem, size = 0x4, offset = 0x4, fixed_abs, tag = 'smem constant byte address 0x4 - core index']
  #allocation1 [shape = 'u32[144,128]{1,0:T(1,128)}', space=vmem, size = 0x12000, scoped, tag = 'internal scratch']
  #allocation2 [shape = 'f32[8,64]{1,0:T(8,128)}', space=vmem, size = 0x1000, scoped, tag = 'scratch operand']
  #allocation3 [shape = 'f32[8,32]{1,0:T(8,128)}', space=vmem, size = 0x1000, scoped, tag = 'scratch operand']
  #allocation4 [shape = 'f32[1,1]{1,0:T(1,128)S(6)}', space=smem, size = 0x200, scoped, tag = 'scoped memory for tpu_custom_call.1']
  %s0 = inlined_call_operand.hbm [shape: f32[2,8,32], index: 0, kind: input, shape index: {}]
  %s1 = inlined_call_operand.hbm [shape: f32[2,8,32], index: 1, kind: input, shape index: {}]
  %s2 = inlined_call_operand.vmem [shape: f32[2,1,1,8], index: 2, kind: input, shape index: {}]
  %s3 = inlined_call_operand.hbm [shape: f32[32,32], index: 3, kind: input, shape index: {}]
  %s4 = inlined_call_operand.vmem [shape: f32[1,32], index: 4, kind: input, shape index: {}]
  %s5 = inlined_call_operand.hbm [shape: f32[32,64], index: 5, kind: input, shape index: {}]
  %s6 = inlined_call_operand.vmem [shape: f32[1,64], index: 6, kind: input, shape index: {}]
  %s7 = inlined_call_operand.hbm [shape: f32[32,32], index: 7, kind: input, shape index: {}]
  %s8 = inlined_call_operand.vmem [shape: f32[1,32], index: 8, kind: input, shape index: {}]
  %s9 = inlined_call_operand.<no memory space> [shape: f32[1,1], index: 9, kind: input, shape index: {}]
  %s10 = inlined_call_operand.hbm [shape: f32[2,8,32], index: 10, kind: output, shape index: {0}]
  %s11 = inlined_call_operand.hbm [shape: f32[2,4,8,8], index: 11, kind: output, shape index: {1}]
  %12 = xla_tuple %s10, %s11
  %s13 = sld [smem:[#allocation0]]
  $region105: #{tpu_custom_call.1} parent=0
    _
  %s15 = ssub.s32 1, %s13
  %s16 = scalar_select 0, %s15, %s13
  %17 = sst [smem:[#allocation4]] %s9
  $region1: #{tpu_custom_call.1} parent=0
    #allocation5 [shape = 'u8[8192]{0}', space=vmem, size = 0x2000, scoped, tag = 'input window, operand 0']
    #allocation6 [shape = 's32[2]{0}', space=sflag, size = 0x8, scoped, tag = 'scoped memory for tpu_custom_call.1']
    #allocation7 [shape = 's32[2]{0}', space=sflag, size = 0x8, scoped, tag = 'scoped memory for tpu_custom_call.1']
    #allocation8 [shape = 'u8[4096]{0}', space=vmem, size = 0x1000, scoped, tag = 'input window, operand 1, single buffered']
    #allocation9 [shape = 's32[1]{0}', space=sflag, size = 0x4, scoped, tag = 'scoped memory for tpu_custom_call.1']
    #allocation10 [shape = 'u8[16384]{0}', space=vmem, size = 0x4000, scoped, tag = 'input window, operand 3, single buffered']
    #allocation11 [shape = 'u8[16384]{0}', space=vmem, size = 0x4000, scoped, tag = 'input window, operand 5, single buffered']
    #allocation12 [shape = 's32[1]{0}', space=sflag, size = 0x4, scoped, tag = 'scoped memory for tpu_custom_call.1']
    #allocation13 [shape = 'u8[16384]{0}', space=vmem, size = 0x4000, scoped, tag = 'input window, operand 7, single buffered']
    #allocation14 [shape = 'u8[8192]{0}', space=vmem, size = 0x2000, scoped, tag = 'output window, operand 0']
    #allocation15 [shape = 'u8[32768]{0}', space=vmem, size = 0x8000, scoped, tag = 'output window, operand 1']
    #allocation16 [shape = 's32[2]{0}', space=sflag, size = 0x8, scoped, tag = 'scoped memory for tpu_custom_call.1']
    %18 = vsyncpa [#allocation6], 0
    %s19 = scalar_lea.sflag [#allocation6], 1
    %20 = vsyncpa %s19, 0
    %21 = vsyncpa [#allocation9], 0
    %22 = vsyncpa [#allocation12], 0
    %23 = vsyncpa [#allocation7], 0
    %s24 = scalar_lea.sflag [#allocation7], 1
    %25 = vsyncpa %s24, 0
    %26 = vsyncpa [#allocation16], 0
    %s27 = scalar_lea.sflag [#allocation16], 1
    %28 = vsyncpa %s27, 0
    loop: start=0, step=1, limit=4
    $region2: #{tpu_custom_call.1} parent=1 // loop_pre_header
      _
    $region3: #{tpu_custom_call.1} parent=1 // loop_header
      %s30 = sphi 0, %s34
      %p31 = scmp.ge.s32.totalorder %s30, 4
      %s37 = sphi 0, %s49
      %s38 = sphi 0, %s45
      %s39 = sphi 0, %s37
      %s40 = sphi 0, %s38
      %s41 = sphi 0, %s39
      %s42 = sphi 0, %s40
      %s54 = sphi 0, %s56
      %s57 = sphi 0, %s54
      %s58 = sphi 0, %s57
      %s74 = sphi 0, %s58
      %s80 = sphi 0, %s82
      %s83 = sphi 0, %s80
      %s84 = sphi 0, %s83
      %s100 = sphi 0, %s84
      %s106 = sphi 0, %s108
      %s109 = sphi 0, %s106
      %s110 = sphi 0, %s109
      %s126 = sphi 0, %s110
      %s130 = sphi 0, %s130
      %s132 = sphi 0, %s130
      %s133 = sphi 0, %s132
      %s147 = sphi 0, %s133
      %s151 = sphi 0, %s151
      %s153 = sphi 0, %s151
      %s154 = sphi 0, %s153
      %s168 = sphi 0, %s154
      %s172 = sphi 0, %s172
      %s174 = sphi 0, %s172
      %s175 = sphi 0, %s174
      %s189 = sphi 0, %s175
      %s193 = sphi 0, %s193
      %s195 = sphi 0, %s193
      %s196 = sphi 0, %s195
      %s210 = sphi 0, %s196
      %s214 = sphi 0, %s214
      %s216 = sphi 0, %s214
      %s217 = sphi 0, %s216
      %s231 = sphi 0, %s217
      %s235 = sphi 0, %s235
      %s237 = sphi 0, %s235
      %s238 = sphi 0, %s237
      %s252 = sphi 0, %s238
      %s256 = sphi 0, %s256
      %s258 = sphi 0, %s256
      %s259 = sphi 0, %s258
      %s273 = sphi 0, %s259
      %s281 = sphi 0, %s283
      %s284 = sphi 0, %s281
      %s285 = sphi 0, %s284
      %s301 = sphi 0, %s285
      %s309 = sphi 0, %s311
      %s312 = sphi 0, %s309
      %s313 = sphi 0, %s312
      %s329 = sphi 0, %s313
    $region4: #{tpu_custom_call.1} parent=1 // loop_header_branch
      %33 = sbr.rel (%p31) target = $region8
    $region5: #{tpu_custom_call.1} parent=1 // loop_body
      %s35 = ssub.s32 %s30, 1
      %s36 = ssub.s32 %s30, 2
      %s43 = sadd.s32 1, %s38
      %p44 = scmp.ge.s32.totalorder %s43, 1
      %s45 = scalar_select %p44, 0, %s43
      %s46 = sadd.s32 1, %s37
      %s47 = scalar_select %p44, %s46, %s37
      %p48 = scmp.ge.s32.totalorder %s47, 2
      %s49 = scalar_select %p48, 0, %s47
      %s50 = ssub.s32 %s37, %s49
      %s51 = ssub.s32 %s38, %s45
      %s52 = sor.u32 %s50, %s51
      %p53 = scmp.eq.s32.totalorder %s52, 0
      %s55 = sadd.s32 %s54, 1
      %s56 = scalar_select %p53, %s54, %s55
      %p59 = pneg %p53
      %p60 = scmp.eq.s32.totalorder %s30, 1
      %p61 = por %p59, %p60
      %p62 = scmp.ne.s32.totalorder %s54, %s57
      %p63 = scmp.eq.s32.totalorder %s30, 0
      %p64 = por %p62, %p63
      %p65 = scmp.ne.s32.totalorder %s54, %s57
      %p66 = scmp.eq.s32.totalorder %s35, 1
      %p67 = por %p65, %p66
      %p68 = scmp.ne.s32.totalorder %s57, %s58
      %p69 = scmp.eq.s32.totalorder %s35, 0
      %p70 = por %p68, %p69
      %p71 = scmp.ne.s32.totalorder %s57, %s58
      %p72 = scmp.eq.s32.totalorder %s36, 1
      %p73 = por %p71, %p72
      %p75 = scmp.ne.s32.totalorder %s58, %s74
      %p76 = scmp.eq.s32.totalorder %s36, 0
      %p77 = por %p75, %p76
      %s78 = ssub.s32 %s37, %s49
      %p79 = scmp.eq.s32.totalorder %s78, 0
      %s81 = sadd.s32 %s80, 1
      %s82 = scalar_select %p79, %s80, %s81
      %p85 = pneg %p79
      %p86 = scmp.eq.s32.totalorder %s30, 1
      %p87 = por %p85, %p86
      %p88 = scmp.ne.s32.totalorder %s80, %s83
      %p89 = scmp.eq.s32.totalorder %s30, 0
      %p90 = por %p88, %p89
      %p91 = scmp.ne.s32.totalorder %s80, %s83
      %p92 = scmp.eq.s32.totalorder %s35, 1
      %p93 = por %p91, %p92
      %p94 = scmp.ne.s32.totalorder %s83, %s84
      %p95 = scmp.eq.s32.totalorder %s35, 0
      %p96 = por %p94, %p95
      %p97 = scmp.ne.s32.totalorder %s83, %s84
      %p98 = scmp.eq.s32.totalorder %s36, 1
      %p99 = por %p97, %p98
      %p101 = scmp.ne.s32.totalorder %s84, %s100
      %p102 = scmp.eq.s32.totalorder %s36, 0
      %p103 = por %p101, %p102
      %s104 = ssub.s32 %s37, %s49
      %p105 = scmp.eq.s32.totalorder %s104, 0
      %s107 = sadd.s32 %s106, 1
      %s108 = scalar_select %p105, %s106, %s107
      %p111 = pneg %p105
      %p112 = scmp.eq.s32.totalorder %s30, 1
      %p113 = por %p111, %p112
      %p114 = scmp.ne.s32.totalorder %s106, %s109
      %p115 = scmp.eq.s32.totalorder %s30, 0
      %p116 = por %p114, %p115
      %p117 = scmp.ne.s32.totalorder %s106, %s109
      %p118 = scmp.eq.s32.totalorder %s35, 1
      %p119 = por %p117, %p118
      %p120 = scmp.ne.s32.totalorder %s109, %s110
      %p121 = scmp.eq.s32.totalorder %s35, 0
      %p122 = por %p120, %p121
      %p123 = scmp.ne.s32.totalorder %s109, %s110
      %p124 = scmp.eq.s32.totalorder %s36, 1
      %p125 = por %p123, %p124
      %p127 = scmp.ne.s32.totalorder %s110, %s126
      %p128 = scmp.eq.s32.totalorder %s36, 0
      %p129 = por %p127, %p128
      %s131 = sadd.s32 %s130, 1
      %p134 = scmp.eq.s32.totalorder %s30, 1
      %p135 = scmp.ne.s32.totalorder %s130, %s132
      %p136 = scmp.eq.s32.totalorder %s30, 0
      %p137 = por %p135, %p136
      %p138 = scmp.ne.s32.totalorder %s130, %s132
      %p139 = scmp.eq.s32.totalorder %s35, 1
      %p140 = por %p138, %p139
      %p141 = scmp.ne.s32.totalorder %s132, %s133
      %p142 = scmp.eq.s32.totalorder %s35, 0
      %p143 = por %p141, %p142
      %p144 = scmp.ne.s32.totalorder %s132, %s133
      %p145 = scmp.eq.s32.totalorder %s36, 1
      %p146 = por %p144, %p145
      %p148 = scmp.ne.s32.totalorder %s133, %s147
      %p149 = scmp.eq.s32.totalorder %s36, 0
      %p150 = por %p148, %p149
      %s152 = sadd.s32 %s151, 1
      %p155 = scmp.eq.s32.totalorder %s30, 1
      %p156 = scmp.ne.s32.totalorder %s151, %s153
      %p157 = scmp.eq.s32.totalorder %s30, 0
      %p158 = por %p156, %p157
      %p159 = scmp.ne.s32.totalorder %s151, %s153
      %p160 = scmp.eq.s32.totalorder %s35, 1
      %p161 = por %p159, %p160
      %p162 = scmp.ne.s32.totalorder %s153, %s154
      %p163 = scmp.eq.s32.totalorder %s35, 0
      %p164 = por %p162, %p163
      %p165 = scmp.ne.s32.totalorder %s153, %s154
      %p166 = scmp.eq.s32.totalorder %s36, 1
      %p167 = por %p165, %p166
      %p169 = scmp.ne.s32.totalorder %s154, %s168
      %p170 = scmp.eq.s32.totalorder %s36, 0
      %p171 = por %p169, %p170
      %s173 = sadd.s32 %s172, 1
      %p176 = scmp.eq.s32.totalorder %s30, 1
      %p177 = scmp.ne.s32.totalorder %s172, %s174
      %p178 = scmp.eq.s32.totalorder %s30, 0
      %p179 = por %p177, %p178
      %p180 = scmp.ne.s32.totalorder %s172, %s174
      %p181 = scmp.eq.s32.totalorder %s35, 1
      %p182 = por %p180, %p181
      %p183 = scmp.ne.s32.totalorder %s174, %s175
      %p184 = scmp.eq.s32.totalorder %s35, 0
      %p185 = por %p183, %p184
      %p186 = scmp.ne.s32.totalorder %s174, %s175
      %p187 = scmp.eq.s32.totalorder %s36, 1
      %p188 = por %p186, %p187
      %p190 = scmp.ne.s32.totalorder %s175, %s189
      %p191 = scmp.eq.s32.totalorder %s36, 0
      %p192 = por %p190, %p191
      %s194 = sadd.s32 %s193, 1
      %p197 = scmp.eq.s32.totalorder %s30, 1
      %p198 = scmp.ne.s32.totalorder %s193, %s195
      %p199 = scmp.eq.s32.totalorder %s30, 0
      %p200 = por %p198, %p199
      %p201 = scmp.ne.s32.totalorder %s193, %s195
      %p202 = scmp.eq.s32.totalorder %s35, 1
      %p203 = por %p201, %p202
      %p204 = scmp.ne.s32.totalorder %s195, %s196
      %p205 = scmp.eq.s32.totalorder %s35, 0
      %p206 = por %p204, %p205
      %p207 = scmp.ne.s32.totalorder %s195, %s196
      %p208 = scmp.eq.s32.totalorder %s36, 1
      %p209 = por %p207, %p208
      %p211 = scmp.ne.s32.totalorder %s196, %s210
      %p212 = scmp.eq.s32.totalorder %s36, 0
      %p213 = por %p211, %p212
      %s215 = sadd.s32 %s214, 1
      %p218 = scmp.eq.s32.totalorder %s30, 1
      %p219 = scmp.ne.s32.totalorder %s214, %s216
      %p220 = scmp.eq.s32.totalorder %s30, 0
      %p221 = por %p219, %p220
      %p222 = scmp.ne.s32.totalorder %s214, %s216
      %p223 = scmp.eq.s32.totalorder %s35, 1
      %p224 = por %p222, %p223
      %p225 = scmp.ne.s32.totalorder %s216, %s217
      %p226 = scmp.eq.s32.totalorder %s35, 0
      %p227 = por %p225, %p226
      %p228 = scmp.ne.s32.totalorder %s216, %s217
      %p229 = scmp.eq.s32.totalorder %s36, 1
      %p230 = por %p228, %p229
      %p232 = scmp.ne.s32.totalorder %s217, %s231
      %p233 = scmp.eq.s32.totalorder %s36, 0
      %p234 = por %p232, %p233
      %s236 = sadd.s32 %s235, 1
      %p239 = scmp.eq.s32.totalorder %s30, 1
      %p240 = scmp.ne.s32.totalorder %s235, %s237
      %p241 = scmp.eq.s32.totalorder %s30, 0
      %p242 = por %p240, %p241
      %p243 = scmp.ne.s32.totalorder %s235, %s237
      %p244 = scmp.eq.s32.totalorder %s35, 1
      %p245 = por %p243, %p244
      %p246 = scmp.ne.s32.totalorder %s237, %s238
      %p247 = scmp.eq.s32.totalorder %s35, 0
      %p248 = por %p246, %p247
      %p249 = scmp.ne.s32.totalorder %s237, %s238
      %p250 = scmp.eq.s32.totalorder %s36, 1
      %p251 = por %p249, %p250
      %p253 = scmp.ne.s32.totalorder %s238, %s252
      %p254 = scmp.eq.s32.totalorder %s36, 0
      %p255 = por %p253, %p254
      %s257 = sadd.s32 %s256, 1
      %p260 = scmp.eq.s32.totalorder %s30, 1
      %p261 = scmp.ne.s32.totalorder %s256, %s258
      %p262 = scmp.eq.s32.totalorder %s30, 0
      %p263 = por %p261, %p262
      %p264 = scmp.ne.s32.totalorder %s256, %s258
      %p265 = scmp.eq.s32.totalorder %s35, 1
      %p266 = por %p264, %p265
      %p267 = scmp.ne.s32.totalorder %s258, %s259
      %p268 = scmp.eq.s32.totalorder %s35, 0
      %p269 = por %p267, %p268
      %p270 = scmp.ne.s32.totalorder %s258, %s259
      %p271 = scmp.eq.s32.totalorder %s36, 1
      %p272 = por %p270, %p271
      %p274 = scmp.ne.s32.totalorder %s259, %s273
      %p275 = scmp.eq.s32.totalorder %s36, 0
      %p276 = por %p274, %p275
      %s277 = ssub.s32 %s37, %s49
      %s278 = ssub.s32 %s38, %s45
      %s279 = sor.u32 %s277, %s278
      %p280 = scmp.eq.s32.totalorder %s279, 0
      %s282 = sadd.s32 %s281, 1
      %s283 = scalar_select %p280, %s281, %s282
      %p286 = pneg %p280
      %p287 = scmp.eq.s32.totalorder %s30, 1
      %p288 = por %p286, %p287
      %p289 = scmp.ne.s32.totalorder %s281, %s284
      %p290 = scmp.eq.s32.totalorder %s30, 0
      %p291 = por %p289, %p290
      %p292 = scmp.ne.s32.totalorder %s281, %s284
      %p293 = scmp.eq.s32.totalorder %s35, 1
      %p294 = por %p292, %p293
      %p295 = scmp.ne.s32.totalorder %s284, %s285
      %p296 = scmp.eq.s32.totalorder %s35, 0
      %p297 = por %p295, %p296
      %p298 = scmp.ne.s32.totalorder %s284, %s285
      %p299 = scmp.eq.s32.totalorder %s36, 1
      %p300 = por %p298, %p299
      %p302 = scmp.ne.s32.totalorder %s285, %s301
      %p303 = scmp.eq.s32.totalorder %s36, 0
      %p304 = por %p302, %p303
      %s305 = ssub.s32 %s37, %s49
      %s306 = ssub.s32 %s38, %s45
      %s307 = sor.u32 %s305, %s306
      %p308 = scmp.eq.s32.totalorder %s307, 0
      %s310 = sadd.s32 %s309, 1
      %s311 = scalar_select %p308, %s309, %s310
      %p314 = pneg %p308
      %p315 = scmp.eq.s32.totalorder %s30, 1
      %p316 = por %p314, %p315
      %p317 = scmp.ne.s32.totalorder %s309, %s312
      %p318 = scmp.eq.s32.totalorder %s30, 0
      %p319 = por %p317, %p318
      %p320 = scmp.ne.s32.totalorder %s309, %s312
      %p321 = scmp.eq.s32.totalorder %s35, 1
      %p322 = por %p320, %p321
      %p323 = scmp.ne.s32.totalorder %s312, %s313
      %p324 = scmp.eq.s32.totalorder %s35, 0
      %p325 = por %p323, %p324
      %p326 = scmp.ne.s32.totalorder %s312, %s313
      %p327 = scmp.eq.s32.totalorder %s36, 1
      %p328 = por %p326, %p327
      %p330 = scmp.ne.s32.totalorder %s313, %s329
      %p331 = scmp.eq.s32.totalorder %s36, 0
      %p332 = por %p330, %p331
      %p333 = scmp.le.s32.totalorder 1, %s30
      %p334 = scmp.lt.s32.totalorder %s30, 3
      %p335 = pnand %p333, %p334
      %p336 = pneg %p335
      // Predicated region
      $region9: #{tpu_custom_call.1} parent=5 // pred_check
        _
      $region10: #{tpu_custom_call.1} parent=5 // pred_check_branch
        %338 = sbr.rel (%p335) target = $region12
      $region11: #{tpu_custom_call.1} parent=5 // pred_region
        %s339 = ssub.s32 %s30, 1
        // Predicated region
        $region13: #{tpu_custom_call.1} parent=11 // pred_check
          %p340 = pneg %p96
        $region14: #{tpu_custom_call.1} parent=11 // pred_check_branch
          %342 = sbr.rel (%p340) target = $region16
        $region15: #{tpu_custom_call.1} parent=11 // pred_region
          %s344 = ssub.s32 128, 128
          %345 = vsyncadd [#allocation9], %s344
          %s346 = smul.addr %s39, 128
          %s347 = scalar_lea.hbm %s1, %s346
          %s349 = sshll.u32 [#allocation8], 4
          %s350 = int_to_ptr.vmem [resolvable:$true] %s349
          %352 = dma.hbm_to_vmem [thread:$0]  %s347, 128, %s350, [#allocation9]
        $region16: #{tpu_custom_call.1} parent=11 // pred_fallthru
          _
        // Predicated region
        $region17: #{tpu_custom_call.1} parent=11 // pred_check
          %p353 = pneg %p143
        $region18: #{tpu_custom_call.1} parent=11 // pred_check_branch
          %355 = sbr.rel (%p353) target = $region20
        $region19: #{tpu_custom_call.1} parent=11 // pred_region
          %s357 = ssub.s32 512, 512
          %358 = vsyncadd [#allocation9], %s357
          %s359 = sshll.u32 [#allocation10], 4
          %s360 = int_to_ptr.vmem [resolvable:$true] %s359
          %365 = dma.hbm_to_vmem [thread:$0]  %s3, 512, %s360, [#allocation9], 128, 128, 8
        $region20: #{tpu_custom_call.1} parent=11 // pred_fallthru
          _
        // Predicated region
        $region21: #{tpu_custom_call.1} parent=11 // pred_check
          %p366 = pneg %p164
        $region22: #{tpu_custom_call.1} parent=11 // pred_check_branch
          %368 = sbr.rel (%p366) target = $region24
        $region23: #{tpu_custom_call.1} parent=11 // pred_region
          _
        $region24: #{tpu_custom_call.1} parent=11 // pred_fallthru
          _
        // Predicated region
        $region25: #{tpu_custom_call.1} parent=11 // pred_check
          %p369 = pneg %p185
        $region26: #{tpu_custom_call.1} parent=11 // pred_check_branch
          %371 = sbr.rel (%p369) target = $region28
        $region27: #{tpu_custom_call.1} parent=11 // pred_region
          %s373 = ssub.s32 512, 512
          %374 = vsyncadd [#allocation12], %s373
          %s375 = sshll.u32 [#allocation11], 4
          %s376 = int_to_ptr.vmem [resolvable:$true] %s375
          %381 = dma.hbm_to_vmem [thread:$0]  %s5, 512, %s376, [#allocation12], 128, 128, 8
        $region28: #{tpu_custom_call.1} parent=11 // pred_fallthru
          _
        // Predicated region
        $region29: #{tpu_custom_call.1} parent=11 // pred_check
          %p382 = pneg %p206
        $region30: #{tpu_custom_call.1} parent=11 // pred_check_branch
          %384 = sbr.rel (%p382) target = $region32
        $region31: #{tpu_custom_call.1} parent=11 // pred_region
          _
        $region32: #{tpu_custom_call.1} parent=11 // pred_fallthru
          _
        // Predicated region
        $region33: #{tpu_custom_call.1} parent=11 // pred_check
          %p385 = pneg %p227
        $region34: #{tpu_custom_call.1} parent=11 // pred_check_branch
          %387 = sbr.rel (%p385) target = $region36
        $region35: #{tpu_custom_call.1} parent=11 // pred_region
          %s389 = ssub.s32 512, 512
          %390 = vsyncadd [#allocation12], %s389
          %s391 = sshll.u32 [#allocation13], 4
          %s392 = int_to_ptr.vmem [resolvable:$true] %s391
          %397 = dma.hbm_to_vmem [thread:$0]  %s7, 512, %s392, [#allocation12], 128, 128, 8
        $region36: #{tpu_custom_call.1} parent=11 // pred_fallthru
          _
        // Predicated region
        $region37: #{tpu_custom_call.1} parent=11 // pred_check
          %p398 = pneg %p248
        $region38: #{tpu_custom_call.1} parent=11 // pred_check_branch
          %400 = sbr.rel (%p398) target = $region40
        $region39: #{tpu_custom_call.1} parent=11 // pred_region
          _
        $region40: #{tpu_custom_call.1} parent=11 // pred_fallthru
          _
        // Predicated region
        $region41: #{tpu_custom_call.1} parent=11 // pred_check
          %p401 = pneg %p269
        $region42: #{tpu_custom_call.1} parent=11 // pred_check_branch
          %403 = sbr.rel (%p401) target = $region44
        $region43: #{tpu_custom_call.1} parent=11 // pred_region
          _
        $region44: #{tpu_custom_call.1} parent=11 // pred_fallthru
          _
      $region12: #{tpu_custom_call.1} parent=5 // pred_fallthru
        _
      %p404 = scmp.lt.s32.totalorder %s30, 2
      // Predicated region
      $region45: #{tpu_custom_call.1} parent=5 // pred_check
        %p405 = pneg %p404
      $region46: #{tpu_custom_call.1} parent=5 // pred_check_branch
        %407 = sbr.rel (%p405) target = $region48
      $region47: #{tpu_custom_call.1} parent=5 // pred_region
        // Predicated region
        $region49: #{tpu_custom_call.1} parent=47 // pred_check
          %p408 = pneg %p64
        $region50: #{tpu_custom_call.1} parent=47 // pred_check_branch
          %410 = sbr.rel (%p408) target = $region52
        $region51: #{tpu_custom_call.1} parent=47 // pred_region
          %s411 = sand.u32 %s54, 1
          %s412 = scalar_lea.sflag [#allocation6], %s411
          %s413 = sand.u32 %s54, 1
          %s414 = smul.addr %s413, 8
          %s415 = scalar_lea.vmem [#allocation5], %s414
          %s417 = ssub.s32 128, 128
          %418 = vsyncadd %s412, %s417
          %s419 = sadd.s32 %s38, %s37
          %s420 = smul.addr %s419, 128
          %s421 = scalar_lea.hbm %s0, %s420
          %s423 = sshll.u32 %s415, 4
          %s424 = int_to_ptr.vmem [resolvable:$true] %s423
          %426 = dma.hbm_to_vmem [thread:$0]  %s421, 128, %s424, %s412
        $region52: #{tpu_custom_call.1} parent=47 // pred_fallthru
          _
        // Predicated region
        $region53: #{tpu_custom_call.1} parent=47 // pred_check
          %p427 = pneg %p116
        $region54: #{tpu_custom_call.1} parent=47 // pred_check_branch
          %429 = sbr.rel (%p427) target = $region56
        $region55: #{tpu_custom_call.1} parent=47 // pred_region
          %p430 = scmp.lt.s32.totalorder %s37, 1
          %s431 = scalar_select %p430, %s37, 1
          %s432 = scalar_lea.vmem %s2, %s431
        $region56: #{tpu_custom_call.1} parent=47 // pred_fallthru
          _
      $region48: #{tpu_custom_call.1} parent=5 // pred_fallthru
        _
      %p433 = scmp.le.s32.totalorder 1, %s30
      %p434 = scmp.lt.s32.totalorder %s30, 3
      %p435 = pnand %p433, %p434
      %p436 = pneg %p435
      // Predicated region
      $region57: #{tpu_custom_call.1} parent=5 // pred_check
        _
      $region58: #{tpu_custom_call.1} parent=5 // pred_check_branch
        %438 = sbr.rel (%p435) target = $region60
      $region59: #{tpu_custom_call.1} parent=5 // pred_region
        %s439 = ssub.s32 %s30, 1
        %s440 = sand.u32 %s57, 1
        %s441 = scalar_lea.sflag [#allocation6], %s440
        %s442 = sand.u32 %s57, 1
        %s443 = smul.addr %s442, 8
        %s444 = scalar_lea.vmem [#allocation5], %s443
        // Predicated region
        $region61: #{tpu_custom_call.1} parent=59 // pred_check
          %p445 = pneg %p70
        $region62: #{tpu_custom_call.1} parent=59 // pred_check_branch
          %447 = sbr.rel (%p445) target = $region64
        $region63: #{tpu_custom_call.1} parent=59 // pred_region
          %448 = dma.done %s441, 128
        $region64: #{tpu_custom_call.1} parent=59 // pred_fallthru
          _
        // Predicated region
        $region65: #{tpu_custom_call.1} parent=59 // pred_check
          %p449 = pneg %p96
        $region66: #{tpu_custom_call.1} parent=59 // pred_check_branch
          %451 = sbr.rel (%p449) target = $region68
        $region67: #{tpu_custom_call.1} parent=59 // pred_region
          %452 = dma.done [#allocation9], 128
        $region68: #{tpu_custom_call.1} parent=59 // pred_fallthru
          _
        // Predicated region
        $region69: #{tpu_custom_call.1} parent=59 // pred_check
          %p453 = pneg %p143
        $region70: #{tpu_custom_call.1} parent=59 // pred_check_branch
          %455 = sbr.rel (%p453) target = $region72
        $region71: #{tpu_custom_call.1} parent=59 // pred_region
          %456 = dma.done [#allocation9], 512
        $region72: #{tpu_custom_call.1} parent=59 // pred_fallthru
          _
        // Predicated region
        $region73: #{tpu_custom_call.1} parent=59 // pred_check
          %p457 = pneg %p185
        $region74: #{tpu_custom_call.1} parent=59 // pred_check_branch
          %459 = sbr.rel (%p457) target = $region76
        $region75: #{tpu_custom_call.1} parent=59 // pred_region
          %460 = dma.done [#allocation12], 512
        $region76: #{tpu_custom_call.1} parent=59 // pred_fallthru
          _
        // Predicated region
        $region77: #{tpu_custom_call.1} parent=59 // pred_check
          %p461 = pneg %p227
        $region78: #{tpu_custom_call.1} parent=59 // pred_check_branch
          %463 = sbr.rel (%p461) target = $region80
        $region79: #{tpu_custom_call.1} parent=59 // pred_region
          %464 = dma.done [#allocation12], 512
        $region80: #{tpu_custom_call.1} parent=59 // pred_fallthru
          _
        %s465 = sand.u32 %s57, 1
        %s466 = scalar_lea.sflag [#allocation6], %s465
        %s467 = sand.u32 %s57, 1
        %s468 = smul.addr %s467, 8
        %s469 = scalar_lea.vmem [#allocation5], %s468
        %p470 = pneg %p70
        %p471 = pneg %p67
        %p472 = pneg %p96
        %p473 = pneg %p93
        %p474 = scmp.lt.s32.totalorder %s39, 1
        %s475 = scalar_select %p474, %s39, 1
        %s476 = scalar_lea.vmem %s2, %s475
        %p477 = pneg %p122
        %p478 = pneg %p119
        %p479 = pneg %p143
        %p480 = pneg %p140
        %p481 = pneg %p164
        %p482 = pneg %p161
        %p483 = pneg %p185
        %p484 = pneg %p182
        %p485 = pneg %p206
        %p486 = pneg %p203
        %p487 = pneg %p227
        %p488 = pneg %p224
        %p489 = pneg %p248
        %p490 = pneg %p245
        %p491 = pneg %p269
        %p492 = pneg %p266
        %p493 = pneg %p297
        %p494 = pneg %p294
        %s495 = sand.u32 %s284, 1
        %s496 = scalar_lea.sflag [#allocation7], %s495
        %s497 = sand.u32 %s284, 1
        %s498 = smul.addr %s497, 8
        %s499 = scalar_lea.vmem [#allocation14], %s498
        %p500 = pneg %p325
        %p501 = pneg %p322
        %s502 = sand.u32 %s312, 1
        %s503 = scalar_lea.sflag [#allocation16], %s502
        %s504 = sand.u32 %s312, 1
        %s505 = smul.addr %s504, 32
        %s506 = scalar_lea.vmem [#allocation15], %s505
        %p507 = scmp.lt.s32.totalorder %s39, 1
        %s508 = scalar_select %p507, %s39, 1
        %s509 = scalar_lea.vmem %s2, %s508
        %p510 = scmp.eq.s32.totalorder %s40, 0
        // Predicated region
        $region81: #{tpu_custom_call.1} parent=59 // pred_check
          %p511 = pneg %p510
        $region82: #{tpu_custom_call.1} parent=59 // pred_check_branch
          %513 = sbr.rel (%p511) target = $region84
        $region83: #{tpu_custom_call.1} parent=59 // pred_region
          %v514 = vld [vmem:[#allocation8] sm:$0xff]
          %v515 = vld [vmem:[#allocation11] sm:$0xff]
          %v516 = vld [vmem:[#allocation11 + $0x8] sm:$0xff]
          %v517 = vld [vmem:[#allocation11 + $0x10] sm:$0xff]
          %v518 = vld [vmem:[#allocation11 + $0x18] sm:$0xff]
          %v519 = vld [vmem:[%s6] sm:$0x1]
          %v521 = vlaneseq
          %v522 = vshrl.u32 %v521, 7
          %v523 = vsub.s32 0, %v522
          %v524 = vrot.slane %v519, %v523
          %vm526 = vcmask 261120
          %v528 = vsel %vm526, %v514, 0
          %530 = vmatprep.subr.mxu0 0.0
          %531 = vmatpush1.msra.mxu0 %v515
          %532 = vmatprep.subr.mxu0 0.0
          %533 = vmatpush1.msra.mxu0 %v516
          %534 = vmatprep.subr.mxu0 0.0
          %535 = vmatpush1.msra.mxu0 %v517
          %536 = vmatprep.subr.mxu0 0.0
          %537 = vmatpush1.msra.mxu0 %v518
          %538 = vmatprep.subr.mxu0 0.0
          %539 = vmatpush1.msra.mxu0 0.0
          %540 = vmatprep.subr.mxu0 0.0
          %541 = vmatpush1.msra.mxu0 0.0
          %542 = vmatprep.subr.mxu0 0.0
          %543 = vmatpush1.msra.mxu0 0.0
          %544 = vmatprep.subr.mxu0 0.0
          %545 = vmatpush1.msra.mxu0 0.0
          %546 = vmatprep.subr.mxu0 0.0
          %547 = vmatpush1.msra.mxu0 0.0
          %548 = vmatprep.subr.mxu0 0.0
          %549 = vmatpush1.msra.mxu0 0.0
          %550 = vmatprep.subr.mxu0 0.0
          %551 = vmatpush1.msra.mxu0 0.0
          %552 = vmatprep.subr.mxu0 0.0
          %553 = vmatpush1.msra.mxu0 0.0
          %554 = vmatprep.subr.mxu0 0.0
          %555 = vmatpush1.msra.mxu0 0.0
          %556 = vmatprep.subr.mxu0 0.0
          %557 = vmatpush1.msra.mxu0 0.0
          %558 = vmatprep.subr.mxu0 0.0
          %559 = vmatpush1.msra.mxu0 0.0
          %560 = vmatprep.subr.mxu0 0.0
          %561 = vmatpush1.msra.mxu0 0.0
          %562 = vmatprep.subr.mxu0 0.0
          %563 = vmatpush1.msra.mxu0 0.0
          %564 = vmatprep.subr.mxu0 0.0
          %565 = vmatpush1.msra.mxu0 0.0
          %566 = vmatprep.subr.mxu0 0.0
          %567 = vmatpush1.msra.mxu0 0.0
          %568 = vmatprep.subr.mxu0 0.0
          %569 = vmatpush1.msra.mxu0 0.0
          %570 = vmatprep.subr.mxu0 0.0
          %571 = vmatpush1.msra.mxu0 0.0
          %572 = vmatprep.subr.mxu0 0.0
          %573 = vmatpush1.msra.mxu0 0.0
          %574 = vmatprep.subr.mxu0 0.0
          %575 = vmatpush1.msra.mxu0 0.0
          %576 = vmatprep.subr.mxu0 0.0
          %577 = vmatpush1.msra.mxu0 0.0
          %578 = vmatprep.subr.mxu0 0.0
          %579 = vmatpush1.msra.mxu0 0.0
          %580 = vmatprep.subr.mxu0 0.0
          %581 = vmatpush1.msra.mxu0 0.0
          %582 = vmatprep.subr.mxu0 0.0
          %583 = vmatpush1.msra.mxu0 0.0
          %584 = vmatprep.subr.mxu0 0.0
          %585 = vmatpush1.msra.mxu0 0.0
          %586 = vmatprep.subr.mxu0 0.0
          %587 = vmatpush1.msra.mxu0 0.0
          %588 = vmatprep.subr.mxu0 0.0
          %589 = vmatpush1.msra.mxu0 0.0
          %590 = vmatprep.subr.mxu0 0.0
          %591 = vmatpush1.msra.mxu0 0.0
          %592 = vmatprep.subr.mxu0 0.0
          %593 = vmatpush1.msra.mxu0 0.0
          %594 = vmatprep.mubr.f32.mxu0 0.0
          %595 = vmatmul.mubr.f32.gmra.mrb[0].mxu0 %v528
          %v596 = vpop.f32.mrb[0].mxu0
          %v597 = vadd.f32 %v524, %v596
          %v598 = vpop.f32.mrb[0].mxu0
          %599 = vdwg.mxu0
          %vm600 = vcmask 523264
          %601 = vst.msk [vmem:[#allocation2] sm:$0xff] %vm600, %v597
        $region84: #{tpu_custom_call.1} parent=59 // pred_fallthru
          _
        %v602 = vld [vmem:[%s444] sm:$0xff]
        %v603 = vld [vmem:[%s509] sm:$0x1]
        %v604 = vld [vmem:[#allocation10] sm:$0xff]
        %v605 = vld [vmem:[#allocation10 + $0x8] sm:$0xff]
        %v606 = vld [vmem:[#allocation10 + $0x10] sm:$0xff]
        %v607 = vld [vmem:[#allocation10 + $0x18] sm:$0xff]
        %v608 = vld [vmem:[%s4] sm:$0x1]
        %v610 = vlaneseq
        %v611 = vshrl.u32 %v610, 7
        %v612 = vsub.s32 0, %v611
        %v613 = vrot.slane %v608, %v612
        %vm615 = vcmask 261120
        %v617 = vsel %vm615, %v602, 0
        %619 = vmatprep.subr.mxu0 0.0
        %620 = vmatpush1.msra.mxu0 %v604
        %621 = vmatprep.subr.mxu0 0.0
        %622 = vmatpush1.msra.mxu0 %v605
        %623 = vmatprep.subr.mxu0 0.0
        %624 = vmatpush1.msra.mxu0 %v606
        %625 = vmatprep.subr.mxu0 0.0
        %626 = vmatpush1.msra.mxu0 %v607
        %627 = vmatprep.subr.mxu0 0.0
        %628 = vmatpush1.msra.mxu0 0.0
        %629 = vmatprep.subr.mxu0 0.0
        %630 = vmatpush1.msra.mxu0 0.0
        %631 = vmatprep.subr.mxu0 0.0
        %632 = vmatpush1.msra.mxu0 0.0
        %633 = vmatprep.subr.mxu0 0.0
        %634 = vmatpush1.msra.mxu0 0.0
        %635 = vmatprep.subr.mxu0 0.0
        %636 = vmatpush1.msra.mxu0 0.0
        %637 = vmatprep.subr.mxu0 0.0
        %638 = vmatpush1.msra.mxu0 0.0
        %639 = vmatprep.subr.mxu0 0.0
        %640 = vmatpush1.msra.mxu0 0.0
        %641 = vmatprep.subr.mxu0 0.0
        %642 = vmatpush1.msra.mxu0 0.0
        %643 = vmatprep.subr.mxu0 0.0
        %644 = vmatpush1.msra.mxu0 0.0
        %645 = vmatprep.subr.mxu0 0.0
        %646 = vmatpush1.msra.mxu0 0.0
        %647 = vmatprep.subr.mxu0 0.0
        %648 = vmatpush1.msra.mxu0 0.0
        %649 = vmatprep.subr.mxu0 0.0
        %650 = vmatpush1.msra.mxu0 0.0
        %651 = vmatprep.subr.mxu0 0.0
        %652 = vmatpush1.msra.mxu0 0.0
        %653 = vmatprep.subr.mxu0 0.0
        %654 = vmatpush1.msra.mxu0 0.0
        %655 = vmatprep.subr.mxu0 0.0
        %656 = vmatpush1.msra.mxu0 0.0
        %657 = vmatprep.subr.mxu0 0.0
        %658 = vmatpush1.msra.mxu0 0.0
        %659 = vmatprep.subr.mxu0 0.0
        %660 = vmatpush1.msra.mxu0 0.0
        %661 = vmatprep.subr.mxu0 0.0
        %662 = vmatpush1.msra.mxu0 0.0
        %663 = vmatprep.subr.mxu0 0.0
        %664 = vmatpush1.msra.mxu0 0.0
        %665 = vmatprep.subr.mxu0 0.0
        %666 = vmatpush1.msra.mxu0 0.0
        %667 = vmatprep.subr.mxu0 0.0
        %668 = vmatpush1.msra.mxu0 0.0
        %669 = vmatprep.subr.mxu0 0.0
        %670 = vmatpush1.msra.mxu0 0.0
        %671 = vmatprep.subr.mxu0 0.0
        %672 = vmatpush1.msra.mxu0 0.0
        %673 = vmatprep.subr.mxu0 0.0
        %674 = vmatpush1.msra.mxu0 0.0
        %675 = vmatprep.subr.mxu0 0.0
        %676 = vmatpush1.msra.mxu0 0.0
        %677 = vmatprep.subr.mxu0 0.0
        %678 = vmatpush1.msra.mxu0 0.0
        %679 = vmatprep.subr.mxu0 0.0
        %680 = vmatpush1.msra.mxu0 0.0
        %681 = vmatprep.subr.mxu0 0.0
        %682 = vmatpush1.msra.mxu0 0.0
        %683 = vmatprep.mubr.f32.mxu0 0.0
        %684 = vmatmul.mubr.f32.gmra.mrb[0].mxu0 %v617
        %v685 = vpop.f32.mrb[0].mxu0
        %v686 = vadd.f32 %v613, %v685
        %v687 = vpop.f32.mrb[0].mxu0
        %688 = vdwg.mxu0
        %v689 = vmul.f32 %v686, 0.35355338
        %v690 = vld [vmem:[#allocation2] sm:$0xff]
        %v692 = vlaneseq
        %v693 = vshrl.u32 %v692, 7
        %v694 = vsub.s32 0, %v693
        %v695 = vrot.slane %v603, %v694
        %vm697 = vcmask 64512
        %v699 = vsel %vm697, %v689, 0
        %v702 = vsel %vm697, %v690, 0
        %704 = vmatprep.subr.mxu0 0.0
        %705 = vmatpush1.xpose.msra.mxu0 %v702
        %706 = vmatprep.subr.mxu0 0.0
        %707 = vmatpush1.xpose.msra.mxu0 0.0
        %708 = vmatprep.subr.mxu0 0.0
        %709 = vmatpush1.xpose.msra.mxu0 0.0
        %710 = vmatprep.subr.mxu0 0.0
        %711 = vmatpush1.xpose.msra.mxu0 0.0
        %712 = vmatprep.subr.mxu0 0.0
        %713 = vmatpush1.xpose.msra.mxu0 0.0
        %714 = vmatprep.subr.mxu0 0.0
        %715 = vmatpush1.xpose.msra.mxu0 0.0
        %716 = vmatprep.subr.mxu0 0.0
        %717 = vmatpush1.xpose.msra.mxu0 0.0
        %718 = vmatprep.subr.mxu0 0.0
        %719 = vmatpush1.xpose.msra.mxu0 0.0
        %720 = vmatprep.subr.mxu0 0.0
        %721 = vmatpush1.xpose.msra.mxu0 0.0
        %722 = vmatprep.subr.mxu0 0.0
        %723 = vmatpush1.xpose.msra.mxu0 0.0
        %724 = vmatprep.subr.mxu0 0.0
        %725 = vmatpush1.xpose.msra.mxu0 0.0
        %726 = vmatprep.subr.mxu0 0.0
        %727 = vmatpush1.xpose.msra.mxu0 0.0
        %728 = vmatprep.subr.mxu0 0.0
        %729 = vmatpush1.xpose.msra.mxu0 0.0
        %730 = vmatprep.subr.mxu0 0.0
        %731 = vmatpush1.xpose.msra.mxu0 0.0
        %732 = vmatprep.subr.mxu0 0.0
        %733 = vmatpush1.xpose.msra.mxu0 0.0
        %734 = vmatprep.subr.mxu0 0.0
        %735 = vmatpush1.xpose.msra.mxu0 0.0
        %736 = vmatprep.subr.mxu0 0.0
        %737 = vmatpush1.xpose.msra.mxu0 0.0
        %738 = vmatprep.subr.mxu0 0.0
        %739 = vmatpush1.xpose.msra.mxu0 0.0
        %740 = vmatprep.subr.mxu0 0.0
        %741 = vmatpush1.xpose.msra.mxu0 0.0
        %742 = vmatprep.subr.mxu0 0.0
        %743 = vmatpush1.xpose.msra.mxu0 0.0
        %744 = vmatprep.subr.mxu0 0.0
        %745 = vmatpush1.xpose.msra.mxu0 0.0
        %746 = vmatprep.subr.mxu0 0.0
        %747 = vmatpush1.xpose.msra.mxu0 0.0
        %748 = vmatprep.subr.mxu0 0.0
        %749 = vmatpush1.xpose.msra.mxu0 0.0
        %750 = vmatprep.subr.mxu0 0.0
        %751 = vmatpush1.xpose.msra.mxu0 0.0
        %752 = vmatprep.subr.mxu0 0.0
        %753 = vmatpush1.xpose.msra.mxu0 0.0
        %754 = vmatprep.subr.mxu0 0.0
        %755 = vmatpush1.xpose.msra.mxu0 0.0
        %756 = vmatprep.subr.mxu0 0.0
        %757 = vmatpush1.xpose.msra.mxu0 0.0
        %758 = vmatprep.subr.mxu0 0.0
        %759 = vmatpush1.xpose.msra.mxu0 0.0
        %760 = vmatprep.subr.mxu0 0.0
        %761 = vmatpush1.xpose.msra.mxu0 0.0
        %762 = vmatprep.subr.mxu0 0.0
        %763 = vmatpush1.xpose.msra.mxu0 0.0
        %764 = vmatprep.subr.mxu0 0.0
        %765 = vmatpush1.xpose.msra.mxu0 0.0
        %766 = vmatprep.subr.mxu0 0.0
        %767 = vmatpush1.xpose.msra.mxu0 0.0
        %768 = vmatprep.mubr.f32.mxu0 0.0
        %769 = vmatmul.mubr.f32.gmra.mrb[0].mxu0 %v699
        %v770 = vpop.f32.mrb[0].mxu0
        %v771 = vadd.f32 %v695, %v770
        %v772 = vpop.f32.mrb[0].mxu0
        %773 = vdwg.mxu0
        %v774 = vsel %vm697, %v771, -inf
        %775 = vmax.xlane.f32.xlu0 %v774
        %v776 = vpop.xlane.xlu0 %775
        %v777 = vsub.f32 %v771, %v776
        %v778 = vmul.f32 %v777, 1.442695
        %v779 = vpow.pop %v778
        %v780 = vsel %vm697, %v779, 0.0
        %781 = vadd.xlane.f32.xlu0 %v780
        %v782 = vpop.xlane.xlu0 %781
        %v783 = vrcp.pop %v782
        %v784 = vmul.f32 %v779, %v783
        %785 = vst.msk [vmem:[%s506] sm:$0xff] %vm697, %v784
        %786 = vrot.lane.b32.xlu0 %v690, 96
        %v787 = vpop.permute.xlu0 %786
        %v790 = vsel %vm697, %v784, 0
        %792 = vmatprep.subr.mxu0 0.0
        %793 = vmatpush1.msra.mxu0 %v787
        %794 = vmatprep.subr.mxu0 0.0
        %795 = vmatpush1.msra.mxu0 0.0
        %796 = vmatprep.subr.mxu0 0.0
        %797 = vmatpush1.msra.mxu0 0.0
        %798 = vmatprep.subr.mxu0 0.0
        %799 = vmatpush1.msra.mxu0 0.0
        %800 = vmatprep.subr.mxu0 0.0
        %801 = vmatpush1.msra.mxu0 0.0
        %802 = vmatprep.subr.mxu0 0.0
        %803 = vmatpush1.msra.mxu0 0.0
        %804 = vmatprep.subr.mxu0 0.0
        %805 = vmatpush1.msra.mxu0 0.0
        %806 = vmatprep.subr.mxu0 0.0
        %807 = vmatpush1.msra.mxu0 0.0
        %808 = vmatprep.subr.mxu0 0.0
        %809 = vmatpush1.msra.mxu0 0.0
        %810 = vmatprep.subr.mxu0 0.0
        %811 = vmatpush1.msra.mxu0 0.0
        %812 = vmatprep.subr.mxu0 0.0
        %813 = vmatpush1.msra.mxu0 0.0
        %814 = vmatprep.subr.mxu0 0.0
        %815 = vmatpush1.msra.mxu0 0.0
        %816 = vmatprep.subr.mxu0 0.0
        %817 = vmatpush1.msra.mxu0 0.0
        %818 = vmatprep.subr.mxu0 0.0
        %819 = vmatpush1.msra.mxu0 0.0
        %820 = vmatprep.subr.mxu0 0.0
        %821 = vmatpush1.msra.mxu0 0.0
        %822 = vmatprep.subr.mxu0 0.0
        %823 = vmatpush1.msra.mxu0 0.0
        %824 = vmatprep.subr.mxu0 0.0
        %825 = vmatpush1.msra.mxu0 0.0
        %826 = vmatprep.subr.mxu0 0.0
        %827 = vmatpush1.msra.mxu0 0.0
        %828 = vmatprep.subr.mxu0 0.0
        %829 = vmatpush1.msra.mxu0 0.0
        %830 = vmatprep.subr.mxu0 0.0
        %831 = vmatpush1.msra.mxu0 0.0
        %832 = vmatprep.subr.mxu0 0.0
        %833 = vmatpush1.msra.mxu0 0.0
        %834 = vmatprep.subr.mxu0 0.0
        %835 = vmatpush1.msra.mxu0 0.0
        %836 = vmatprep.subr.mxu0 0.0
        %837 = vmatpush1.msra.mxu0 0.0
        %838 = vmatprep.subr.mxu0 0.0
        %839 = vmatpush1.msra.mxu0 0.0
        %840 = vmatprep.subr.mxu0 0.0
        %841 = vmatpush1.msra.mxu0 0.0
        %842 = vmatprep.subr.mxu0 0.0
        %843 = vmatpush1.msra.mxu0 0.0
        %844 = vmatprep.subr.mxu0 0.0
        %845 = vmatpush1.msra.mxu0 0.0
        %846 = vmatprep.subr.mxu0 0.0
        %847 = vmatpush1.msra.mxu0 0.0
        %848 = vmatprep.subr.mxu0 0.0
        %849 = vmatpush1.msra.mxu0 0.0
        %850 = vmatprep.subr.mxu0 0.0
        %851 = vmatpush1.msra.mxu0 0.0
        %852 = vmatprep.subr.mxu0 0.0
        %853 = vmatpush1.msra.mxu0 0.0
        %854 = vmatprep.subr.mxu0 0.0
        %855 = vmatpush1.msra.mxu0 0.0
        %856 = vmatprep.mubr.f32.mxu0 0.0
        %857 = vmatmul.mubr.f32.gmra.mrb[0].mxu0 %v790
        %v858 = vpop.f32.mrb[0].mxu0
        %v859 = vadd.f32 0.0, %v858
        %v860 = vpop.f32.mrb[0].mxu0
        %861 = vdwg.mxu0
        %862 = vst.msk [vmem:[#allocation3] sm:$0xff] %vm697, %v859
        %863 = vrot.lane.b32.xlu0 %v689, 120
        %v864 = vpop.permute.xlu0 %863
        %865 = vrot.lane.b32.xlu0 %v690, 120
        %v866 = vpop.permute.xlu0 %865
        %v867 = vsel %vm697, %v864, 0
        %v869 = vsel %vm697, %v866, 0
        %871 = vmatprep.subr.mxu0 0.0
        %872 = vmatpush1.xpose.msra.mxu0 %v869
        %873 = vmatprep.subr.mxu0 0.0
        %874 = vmatpush1.xpose.msra.mxu0 0.0
        %875 = vmatprep.subr.mxu0 0.0
        %876 = vmatpush1.xpose.msra.mxu0 0.0
        %877 = vmatprep.subr.mxu0 0.0
        %878 = vmatpush1.xpose.msra.mxu0 0.0
        %879 = vmatprep.subr.mxu0 0.0
        %880 = vmatpush1.xpose.msra.mxu0 0.0
        %881 = vmatprep.subr.mxu0 0.0
        %882 = vmatpush1.xpose.msra.mxu0 0.0
        %883 = vmatprep.subr.mxu0 0.0
        %884 = vmatpush1.xpose.msra.mxu0 0.0
        %885 = vmatprep.subr.mxu0 0.0
        %886 = vmatpush1.xpose.msra.mxu0 0.0
        %887 = vmatprep.subr.mxu0 0.0
        %888 = vmatpush1.xpose.msra.mxu0 0.0
        %889 = vmatprep.subr.mxu0 0.0
        %890 = vmatpush1.xpose.msra.mxu0 0.0
        %891 = vmatprep.subr.mxu0 0.0
        %892 = vmatpush1.xpose.msra.mxu0 0.0
        %893 = vmatprep.subr.mxu0 0.0
        %894 = vmatpush1.xpose.msra.mxu0 0.0
        %895 = vmatprep.subr.mxu0 0.0
        %896 = vmatpush1.xpose.msra.mxu0 0.0
        %897 = vmatprep.subr.mxu0 0.0
        %898 = vmatpush1.xpose.msra.mxu0 0.0
        %899 = vmatprep.subr.mxu0 0.0
        %900 = vmatpush1.xpose.msra.mxu0 0.0
        %901 = vmatprep.subr.mxu0 0.0
        %902 = vmatpush1.xpose.msra.mxu0 0.0
        %903 = vmatprep.subr.mxu0 0.0
        %904 = vmatpush1.xpose.msra.mxu0 0.0
        %905 = vmatprep.subr.mxu0 0.0
        %906 = vmatpush1.xpose.msra.mxu0 0.0
        %907 = vmatprep.subr.mxu0 0.0
        %908 = vmatpush1.xpose.msra.mxu0 0.0
        %909 = vmatprep.subr.mxu0 0.0
        %910 = vmatpush1.xpose.msra.mxu0 0.0
        %911 = vmatprep.subr.mxu0 0.0
        %912 = vmatpush1.xpose.msra.mxu0 0.0
        %913 = vmatprep.subr.mxu0 0.0
        %914 = vmatpush1.xpose.msra.mxu0 0.0
        %915 = vmatprep.subr.mxu0 0.0
        %916 = vmatpush1.xpose.msra.mxu0 0.0
        %917 = vmatprep.subr.mxu0 0.0
        %918 = vmatpush1.xpose.msra.mxu0 0.0
        %919 = vmatprep.subr.mxu0 0.0
        %920 = vmatpush1.xpose.msra.mxu0 0.0
        %921 = vmatprep.subr.mxu0 0.0
        %922 = vmatpush1.xpose.msra.mxu0 0.0
        %923 = vmatprep.subr.mxu0 0.0
        %924 = vmatpush1.xpose.msra.mxu0 0.0
        %925 = vmatprep.subr.mxu0 0.0
        %926 = vmatpush1.xpose.msra.mxu0 0.0
        %927 = vmatprep.subr.mxu0 0.0
        %928 = vmatpush1.xpose.msra.mxu0 0.0
        %929 = vmatprep.subr.mxu0 0.0
        %930 = vmatpush1.xpose.msra.mxu0 0.0
        %931 = vmatprep.subr.mxu0 0.0
        %932 = vmatpush1.xpose.msra.mxu0 0.0
        %933 = vmatprep.subr.mxu0 0.0
        %934 = vmatpush1.xpose.msra.mxu0 0.0
        %935 = vmatprep.mubr.f32.mxu0 0.0
        %936 = vmatmul.mubr.f32.gmra.mrb[0].mxu0 %v867
        %v937 = vpop.f32.mrb[0].mxu0
        %v938 = vadd.f32 %v695, %v937
        %v939 = vpop.f32.mrb[0].mxu0
        %940 = vdwg.mxu0
        %v941 = vsel %vm697, %v938, -inf
        %942 = vmax.xlane.f32.xlu0 %v941
        %v943 = vpop.xlane.xlu0 %942
        %v944 = vsub.f32 %v938, %v943
        %v945 = vmul.f32 %v944, 1.442695
        %v946 = vpow.pop %v945
        %v947 = vsel %vm697, %v946, 0.0
        %948 = vadd.xlane.f32.xlu0 %v947
        %v949 = vpop.xlane.xlu0 %948
        %v950 = vrcp.pop %v949
        %v951 = vmul.f32 %v946, %v950
        %s952 = scalar_lea.vmem %s506, 8 [#allocation15]
        %953 = vst.msk [vmem:[%s952] sm:$0xff] %vm697, %v951
        %954 = vrot.lane.b32.xlu0 %v690, 88
        %v955 = vpop.permute.xlu0 %954
        %v958 = vsel %vm697, %v951, 0
        %960 = vmatprep.subr.mxu0 0.0
        %961 = vmatpush1.msra.mxu0 %v955
        %962 = vmatprep.subr.mxu0 0.0
        %963 = vmatpush1.msra.mxu0 0.0
        %964 = vmatprep.subr.mxu0 0.0
        %965 = vmatpush1.msra.mxu0 0.0
        %966 = vmatprep.subr.mxu0 0.0
        %967 = vmatpush1.msra.mxu0 0.0
        %968 = vmatprep.subr.mxu0 0.0
        %969 = vmatpush1.msra.mxu0 0.0
        %970 = vmatprep.subr.mxu0 0.0
        %971 = vmatpush1.msra.mxu0 0.0
        %972 = vmatprep.subr.mxu0 0.0
        %973 = vmatpush1.msra.mxu0 0.0
        %974 = vmatprep.subr.mxu0 0.0
        %975 = vmatpush1.msra.mxu0 0.0
        %976 = vmatprep.subr.mxu0 0.0
        %977 = vmatpush1.msra.mxu0 0.0
        %978 = vmatprep.subr.mxu0 0.0
        %979 = vmatpush1.msra.mxu0 0.0
        %980 = vmatprep.subr.mxu0 0.0
        %981 = vmatpush1.msra.mxu0 0.0
        %982 = vmatprep.subr.mxu0 0.0
        %983 = vmatpush1.msra.mxu0 0.0
        %984 = vmatprep.subr.mxu0 0.0
        %985 = vmatpush1.msra.mxu0 0.0
        %986 = vmatprep.subr.mxu0 0.0
        %987 = vmatpush1.msra.mxu0 0.0
        %988 = vmatprep.subr.mxu0 0.0
        %989 = vmatpush1.msra.mxu0 0.0
        %990 = vmatprep.subr.mxu0 0.0
        %991 = vmatpush1.msra.mxu0 0.0
        %992 = vmatprep.subr.mxu0 0.0
        %993 = vmatpush1.msra.mxu0 0.0
        %994 = vmatprep.subr.mxu0 0.0
        %995 = vmatpush1.msra.mxu0 0.0
        %996 = vmatprep.subr.mxu0 0.0
        %997 = vmatpush1.msra.mxu0 0.0
        %998 = vmatprep.subr.mxu0 0.0
        %999 = vmatpush1.msra.mxu0 0.0
        %1000 = vmatprep.subr.mxu0 0.0
        %1001 = vmatpush1.msra.mxu0 0.0
        %1002 = vmatprep.subr.mxu0 0.0
        %1003 = vmatpush1.msra.mxu0 0.0
        %1004 = vmatprep.subr.mxu0 0.0
        %1005 = vmatpush1.msra.mxu0 0.0
        %1006 = vmatprep.subr.mxu0 0.0
        %1007 = vmatpush1.msra.mxu0 0.0
        %1008 = vmatprep.subr.mxu0 0.0
        %1009 = vmatpush1.msra.mxu0 0.0
        %1010 = vmatprep.subr.mxu0 0.0
        %1011 = vmatpush1.msra.mxu0 0.0
        %1012 = vmatprep.subr.mxu0 0.0
        %1013 = vmatpush1.msra.mxu0 0.0
        %1014 = vmatprep.subr.mxu0 0.0
        %1015 = vmatpush1.msra.mxu0 0.0
        %1016 = vmatprep.subr.mxu0 0.0
        %1017 = vmatpush1.msra.mxu0 0.0
        %1018 = vmatprep.subr.mxu0 0.0
        %1019 = vmatpush1.msra.mxu0 0.0
        %1020 = vmatprep.subr.mxu0 0.0
        %1021 = vmatpush1.msra.mxu0 0.0
        %1022 = vmatprep.subr.mxu0 0.0
        %1023 = vmatpush1.msra.mxu0 0.0
        %1024 = vmatprep.mubr.f32.mxu0 0.0
        %1025 = vmatmul.mubr.f32.gmra.mrb[0].mxu0 %v958
        %v1026 = vpop.f32.mrb[0].mxu0
        %v1027 = vadd.f32 0.0, %v1026
        %v1028 = vpop.f32.mrb[0].mxu0
        %1029 = vdwg.mxu0
        %1031 = vrot.lane.b32.xlu0 %v1027, 8
        %v1032 = vpop.permute.xlu0 %1031
        %vm1034 = vcmask 130112
        %1035 = vst.msk [vmem:[#allocation3] sm:$0xff] %vm1034, %v1032
        %1036 = vrot.lane.b32.xlu0 %v689, 112
        %v1037 = vpop.permute.xlu0 %1036
        %1038 = vrot.lane.b32.xlu0 %v690, 112
        %v1039 = vpop.permute.xlu0 %1038
        %v1040 = vsel %vm697, %v1037, 0
        %v1042 = vsel %vm697, %v1039, 0
        %1044 = vmatprep.subr.mxu0 0.0
        %1045 = vmatpush1.xpose.msra.mxu0 %v1042
        %1046 = vmatprep.subr.mxu0 0.0
        %1047 = vmatpush1.xpose.msra.mxu0 0.0
        %1048 = vmatprep.subr.mxu0 0.0
        %1049 = vmatpush1.xpose.msra.mxu0 0.0
        %1050 = vmatprep.subr.mxu0 0.0
        %1051 = vmatpush1.xpose.msra.mxu0 0.0
        %1052 = vmatprep.subr.mxu0 0.0
        %1053 = vmatpush1.xpose.msra.mxu0 0.0
        %1054 = vmatprep.subr.mxu0 0.0
        %1055 = vmatpush1.xpose.msra.mxu0 0.0
        %1056 = vmatprep.subr.mxu0 0.0
        %1057 = vmatpush1.xpose.msra.mxu0 0.0
        %1058 = vmatprep.subr.mxu0 0.0
        %1059 = vmatpush1.xpose.msra.mxu0 0.0
        %1060 = vmatprep.subr.mxu0 0.0
        %1061 = vmatpush1.xpose.msra.mxu0 0.0
        %1062 = vmatprep.subr.mxu0 0.0
        %1063 = vmatpush1.xpose.msra.mxu0 0.0
        %1064 = vmatprep.subr.mxu0 0.0
        %1065 = vmatpush1.xpose.msra.mxu0 0.0
        %1066 = vmatprep.subr.mxu0 0.0
        %1067 = vmatpush1.xpose.msra.mxu0 0.0
        %1068 = vmatprep.subr.mxu0 0.0
        %1069 = vmatpush1.xpose.msra.mxu0 0.0
        %1070 = vmatprep.subr.mxu0 0.0
        %1071 = vmatpush1.xpose.msra.mxu0 0.0
        %1072 = vmatprep.subr.mxu0 0.0
        %1073 = vmatpush1.xpose.msra.mxu0 0.0
        %1074 = vmatprep.subr.mxu0 0.0
        %1075 = vmatpush1.xpose.msra.mxu0 0.0
        %1076 = vmatprep.subr.mxu0 0.0
        %1077 = vmatpush1.xpose.msra.mxu0 0.0
        %1078 = vmatprep.subr.mxu0 0.0
        %1079 = vmatpush1.xpose.msra.mxu0 0.0
        %1080 = vmatprep.subr.mxu0 0.0
        %1081 = vmatpush1.xpose.msra.mxu0 0.0
        %1082 = vmatprep.subr.mxu0 0.0
        %1083 = vmatpush1.xpose.msra.mxu0 0.0
        %1084 = vmatprep.subr.mxu0 0.0
        %1085 = vmatpush1.xpose.msra.mxu0 0.0
        %1086 = vmatprep.subr.mxu0 0.0
        %1087 = vmatpush1.xpose.msra.mxu0 0.0
        %1088 = vmatprep.subr.mxu0 0.0
        %1089 = vmatpush1.xpose.msra.mxu0 0.0
        %1090 = vmatprep.subr.mxu0 0.0
        %1091 = vmatpush1.xpose.msra.mxu0 0.0
        %1092 = vmatprep.subr.mxu0 0.0
        %1093 = vmatpush1.xpose.msra.mxu0 0.0
        %1094 = vmatprep.subr.mxu0 0.0
        %1095 = vmatpush1.xpose.msra.mxu0 0.0
        %1096 = vmatprep.subr.mxu0 0.0
        %1097 = vmatpush1.xpose.msra.mxu0 0.0
        %1098 = vmatprep.subr.mxu0 0.0
        %1099 = vmatpush1.xpose.msra.mxu0 0.0
        %1100 = vmatprep.subr.mxu0 0.0
        %1101 = vmatpush1.xpose.msra.mxu0 0.0
        %1102 = vmatprep.subr.mxu0 0.0
        %1103 = vmatpush1.xpose.msra.mxu0 0.0
        %1104 = vmatprep.subr.mxu0 0.0
        %1105 = vmatpush1.xpose.msra.mxu0 0.0
        %1106 = vmatprep.subr.mxu0 0.0
        %1107 = vmatpush1.xpose.msra.mxu0 0.0
        %1108 = vmatprep.mubr.f32.mxu0 0.0
        %1109 = vmatmul.mubr.f32.gmra.mrb[0].mxu0 %v1040
        %v1110 = vpop.f32.mrb[0].mxu0
        %v1111 = vadd.f32 %v695, %v1110
        %v1112 = vpop.f32.mrb[0].mxu0
        %1113 = vdwg.mxu0
        %v1114 = vsel %vm697, %v1111, -inf
        %1115 = vmax.xlane.f32.xlu0 %v1114
        %v1116 = vpop.xlane.xlu0 %1115
        %v1117 = vsub.f32 %v1111, %v1116
        %v1118 = vmul.f32 %v1117, 1.442695
        %v1119 = vpow.pop %v1118
        %v1120 = vsel %vm697, %v1119, 0.0
        %1121 = vadd.xlane.f32.xlu0 %v1120
        %v1122 = vpop.xlane.xlu0 %1121
        %v1123 = vrcp.pop %v1122
        %v1124 = vmul.f32 %v1119, %v1123
        %s1125 = scalar_lea.vmem %s506, 16 [#allocation15]
        %1126 = vst.msk [vmem:[%s1125] sm:$0xff] %vm697, %v1124
        %1127 = vrot.lane.b32.xlu0 %v690, 80
        %v1128 = vpop.permute.xlu0 %1127
        %v1131 = vsel %vm697, %v1124, 0
        %1133 = vmatprep.subr.mxu0 0.0
        %1134 = vmatpush1.msra.mxu0 %v1128
        %1135 = vmatprep.subr.mxu0 0.0
        %1136 = vmatpush1.msra.mxu0 0.0
        %1137 = vmatprep.subr.mxu0 0.0
        %1138 = vmatpush1.msra.mxu0 0.0
        %1139 = vmatprep.subr.mxu0 0.0
        %1140 = vmatpush1.msra.mxu0 0.0
        %1141 = vmatprep.subr.mxu0 0.0
        %1142 = vmatpush1.msra.mxu0 0.0
        %1143 = vmatprep.subr.mxu0 0.0
        %1144 = vmatpush1.msra.mxu0 0.0
        %1145 = vmatprep.subr.mxu0 0.0
        %1146 = vmatpush1.msra.mxu0 0.0
        %1147 = vmatprep.subr.mxu0 0.0
        %1148 = vmatpush1.msra.mxu0 0.0
        %1149 = vmatprep.subr.mxu0 0.0
        %1150 = vmatpush1.msra.mxu0 0.0
        %1151 = vmatprep.subr.mxu0 0.0
        %1152 = vmatpush1.msra.mxu0 0.0
        %1153 = vmatprep.subr.mxu0 0.0
        %1154 = vmatpush1.msra.mxu0 0.0
        %1155 = vmatprep.subr.mxu0 0.0
        %1156 = vmatpush1.msra.mxu0 0.0
        %1157 = vmatprep.subr.mxu0 0.0
        %1158 = vmatpush1.msra.mxu0 0.0
        %1159 = vmatprep.subr.mxu0 0.0
        %1160 = vmatpush1.msra.mxu0 0.0
        %1161 = vmatprep.subr.mxu0 0.0
        %1162 = vmatpush1.msra.mxu0 0.0
        %1163 = vmatprep.subr.mxu0 0.0
        %1164 = vmatpush1.msra.mxu0 0.0
        %1165 = vmatprep.subr.mxu0 0.0
        %1166 = vmatpush1.msra.mxu0 0.0
        %1167 = vmatprep.subr.mxu0 0.0
        %1168 = vmatpush1.msra.mxu0 0.0
        %1169 = vmatprep.subr.mxu0 0.0
        %1170 = vmatpush1.msra.mxu0 0.0
        %1171 = vmatprep.subr.mxu0 0.0
        %1172 = vmatpush1.msra.mxu0 0.0
        %1173 = vmatprep.subr.mxu0 0.0
        %1174 = vmatpush1.msra.mxu0 0.0
        %1175 = vmatprep.subr.mxu0 0.0
        %1176 = vmatpush1.msra.mxu0 0.0
        %1177 = vmatprep.subr.mxu0 0.0
        %1178 = vmatpush1.msra.mxu0 0.0
        %1179 = vmatprep.subr.mxu0 0.0
        %1180 = vmatpush1.msra.mxu0 0.0
        %1181 = vmatprep.subr.mxu0 0.0
        %1182 = vmatpush1.msra.mxu0 0.0
        %1183 = vmatprep.subr.mxu0 0.0
        %1184 = vmatpush1.msra.mxu0 0.0
        %1185 = vmatprep.subr.mxu0 0.0
        %1186 = vmatpush1.msra.mxu0 0.0
        %1187 = vmatprep.subr.mxu0 0.0
        %1188 = vmatpush1.msra.mxu0 0.0
        %1189 = vmatprep.subr.mxu0 0.0
        %1190 = vmatpush1.msra.mxu0 0.0
        %1191 = vmatprep.subr.mxu0 0.0
        %1192 = vmatpush1.msra.mxu0 0.0
        %1193 = vmatprep.subr.mxu0 0.0
        %1194 = vmatpush1.msra.mxu0 0.0
        %1195 = vmatprep.subr.mxu0 0.0
        %1196 = vmatpush1.msra.mxu0 0.0
        %1197 = vmatprep.mubr.f32.mxu0 0.0
        %1198 = vmatmul.mubr.f32.gmra.mrb[0].mxu0 %v1131
        %v1199 = vpop.f32.mrb[0].mxu0
        %v1200 = vadd.f32 0.0, %v1199
        %v1201 = vpop.f32.mrb[0].mxu0
        %1202 = vdwg.mxu0
        %1204 = vrot.lane.b32.xlu0 %v1200, 16
        %v1205 = vpop.permute.xlu0 %1204
        %vm1207 = vcmask 195712
        %1208 = vst.msk [vmem:[#allocation3] sm:$0xff] %vm1207, %v1205
        %1209 = vrot.lane.b32.xlu0 %v689, 104
        %v1210 = vpop.permute.xlu0 %1209
        %1211 = vrot.lane.b32.xlu0 %v690, 104
        %v1212 = vpop.permute.xlu0 %1211
        %v1213 = vsel %vm697, %v1210, 0
        %v1215 = vsel %vm697, %v1212, 0
        %1217 = vmatprep.subr.mxu0 0.0
        %1218 = vmatpush1.xpose.msra.mxu0 %v1215
        %1219 = vmatprep.subr.mxu0 0.0
        %1220 = vmatpush1.xpose.msra.mxu0 0.0
        %1221 = vmatprep.subr.mxu0 0.0
        %1222 = vmatpush1.xpose.msra.mxu0 0.0
        %1223 = vmatprep.subr.mxu0 0.0
        %1224 = vmatpush1.xpose.msra.mxu0 0.0
        %1225 = vmatprep.subr.mxu0 0.0
        %1226 = vmatpush1.xpose.msra.mxu0 0.0
        %1227 = vmatprep.subr.mxu0 0.0
        %1228 = vmatpush1.xpose.msra.mxu0 0.0
        %1229 = vmatprep.subr.mxu0 0.0
        %1230 = vmatpush1.xpose.msra.mxu0 0.0
        %1231 = vmatprep.subr.mxu0 0.0
        %1232 = vmatpush1.xpose.msra.mxu0 0.0
        %1233 = vmatprep.subr.mxu0 0.0
        %1234 = vmatpush1.xpose.msra.mxu0 0.0
        %1235 = vmatprep.subr.mxu0 0.0
        %1236 = vmatpush1.xpose.msra.mxu0 0.0
        %1237 = vmatprep.subr.mxu0 0.0
        %1238 = vmatpush1.xpose.msra.mxu0 0.0
        %1239 = vmatprep.subr.mxu0 0.0
        %1240 = vmatpush1.xpose.msra.mxu0 0.0
        %1241 = vmatprep.subr.mxu0 0.0
        %1242 = vmatpush1.xpose.msra.mxu0 0.0
        %1243 = vmatprep.subr.mxu0 0.0
        %1244 = vmatpush1.xpose.msra.mxu0 0.0
        %1245 = vmatprep.subr.mxu0 0.0
        %1246 = vmatpush1.xpose.msra.mxu0 0.0
        %1247 = vmatprep.subr.mxu0 0.0
        %1248 = vmatpush1.xpose.msra.mxu0 0.0
        %1249 = vmatprep.subr.mxu0 0.0
        %1250 = vmatpush1.xpose.msra.mxu0 0.0
        %1251 = vmatprep.subr.mxu0 0.0
        %1252 = vmatpush1.xpose.msra.mxu0 0.0
        %1253 = vmatprep.subr.mxu0 0.0
        %1254 = vmatpush1.xpose.msra.mxu0 0.0
        %1255 = vmatprep.subr.mxu0 0.0
        %1256 = vmatpush1.xpose.msra.mxu0 0.0
        %1257 = vmatprep.subr.mxu0 0.0
        %1258 = vmatpush1.xpose.msra.mxu0 0.0
        %1259 = vmatprep.subr.mxu0 0.0
        %1260 = vmatpush1.xpose.msra.mxu0 0.0
        %1261 = vmatprep.subr.mxu0 0.0
        %1262 = vmatpush1.xpose.msra.mxu0 0.0
        %1263 = vmatprep.subr.mxu0 0.0
        %1264 = vmatpush1.xpose.msra.mxu0 0.0
        %1265 = vmatprep.subr.mxu0 0.0
        %1266 = vmatpush1.xpose.msra.mxu0 0.0
        %1267 = vmatprep.subr.mxu0 0.0
        %1268 = vmatpush1.xpose.msra.mxu0 0.0
        %1269 = vmatprep.subr.mxu0 0.0
        %1270 = vmatpush1.xpose.msra.mxu0 0.0
        %1271 = vmatprep.subr.mxu0 0.0
        %1272 = vmatpush1.xpose.msra.mxu0 0.0
        %1273 = vmatprep.subr.mxu0 0.0
        %1274 = vmatpush1.xpose.msra.mxu0 0.0
        %1275 = vmatprep.subr.mxu0 0.0
        %1276 = vmatpush1.xpose.msra.mxu0 0.0
        %1277 = vmatprep.subr.mxu0 0.0
        %1278 = vmatpush1.xpose.msra.mxu0 0.0
        %1279 = vmatprep.subr.mxu0 0.0
        %1280 = vmatpush1.xpose.msra.mxu0 0.0
        %1281 = vmatprep.mubr.f32.mxu0 0.0
        %1282 = vmatmul.mubr.f32.gmra.mrb[0].mxu0 %v1213
        %v1283 = vpop.f32.mrb[0].mxu0
        %v1284 = vadd.f32 %v695, %v1283
        %v1285 = vpop.f32.mrb[0].mxu0
        %1286 = vdwg.mxu0
        %v1287 = vsel %vm697, %v1284, -inf
        %1288 = vmax.xlane.f32.xlu0 %v1287
        %v1289 = vpop.xlane.xlu0 %1288
        %v1290 = vsub.f32 %v1284, %v1289
        %v1291 = vmul.f32 %v1290, 1.442695
        %v1292 = vpow.pop %v1291
        %v1293 = vsel %vm697, %v1292, 0.0
        %1294 = vadd.xlane.f32.xlu0 %v1293
        %v1295 = vpop.xlane.xlu0 %1294
        %v1296 = vrcp.pop %v1295
        %v1297 = vmul.f32 %v1292, %v1296
        %s1298 = scalar_lea.vmem %s506, 24 [#allocation15]
        %1299 = vst.msk [vmem:[%s1298] sm:$0xff] %vm697, %v1297
        %1300 = vrot.lane.b32.xlu0 %v690, 72
        %v1301 = vpop.permute.xlu0 %1300
        %v1304 = vsel %vm697, %v1297, 0
        %1306 = vmatprep.subr.mxu0 0.0
        %1307 = vmatpush1.msra.mxu0 %v1301
        %1308 = vmatprep.subr.mxu0 0.0
        %1309 = vmatpush1.msra.mxu0 0.0
        %1310 = vmatprep.subr.mxu0 0.0
        %1311 = vmatpush1.msra.mxu0 0.0
        %1312 = vmatprep.subr.mxu0 0.0
        %1313 = vmatpush1.msra.mxu0 0.0
        %1314 = vmatprep.subr.mxu0 0.0
        %1315 = vmatpush1.msra.mxu0 0.0
        %1316 = vmatprep.subr.mxu0 0.0
        %1317 = vmatpush1.msra.mxu0 0.0
        %1318 = vmatprep.subr.mxu0 0.0
        %1319 = vmatpush1.msra.mxu0 0.0
        %1320 = vmatprep.subr.mxu0 0.0
        %1321 = vmatpush1.msra.mxu0 0.0
        %1322 = vmatprep.subr.mxu0 0.0
        %1323 = vmatpush1.msra.mxu0 0.0
        %1324 = vmatprep.subr.mxu0 0.0
        %1325 = vmatpush1.msra.mxu0 0.0
        %1326 = vmatprep.subr.mxu0 0.0
        %1327 = vmatpush1.msra.mxu0 0.0
        %1328 = vmatprep.subr.mxu0 0.0
        %1329 = vmatpush1.msra.mxu0 0.0
        %1330 = vmatprep.subr.mxu0 0.0
        %1331 = vmatpush1.msra.mxu0 0.0
        %1332 = vmatprep.subr.mxu0 0.0
        %1333 = vmatpush1.msra.mxu0 0.0
        %1334 = vmatprep.subr.mxu0 0.0
        %1335 = vmatpush1.msra.mxu0 0.0
        %1336 = vmatprep.subr.mxu0 0.0
        %1337 = vmatpush1.msra.mxu0 0.0
        %1338 = vmatprep.subr.mxu0 0.0
        %1339 = vmatpush1.msra.mxu0 0.0
        %1340 = vmatprep.subr.mxu0 0.0
        %1341 = vmatpush1.msra.mxu0 0.0
        %1342 = vmatprep.subr.mxu0 0.0
        %1343 = vmatpush1.msra.mxu0 0.0
        %1344 = vmatprep.subr.mxu0 0.0
        %1345 = vmatpush1.msra.mxu0 0.0
        %1346 = vmatprep.subr.mxu0 0.0
        %1347 = vmatpush1.msra.mxu0 0.0
        %1348 = vmatprep.subr.mxu0 0.0
        %1349 = vmatpush1.msra.mxu0 0.0
        %1350 = vmatprep.subr.mxu0 0.0
        %1351 = vmatpush1.msra.mxu0 0.0
        %1352 = vmatprep.subr.mxu0 0.0
        %1353 = vmatpush1.msra.mxu0 0.0
        %1354 = vmatprep.subr.mxu0 0.0
        %1355 = vmatpush1.msra.mxu0 0.0
        %1356 = vmatprep.subr.mxu0 0.0
        %1357 = vmatpush1.msra.mxu0 0.0
        %1358 = vmatprep.subr.mxu0 0.0
        %1359 = vmatpush1.msra.mxu0 0.0
        %1360 = vmatprep.subr.mxu0 0.0
        %1361 = vmatpush1.msra.mxu0 0.0
        %1362 = vmatprep.subr.mxu0 0.0
        %1363 = vmatpush1.msra.mxu0 0.0
        %1364 = vmatprep.subr.mxu0 0.0
        %1365 = vmatpush1.msra.mxu0 0.0
        %1366 = vmatprep.subr.mxu0 0.0
        %1367 = vmatpush1.msra.mxu0 0.0
        %1368 = vmatprep.subr.mxu0 0.0
        %1369 = vmatpush1.msra.mxu0 0.0
        %1370 = vmatprep.mubr.f32.mxu0 0.0
        %1371 = vmatmul.mubr.f32.gmra.mrb[0].mxu0 %v1304
        %v1372 = vpop.f32.mrb[0].mxu0
        %v1373 = vadd.f32 0.0, %v1372
        %v1374 = vpop.f32.mrb[0].mxu0
        %1375 = vdwg.mxu0
        %1377 = vrot.lane.b32.xlu0 %v1373, 24
        %v1378 = vpop.permute.xlu0 %1377
        %vm1380 = vcmask 261312
        %1381 = vst.msk [vmem:[#allocation3] sm:$0xff] %vm1380, %v1378
        %v1382 = vld [vmem:[#allocation3] sm:$0xff]
        %v1383 = vld [vmem:[#allocation13] sm:$0xff]
        %v1384 = vld [vmem:[#allocation13 + $0x8] sm:$0xff]
        %v1385 = vld [vmem:[#allocation13 + $0x10] sm:$0xff]
        %v1386 = vld [vmem:[#allocation13 + $0x18] sm:$0xff]
        %v1387 = vld [vmem:[%s8] sm:$0x1]
        %v1389 = vlaneseq
        %v1390 = vshrl.u32 %v1389, 7
        %v1391 = vsub.s32 0, %v1390
        %v1392 = vrot.slane %v1387, %v1391
        %v1395 = vsel %vm615, %v1382, 0
        %1397 = vmatprep.subr.mxu0 0.0
        %1398 = vmatpush1.msra.mxu0 %v1383
        %1399 = vmatprep.subr.mxu0 0.0
        %1400 = vmatpush1.msra.mxu0 %v1384
        %1401 = vmatprep.subr.mxu0 0.0
        %1402 = vmatpush1.msra.mxu0 %v1385
        %1403 = vmatprep.subr.mxu0 0.0
        %1404 = vmatpush1.msra.mxu0 %v1386
        %1405 = vmatprep.subr.mxu0 0.0
        %1406 = vmatpush1.msra.mxu0 0.0
        %1407 = vmatprep.subr.mxu0 0.0
        %1408 = vmatpush1.msra.mxu0 0.0
        %1409 = vmatprep.subr.mxu0 0.0
        %1410 = vmatpush1.msra.mxu0 0.0
        %1411 = vmatprep.subr.mxu0 0.0
        %1412 = vmatpush1.msra.mxu0 0.0
        %1413 = vmatprep.subr.mxu0 0.0
        %1414 = vmatpush1.msra.mxu0 0.0
        %1415 = vmatprep.subr.mxu0 0.0
        %1416 = vmatpush1.msra.mxu0 0.0
        %1417 = vmatprep.subr.mxu0 0.0
        %1418 = vmatpush1.msra.mxu0 0.0
        %1419 = vmatprep.subr.mxu0 0.0
        %1420 = vmatpush1.msra.mxu0 0.0
        %1421 = vmatprep.subr.mxu0 0.0
        %1422 = vmatpush1.msra.mxu0 0.0
        %1423 = vmatprep.subr.mxu0 0.0
        %1424 = vmatpush1.msra.mxu0 0.0
        %1425 = vmatprep.subr.mxu0 0.0
        %1426 = vmatpush1.msra.mxu0 0.0
        %1427 = vmatprep.subr.mxu0 0.0
        %1428 = vmatpush1.msra.mxu0 0.0
        %1429 = vmatprep.subr.mxu0 0.0
        %1430 = vmatpush1.msra.mxu0 0.0
        %1431 = vmatprep.subr.mxu0 0.0
        %1432 = vmatpush1.msra.mxu0 0.0
        %1433 = vmatprep.subr.mxu0 0.0
        %1434 = vmatpush1.msra.mxu0 0.0
        %1435 = vmatprep.subr.mxu0 0.0
        %1436 = vmatpush1.msra.mxu0 0.0
        %1437 = vmatprep.subr.mxu0 0.0
        %1438 = vmatpush1.msra.mxu0 0.0
        %1439 = vmatprep.subr.mxu0 0.0
        %1440 = vmatpush1.msra.mxu0 0.0
        %1441 = vmatprep.subr.mxu0 0.0
        %1442 = vmatpush1.msra.mxu0 0.0
        %1443 = vmatprep.subr.mxu0 0.0
        %1444 = vmatpush1.msra.mxu0 0.0
        %1445 = vmatprep.subr.mxu0 0.0
        %1446 = vmatpush1.msra.mxu0 0.0
        %1447 = vmatprep.subr.mxu0 0.0
        %1448 = vmatpush1.msra.mxu0 0.0
        %1449 = vmatprep.subr.mxu0 0.0
        %1450 = vmatpush1.msra.mxu0 0.0
        %1451 = vmatprep.subr.mxu0 0.0
        %1452 = vmatpush1.msra.mxu0 0.0
        %1453 = vmatprep.subr.mxu0 0.0
        %1454 = vmatpush1.msra.mxu0 0.0
        %1455 = vmatprep.subr.mxu0 0.0
        %1456 = vmatpush1.msra.mxu0 0.0
        %1457 = vmatprep.subr.mxu0 0.0
        %1458 = vmatpush1.msra.mxu0 0.0
        %1459 = vmatprep.subr.mxu0 0.0
        %1460 = vmatpush1.msra.mxu0 0.0
        %1461 = vmatprep.mubr.f32.mxu0 0.0
        %1462 = vmatmul.mubr.f32.gmra.mrb[0].mxu0 %v1395
        %v1463 = vpop.f32.mrb[0].mxu0
        %v1464 = vadd.f32 %v1392, %v1463
        %v1465 = vpop.f32.mrb[0].mxu0
        %1466 = vdwg.mxu0
        %s1467 = sld [smem:[#allocation4]]
        %v1468 = vstv %s1467
        %v1469 = vmul.f32 %v1464, %v1468
        %1470 = vst.msk [vmem:[%s499] sm:$0xff] %vm615, %v1469
        %s1471 = sand.u32 %s284, 1
        %s1472 = scalar_lea.sflag [#allocation7], %s1471
        %s1473 = sand.u32 %s284, 1
        %s1474 = smul.addr %s1473, 8
        %s1475 = scalar_lea.vmem [#allocation14], %s1474
        %s1476 = sand.u32 %s312, 1
        %s1477 = scalar_lea.sflag [#allocation16], %s1476
        %s1478 = sand.u32 %s312, 1
        %s1479 = smul.addr %s1478, 32
        %s1480 = scalar_lea.vmem [#allocation15], %s1479
        // Predicated region
        $region85: #{tpu_custom_call.1} parent=59 // pred_check
          %p1481 = pneg %p294
        $region86: #{tpu_custom_call.1} parent=59 // pred_check_branch
          %1483 = sbr.rel (%p1481) target = $region88
        $region87: #{tpu_custom_call.1} parent=59 // pred_region
          %s1485 = ssub.s32 128, 128
          %1486 = vsyncadd %s1472, %s1485
          %s1487 = sadd.s32 %s40, %s39
          %s1488 = smul.addr %s1487, 128
          %s1489 = scalar_lea.hbm %s10, %s1488
          %s1491 = sshll.u32 %s1475, 4
          %s1492 = int_to_ptr.vmem [resolvable:$true] %s1491
          %1494 = dma.vmem_to_hbm [thread:$0]  %s1492, 128, %s1489, %s1472
        $region88: #{tpu_custom_call.1} parent=59 // pred_fallthru
          _
        // Predicated region
        $region89: #{tpu_custom_call.1} parent=59 // pred_check
          %p1495 = pneg %p322
        $region90: #{tpu_custom_call.1} parent=59 // pred_check_branch
          %1497 = sbr.rel (%p1495) target = $region92
        $region91: #{tpu_custom_call.1} parent=59 // pred_region
          %s1499 = ssub.s32 512, 512
          %1500 = vsyncadd %s1477, %s1499
          %s1501 = smul.addr %s39, 4
          %s1502 = sadd.s32 %s40, %s1501
          %s1503 = smul.addr %s1502, 128
          %s1504 = scalar_lea.hbm %s11, %s1503
          %s1505 = sshll.u32 %s1480, 4
          %s1506 = int_to_ptr.vmem [resolvable:$true] %s1505
          %1511 = dma.vmem_to_hbm [thread:$0]  %s1506, 512, %s1504, %s1477, 128, 128, 8
        $region92: #{tpu_custom_call.1} parent=59 // pred_fallthru
          _
      $region60: #{tpu_custom_call.1} parent=5 // pred_fallthru
        _
      %p1512 = scmp.le.s32.totalorder 2, %s30
      // Predicated region
      $region93: #{tpu_custom_call.1} parent=5 // pred_check
        %p1513 = pneg %p1512
      $region94: #{tpu_custom_call.1} parent=5 // pred_check_branch
        %1515 = sbr.rel (%p1513) target = $region96
      $region95: #{tpu_custom_call.1} parent=5 // pred_region
        %s1516 = ssub.s32 %s30, 2
        // Predicated region
        $region97: #{tpu_custom_call.1} parent=95 // pred_check
          %p1517 = pneg %p300
        $region98: #{tpu_custom_call.1} parent=95 // pred_check_branch
          %1519 = sbr.rel (%p1517) target = $region100
        $region99: #{tpu_custom_call.1} parent=95 // pred_region
          %s1520 = sand.u32 %s285, 1
          %s1521 = scalar_lea.sflag [#allocation7], %s1520
          %s1522 = sand.u32 %s285, 1
          %s1523 = smul.addr %s1522, 8
          %s1524 = scalar_lea.vmem [#allocation14], %s1523
          %1525 = dma.done %s1521, 128
        $region100: #{tpu_custom_call.1} parent=95 // pred_fallthru
          _
        // Predicated region
        $region101: #{tpu_custom_call.1} parent=95 // pred_check
          %p1526 = pneg %p328
        $region102: #{tpu_custom_call.1} parent=95 // pred_check_branch
          %1528 = sbr.rel (%p1526) target = $region104
        $region103: #{tpu_custom_call.1} parent=95 // pred_region
          %s1529 = sand.u32 %s313, 1
          %s1530 = scalar_lea.sflag [#allocation16], %s1529
          %s1531 = sand.u32 %s313, 1
          %s1532 = smul.addr %s1531, 32
          %s1533 = scalar_lea.vmem [#allocation15], %s1532
          %1534 = dma.done %s1530, 512
        $region104: #{tpu_custom_call.1} parent=95 // pred_fallthru
          _
      $region96: #{tpu_custom_call.1} parent=5 // pred_fallthru
        _
    $region6: #{tpu_custom_call.1} parent=1 // loop_footer
      %s34 = sadd.s32 1, %s30
    $region7: #{tpu_custom_call.1} parent=1 // loop_footer_branch
      %29 = sbr.rel target = $region3
    $region8: #{tpu_custom_call.1} parent=1 // loop_exit
      _
    %1535 = vsyncpa [#allocation6], 1
    %s1536 = scalar_lea.sflag [#allocation6], 1
    %1537 = vsyncpa %s1536, 1
    %1538 = vsyncpa [#allocation9], 1
    %1539 = vsyncpa [#allocation12], 1
    %1540 = vsyncpa [#allocation7], 1
    %s1541 = scalar_lea.sflag [#allocation7], 1
    %1542 = vsyncpa %s1541, 1
    %1543 = vsyncpa [#allocation16], 1
    %s1544 = scalar_lea.sflag [#allocation16], 1
    %1545 = vsyncpa %s1544, 1

// kernel: tpu_custom_call.1
$region0: #{tpu_custom_call.1}
  #allocation0 [shape = 'u32[]', space=smem, size = 0x4, offset = 0x4, fixed_abs, tag = 'smem constant byte address 0x4 - core index']
  #allocation1 [shape = 'u32[144,128]{1,0:T(1,128)}', space=vmem, size = 0x12000, scoped, tag = 'internal scratch']
  #allocation2 [shape = 'f32[8,64]{1,0:T(8,128)}', space=vmem, size = 0x1000, scoped, tag = 'scratch operand']
  #allocation3 [shape = 'f32[8,32]{1,0:T(8,128)}', space=vmem, size = 0x1000, scoped, tag = 'scratch operand']
  #allocation4 [shape = 'f32[1,1]{1,0:T(1,128)S(6)}', space=smem, size = 0x200, scoped, tag = 'scoped memory for tpu_custom_call.1']
  %s0 = inlined_call_operand.hbm [shape: f32[2,8,32], index: 0, kind: input, shape index: {}]
  %s1 = inlined_call_operand.hbm [shape: f32[2,8,32], index: 1, kind: input, shape index: {}]
  %s2 = inlined_call_operand.vmem [shape: f32[2,1,1,8], index: 2, kind: input, shape index: {}]
  %s3 = inlined_call_operand.hbm [shape: f32[32,32], index: 3, kind: input, shape index: {}]
  %s4 = inlined_call_operand.vmem [shape: f32[1,32], index: 4, kind: input, shape index: {}]
  %s5 = inlined_call_operand.hbm [shape: f32[32,64], index: 5, kind: input, shape index: {}]
  %s6 = inlined_call_operand.vmem [shape: f32[1,64], index: 6, kind: input, shape index: {}]
  %s7 = inlined_call_operand.hbm [shape: f32[32,32], index: 7, kind: input, shape index: {}]
  %s8 = inlined_call_operand.vmem [shape: f32[1,32], index: 8, kind: input, shape index: {}]
  %s9 = inlined_call_operand.<no memory space> [shape: f32[1,1], index: 9, kind: input, shape index: {}]
  %s10 = inlined_call_operand.hbm [shape: f32[2,8,32], index: 10, kind: output, shape index: {0}]
  %s11 = inlined_call_operand.hbm [shape: f32[2,4,8,8], index: 11, kind: output, shape index: {1}]
  %12 = xla_tuple %s10, %s11
  %s13 = sld [smem:[#allocation0]]
  $region105: #{tpu_custom_call.1} parent=0
    _
  %s15 = ssub.s32 1, %s13
  %s16 = scalar_select 0, %s15, %s13
  %17 = sst [smem:[#allocation4]] %s9
  $region1: #{tpu_custom_call.1} parent=0
    #allocation5 [shape = 'u8[8192]{0}', space=vmem, size = 0x2000, scoped, tag = 'input window, operand 0']
    #allocation6 [shape = 's32[2]{0}', space=sflag, size = 0x8, scoped, tag = 'scoped memory for tpu_custom_call.1']
    #allocation7 [shape = 's32[2]{0}', space=sflag, size = 0x8, scoped, tag = 'scoped memory for tpu_custom_call.1']
    #allocation8 [shape = 'u8[8192]{0}', space=vmem, size = 0x2000, scoped, tag = 'input window, operand 1']
    #allocation9 [shape = 's32[2]{0}', space=sflag, size = 0x8, scoped, tag = 'scoped memory for tpu_custom_call.1']
    #allocation10 [shape = 'u8[16384]{0}', space=vmem, size = 0x4000, scoped, tag = 'input window, operand 3, single buffered']
    #allocation11 [shape = 'u8[16384]{0}', space=vmem, size = 0x4000, scoped, tag = 'input window, operand 5, single buffered']
    #allocation12 [shape = 's32[1]{0}', space=sflag, size = 0x4, scoped, tag = 'scoped memory for tpu_custom_call.1']
    #allocation13 [shape = 'u8[16384]{0}', space=vmem, size = 0x4000, scoped, tag = 'input window, operand 7, single buffered']
    #allocation14 [shape = 'u8[8192]{0}', space=vmem, size = 0x2000, scoped, tag = 'output window, operand 0']
    #allocation15 [shape = 'u8[32768]{0}', space=vmem, size = 0x8000, scoped, tag = 'output window, operand 1']
    #allocation16 [shape = 's32[2]{0}', space=sflag, size = 0x8, scoped, tag = 'scoped memory for tpu_custom_call.1']
    %18 = vsyncpa [#allocation6], 0
    %s19 = scalar_lea.sflag [#allocation6], 1
    %20 = vsyncpa %s19, 0
    %21 = vsyncpa [#allocation9], 0
    %s22 = scalar_lea.sflag [#allocation9], 1
    %23 = vsyncpa %s22, 0
    %24 = vsyncpa [#allocation12], 0
    %25 = vsyncpa [#allocation7], 0
    %s26 = scalar_lea.sflag [#allocation7], 1
    %27 = vsyncpa %s26, 0
    %28 = vsyncpa [#allocation16], 0
    %s29 = scalar_lea.sflag [#allocation16], 1
    %30 = vsyncpa %s29, 0
    loop: start=0, step=1, limit=4
    $region2: #{tpu_custom_call.1} parent=1 // loop_pre_header
      _
    $region3: #{tpu_custom_call.1} parent=1 // loop_header
      %s32 = sphi 0, %s36
      %p33 = scmp.ge.s32.totalorder %s32, 4
      %s39 = sphi 0, %s51
      %s40 = sphi 0, %s47
      %s41 = sphi 0, %s39
      %s42 = sphi 0, %s40
      %s43 = sphi 0, %s41
      %s44 = sphi 0, %s42
      %s56 = sphi 0, %s58
      %s59 = sphi 0, %s56
      %s60 = sphi 0, %s59
      %s76 = sphi 0, %s60
      %s82 = sphi 0, %s84
      %s85 = sphi 0, %s82
      %s86 = sphi 0, %s85
      %s102 = sphi 0, %s86
      %s108 = sphi 0, %s110
      %s111 = sphi 0, %s108
      %s112 = sphi 0, %s111
      %s128 = sphi 0, %s112
      %s132 = sphi 0, %s132
      %s134 = sphi 0, %s132
      %s135 = sphi 0, %s134
      %s149 = sphi 0, %s135
      %s153 = sphi 0, %s153
      %s155 = sphi 0, %s153
      %s156 = sphi 0, %s155
      %s170 = sphi 0, %s156
      %s174 = sphi 0, %s174
      %s176 = sphi 0, %s174
      %s177 = sphi 0, %s176
      %s191 = sphi 0, %s177
      %s195 = sphi 0, %s195
      %s197 = sphi 0, %s195
      %s198 = sphi 0, %s197
      %s212 = sphi 0, %s198
      %s216 = sphi 0, %s216
      %s218 = sphi 0, %s216
      %s219 = sphi 0, %s218
      %s233 = sphi 0, %s219
      %s237 = sphi 0, %s237
      %s239 = sphi 0, %s237
      %s240 = sphi 0, %s239
      %s254 = sphi 0, %s240
      %s258 = sphi 0, %s258
      %s260 = sphi 0, %s258
      %s261 = sphi 0, %s260
      %s275 = sphi 0, %s261
      %s283 = sphi 0, %s285
      %s286 = sphi 0, %s283
      %s287 = sphi 0, %s286
      %s303 = sphi 0, %s287
      %s311 = sphi 0, %s313
      %s314 = sphi 0, %s311
      %s315 = sphi 0, %s314
      %s331 = sphi 0, %s315
    $region4: #{tpu_custom_call.1} parent=1 // loop_header_branch
      %35 = sbr.rel (%p33) target = $region8
    $region5: #{tpu_custom_call.1} parent=1 // loop_body
      %s37 = ssub.s32 %s32, 1
      %s38 = ssub.s32 %s32, 2
      %s45 = sadd.s32 1, %s40
      %p46 = scmp.ge.s32.totalorder %s45, 1
      %s47 = scalar_select %p46, 0, %s45
      %s48 = sadd.s32 1, %s39
      %s49 = scalar_select %p46, %s48, %s39
      %p50 = scmp.ge.s32.totalorder %s49, 2
      %s51 = scalar_select %p50, 0, %s49
      %s52 = ssub.s32 %s39, %s51
      %s53 = ssub.s32 %s40, %s47
      %s54 = sor.u32 %s52, %s53
      %p55 = scmp.eq.s32.totalorder %s54, 0
      %s57 = sadd.s32 %s56, 1
      %s58 = scalar_select %p55, %s56, %s57
      %p61 = pneg %p55
      %p62 = scmp.eq.s32.totalorder %s32, 1
      %p63 = por %p61, %p62
      %p64 = scmp.ne.s32.totalorder %s56, %s59
      %p65 = scmp.eq.s32.totalorder %s32, 0
      %p66 = por %p64, %p65
      %p67 = scmp.ne.s32.totalorder %s56, %s59
      %p68 = scmp.eq.s32.totalorder %s37, 1
      %p69 = por %p67, %p68
      %p70 = scmp.ne.s32.totalorder %s59, %s60
      %p71 = scmp.eq.s32.totalorder %s37, 0
      %p72 = por %p70, %p71
      %p73 = scmp.ne.s32.totalorder %s59, %s60
      %p74 = scmp.eq.s32.totalorder %s38, 1
      %p75 = por %p73, %p74
      %p77 = scmp.ne.s32.totalorder %s60, %s76
      %p78 = scmp.eq.s32.totalorder %s38, 0
      %p79 = por %p77, %p78
      %s80 = ssub.s32 %s39, %s51
      %p81 = scmp.eq.s32.totalorder %s80, 0
      %s83 = sadd.s32 %s82, 1
      %s84 = scalar_select %p81, %s82, %s83
      %p87 = pneg %p81
      %p88 = scmp.eq.s32.totalorder %s32, 1
      %p89 = por %p87, %p88
      %p90 = scmp.ne.s32.totalorder %s82, %s85
      %p91 = scmp.eq.s32.totalorder %s32, 0
      %p92 = por %p90, %p91
      %p93 = scmp.ne.s32.totalorder %s82, %s85
      %p94 = scmp.eq.s32.totalorder %s37, 1
      %p95 = por %p93, %p94
      %p96 = scmp.ne.s32.totalorder %s85, %s86
      %p97 = scmp.eq.s32.totalorder %s37, 0
      %p98 = por %p96, %p97
      %p99 = scmp.ne.s32.totalorder %s85, %s86
      %p100 = scmp.eq.s32.totalorder %s38, 1
      %p101 = por %p99, %p100
      %p103 = scmp.ne.s32.totalorder %s86, %s102
      %p104 = scmp.eq.s32.totalorder %s38, 0
      %p105 = por %p103, %p104
      %s106 = ssub.s32 %s39, %s51
      %p107 = scmp.eq.s32.totalorder %s106, 0
      %s109 = sadd.s32 %s108, 1
      %s110 = scalar_select %p107, %s108, %s109
      %p113 = pneg %p107
      %p114 = scmp.eq.s32.totalorder %s32, 1
      %p115 = por %p113, %p114
      %p116 = scmp.ne.s32.totalorder %s108, %s111
      %p117 = scmp.eq.s32.totalorder %s32, 0
      %p118 = por %p116, %p117
      %p119 = scmp.ne.s32.totalorder %s108, %s111
      %p120 = scmp.eq.s32.totalorder %s37, 1
      %p121 = por %p119, %p120
      %p122 = scmp.ne.s32.totalorder %s111, %s112
      %p123 = scmp.eq.s32.totalorder %s37, 0
      %p124 = por %p122, %p123
      %p125 = scmp.ne.s32.totalorder %s111, %s112
      %p126 = scmp.eq.s32.totalorder %s38, 1
      %p127 = por %p125, %p126
      %p129 = scmp.ne.s32.totalorder %s112, %s128
      %p130 = scmp.eq.s32.totalorder %s38, 0
      %p131 = por %p129, %p130
      %s133 = sadd.s32 %s132, 1
      %p136 = scmp.eq.s32.totalorder %s32, 1
      %p137 = scmp.ne.s32.totalorder %s132, %s134
      %p138 = scmp.eq.s32.totalorder %s32, 0
      %p139 = por %p137, %p138
      %p140 = scmp.ne.s32.totalorder %s132, %s134
      %p141 = scmp.eq.s32.totalorder %s37, 1
      %p142 = por %p140, %p141
      %p143 = scmp.ne.s32.totalorder %s134, %s135
      %p144 = scmp.eq.s32.totalorder %s37, 0
      %p145 = por %p143, %p144
      %p146 = scmp.ne.s32.totalorder %s134, %s135
      %p147 = scmp.eq.s32.totalorder %s38, 1
      %p148 = por %p146, %p147
      %p150 = scmp.ne.s32.totalorder %s135, %s149
      %p151 = scmp.eq.s32.totalorder %s38, 0
      %p152 = por %p150, %p151
      %s154 = sadd.s32 %s153, 1
      %p157 = scmp.eq.s32.totalorder %s32, 1
      %p158 = scmp.ne.s32.totalorder %s153, %s155
      %p159 = scmp.eq.s32.totalorder %s32, 0
      %p160 = por %p158, %p159
      %p161 = scmp.ne.s32.totalorder %s153, %s155
      %p162 = scmp.eq.s32.totalorder %s37, 1
      %p163 = por %p161, %p162
      %p164 = scmp.ne.s32.totalorder %s155, %s156
      %p165 = scmp.eq.s32.totalorder %s37, 0
      %p166 = por %p164, %p165
      %p167 = scmp.ne.s32.totalorder %s155, %s156
      %p168 = scmp.eq.s32.totalorder %s38, 1
      %p169 = por %p167, %p168
      %p171 = scmp.ne.s32.totalorder %s156, %s170
      %p172 = scmp.eq.s32.totalorder %s38, 0
      %p173 = por %p171, %p172
      %s175 = sadd.s32 %s174, 1
      %p178 = scmp.eq.s32.totalorder %s32, 1
      %p179 = scmp.ne.s32.totalorder %s174, %s176
      %p180 = scmp.eq.s32.totalorder %s32, 0
      %p181 = por %p179, %p180
      %p182 = scmp.ne.s32.totalorder %s174, %s176
      %p183 = scmp.eq.s32.totalorder %s37, 1
      %p184 = por %p182, %p183
      %p185 = scmp.ne.s32.totalorder %s176, %s177
      %p186 = scmp.eq.s32.totalorder %s37, 0
      %p187 = por %p185, %p186
      %p188 = scmp.ne.s32.totalorder %s176, %s177
      %p189 = scmp.eq.s32.totalorder %s38, 1
      %p190 = por %p188, %p189
      %p192 = scmp.ne.s32.totalorder %s177, %s191
      %p193 = scmp.eq.s32.totalorder %s38, 0
      %p194 = por %p192, %p193
      %s196 = sadd.s32 %s195, 1
      %p199 = scmp.eq.s32.totalorder %s32, 1
      %p200 = scmp.ne.s32.totalorder %s195, %s197
      %p201 = scmp.eq.s32.totalorder %s32, 0
      %p202 = por %p200, %p201
      %p203 = scmp.ne.s32.totalorder %s195, %s197
      %p204 = scmp.eq.s32.totalorder %s37, 1
      %p205 = por %p203, %p204
      %p206 = scmp.ne.s32.totalorder %s197, %s198
      %p207 = scmp.eq.s32.totalorder %s37, 0
      %p208 = por %p206, %p207
      %p209 = scmp.ne.s32.totalorder %s197, %s198
      %p210 = scmp.eq.s32.totalorder %s38, 1
      %p211 = por %p209, %p210
      %p213 = scmp.ne.s32.totalorder %s198, %s212
      %p214 = scmp.eq.s32.totalorder %s38, 0
      %p215 = por %p213, %p214
      %s217 = sadd.s32 %s216, 1
      %p220 = scmp.eq.s32.totalorder %s32, 1
      %p221 = scmp.ne.s32.totalorder %s216, %s218
      %p222 = scmp.eq.s32.totalorder %s32, 0
      %p223 = por %p221, %p222
      %p224 = scmp.ne.s32.totalorder %s216, %s218
      %p225 = scmp.eq.s32.totalorder %s37, 1
      %p226 = por %p224, %p225
      %p227 = scmp.ne.s32.totalorder %s218, %s219
      %p228 = scmp.eq.s32.totalorder %s37, 0
      %p229 = por %p227, %p228
      %p230 = scmp.ne.s32.totalorder %s218, %s219
      %p231 = scmp.eq.s32.totalorder %s38, 1
      %p232 = por %p230, %p231
      %p234 = scmp.ne.s32.totalorder %s219, %s233
      %p235 = scmp.eq.s32.totalorder %s38, 0
      %p236 = por %p234, %p235
      %s238 = sadd.s32 %s237, 1
      %p241 = scmp.eq.s32.totalorder %s32, 1
      %p242 = scmp.ne.s32.totalorder %s237, %s239
      %p243 = scmp.eq.s32.totalorder %s32, 0
      %p244 = por %p242, %p243
      %p245 = scmp.ne.s32.totalorder %s237, %s239
      %p246 = scmp.eq.s32.totalorder %s37, 1
      %p247 = por %p245, %p246
      %p248 = scmp.ne.s32.totalorder %s239, %s240
      %p249 = scmp.eq.s32.totalorder %s37, 0
      %p250 = por %p248, %p249
      %p251 = scmp.ne.s32.totalorder %s239, %s240
      %p252 = scmp.eq.s32.totalorder %s38, 1
      %p253 = por %p251, %p252
      %p255 = scmp.ne.s32.totalorder %s240, %s254
      %p256 = scmp.eq.s32.totalorder %s38, 0
      %p257 = por %p255, %p256
      %s259 = sadd.s32 %s258, 1
      %p262 = scmp.eq.s32.totalorder %s32, 1
      %p263 = scmp.ne.s32.totalorder %s258, %s260
      %p264 = scmp.eq.s32.totalorder %s32, 0
      %p265 = por %p263, %p264
      %p266 = scmp.ne.s32.totalorder %s258, %s260
      %p267 = scmp.eq.s32.totalorder %s37, 1
      %p268 = por %p266, %p267
      %p269 = scmp.ne.s32.totalorder %s260, %s261
      %p270 = scmp.eq.s32.totalorder %s37, 0
      %p271 = por %p269, %p270
      %p272 = scmp.ne.s32.totalorder %s260, %s261
      %p273 = scmp.eq.s32.totalorder %s38, 1
      %p274 = por %p272, %p273
      %p276 = scmp.ne.s32.totalorder %s261, %s275
      %p277 = scmp.eq.s32.totalorder %s38, 0
      %p278 = por %p276, %p277
      %s279 = ssub.s32 %s39, %s51
      %s280 = ssub.s32 %s40, %s47
      %s281 = sor.u32 %s279, %s280
      %p282 = scmp.eq.s32.totalorder %s281, 0
      %s284 = sadd.s32 %s283, 1
      %s285 = scalar_select %p282, %s283, %s284
      %p288 = pneg %p282
      %p289 = scmp.eq.s32.totalorder %s32, 1
      %p290 = por %p288, %p289
      %p291 = scmp.ne.s32.totalorder %s283, %s286
      %p292 = scmp.eq.s32.totalorder %s32, 0
      %p293 = por %p291, %p292
      %p294 = scmp.ne.s32.totalorder %s283, %s286
      %p295 = scmp.eq.s32.totalorder %s37, 1
      %p296 = por %p294, %p295
      %p297 = scmp.ne.s32.totalorder %s286, %s287
      %p298 = scmp.eq.s32.totalorder %s37, 0
      %p299 = por %p297, %p298
      %p300 = scmp.ne.s32.totalorder %s286, %s287
      %p301 = scmp.eq.s32.totalorder %s38, 1
      %p302 = por %p300, %p301
      %p304 = scmp.ne.s32.totalorder %s287, %s303
      %p305 = scmp.eq.s32.totalorder %s38, 0
      %p306 = por %p304, %p305
      %s307 = ssub.s32 %s39, %s51
      %s308 = ssub.s32 %s40, %s47
      %s309 = sor.u32 %s307, %s308
      %p310 = scmp.eq.s32.totalorder %s309, 0
      %s312 = sadd.s32 %s311, 1
      %s313 = scalar_select %p310, %s311, %s312
      %p316 = pneg %p310
      %p317 = scmp.eq.s32.totalorder %s32, 1
      %p318 = por %p316, %p317
      %p319 = scmp.ne.s32.totalorder %s311, %s314
      %p320 = scmp.eq.s32.totalorder %s32, 0
      %p321 = por %p319, %p320
      %p322 = scmp.ne.s32.totalorder %s311, %s314
      %p323 = scmp.eq.s32.totalorder %s37, 1
      %p324 = por %p322, %p323
      %p325 = scmp.ne.s32.totalorder %s314, %s315
      %p326 = scmp.eq.s32.totalorder %s37, 0
      %p327 = por %p325, %p326
      %p328 = scmp.ne.s32.totalorder %s314, %s315
      %p329 = scmp.eq.s32.totalorder %s38, 1
      %p330 = por %p328, %p329
      %p332 = scmp.ne.s32.totalorder %s315, %s331
      %p333 = scmp.eq.s32.totalorder %s38, 0
      %p334 = por %p332, %p333
      %p335 = scmp.le.s32.totalorder 1, %s32
      %p336 = scmp.lt.s32.totalorder %s32, 3
      %p337 = pnand %p335, %p336
      %p338 = pneg %p337
      // Predicated region
      $region9: #{tpu_custom_call.1} parent=5 // pred_check
        _
      $region10: #{tpu_custom_call.1} parent=5 // pred_check_branch
        %340 = sbr.rel (%p337) target = $region12
      $region11: #{tpu_custom_call.1} parent=5 // pred_region
        %s341 = ssub.s32 %s32, 1
        // Predicated region
        $region13: #{tpu_custom_call.1} parent=11 // pred_check
          %p342 = pneg %p145
        $region14: #{tpu_custom_call.1} parent=11 // pred_check_branch
          %344 = sbr.rel (%p342) target = $region16
        $region15: #{tpu_custom_call.1} parent=11 // pred_region
          %s346 = ssub.s32 512, 512
          %347 = vsyncadd [#allocation9], %s346
          %s348 = sshll.u32 [#allocation10], 4
          %s349 = int_to_ptr.vmem [resolvable:$true] %s348
          %354 = dma.hbm_to_vmem [thread:$0]  %s3, 512, %s349, [#allocation9], 128, 128, 8
        $region16: #{tpu_custom_call.1} parent=11 // pred_fallthru
          _
        // Predicated region
        $region17: #{tpu_custom_call.1} parent=11 // pred_check
          %p355 = pneg %p166
        $region18: #{tpu_custom_call.1} parent=11 // pred_check_branch
          %357 = sbr.rel (%p355) target = $region20
        $region19: #{tpu_custom_call.1} parent=11 // pred_region
          _
        $region20: #{tpu_custom_call.1} parent=11 // pred_fallthru
          _
        // Predicated region
        $region21: #{tpu_custom_call.1} parent=11 // pred_check
          %p358 = pneg %p187
        $region22: #{tpu_custom_call.1} parent=11 // pred_check_branch
          %360 = sbr.rel (%p358) target = $region24
        $region23: #{tpu_custom_call.1} parent=11 // pred_region
          %s362 = ssub.s32 512, 512
          %363 = vsyncadd [#allocation12], %s362
          %s364 = sshll.u32 [#allocation11], 4
          %s365 = int_to_ptr.vmem [resolvable:$true] %s364
          %370 = dma.hbm_to_vmem [thread:$0]  %s5, 512, %s365, [#allocation12], 128, 128, 8
        $region24: #{tpu_custom_call.1} parent=11 // pred_fallthru
          _
        // Predicated region
        $region25: #{tpu_custom_call.1} parent=11 // pred_check
          %p371 = pneg %p208
        $region26: #{tpu_custom_call.1} parent=11 // pred_check_branch
          %373 = sbr.rel (%p371) target = $region28
        $region27: #{tpu_custom_call.1} parent=11 // pred_region
          _
        $region28: #{tpu_custom_call.1} parent=11 // pred_fallthru
          _
        // Predicated region
        $region29: #{tpu_custom_call.1} parent=11 // pred_check
          %p374 = pneg %p229
        $region30: #{tpu_custom_call.1} parent=11 // pred_check_branch
          %376 = sbr.rel (%p374) target = $region32
        $region31: #{tpu_custom_call.1} parent=11 // pred_region
          %s378 = ssub.s32 512, 512
          %379 = vsyncadd [#allocation12], %s378
          %s380 = sshll.u32 [#allocation13], 4
          %s381 = int_to_ptr.vmem [resolvable:$true] %s380
          %386 = dma.hbm_to_vmem [thread:$0]  %s7, 512, %s381, [#allocation12], 128, 128, 8
        $region32: #{tpu_custom_call.1} parent=11 // pred_fallthru
          _
        // Predicated region
        $region33: #{tpu_custom_call.1} parent=11 // pred_check
          %p387 = pneg %p250
        $region34: #{tpu_custom_call.1} parent=11 // pred_check_branch
          %389 = sbr.rel (%p387) target = $region36
        $region35: #{tpu_custom_call.1} parent=11 // pred_region
          _
        $region36: #{tpu_custom_call.1} parent=11 // pred_fallthru
          _
        // Predicated region
        $region37: #{tpu_custom_call.1} parent=11 // pred_check
          %p390 = pneg %p271
        $region38: #{tpu_custom_call.1} parent=11 // pred_check_branch
          %392 = sbr.rel (%p390) target = $region40
        $region39: #{tpu_custom_call.1} parent=11 // pred_region
          _
        $region40: #{tpu_custom_call.1} parent=11 // pred_fallthru
          _
      $region12: #{tpu_custom_call.1} parent=5 // pred_fallthru
        _
      %p393 = scmp.lt.s32.totalorder %s32, 2
      // Predicated region
      $region41: #{tpu_custom_call.1} parent=5 // pred_check
        %p394 = pneg %p393
      $region42: #{tpu_custom_call.1} parent=5 // pred_check_branch
        %396 = sbr.rel (%p394) target = $region44
      $region43: #{tpu_custom_call.1} parent=5 // pred_region
        // Predicated region
        $region45: #{tpu_custom_call.1} parent=43 // pred_check
          %p397 = pneg %p66
        $region46: #{tpu_custom_call.1} parent=43 // pred_check_branch
          %399 = sbr.rel (%p397) target = $region48
        $region47: #{tpu_custom_call.1} parent=43 // pred_region
          %s400 = sand.u32 %s56, 1
          %s401 = scalar_lea.sflag [#allocation6], %s400
          %s402 = sand.u32 %s56, 1
          %s403 = smul.addr %s402, 8
          %s404 = scalar_lea.vmem [#allocation5], %s403
          %s406 = ssub.s32 128, 128
          %407 = vsyncadd %s401, %s406
          %s408 = sadd.s32 %s40, %s39
          %s409 = smul.addr %s408, 128
          %s410 = scalar_lea.hbm %s0, %s409
          %s412 = sshll.u32 %s404, 4
          %s413 = int_to_ptr.vmem [resolvable:$true] %s412
          %415 = dma.hbm_to_vmem [thread:$0]  %s410, 128, %s413, %s401
        $region48: #{tpu_custom_call.1} parent=43 // pred_fallthru
          _
        // Predicated region
        $region49: #{tpu_custom_call.1} parent=43 // pred_check
          %p416 = pneg %p92
        $region50: #{tpu_custom_call.1} parent=43 // pred_check_branch
          %418 = sbr.rel (%p416) target = $region52
        $region51: #{tpu_custom_call.1} parent=43 // pred_region
          %s419 = sand.u32 %s32, 1
          %s420 = scalar_lea.sflag [#allocation9], %s419
          %s421 = sand.u32 %s82, 1
          %s422 = smul.addr %s421, 8
          %s423 = scalar_lea.vmem [#allocation8], %s422
          %s425 = ssub.s32 128, 128
          %426 = vsyncadd %s420, %s425
          %s427 = smul.addr %s39, 128
          %s428 = scalar_lea.hbm %s1, %s427
          %s430 = sshll.u32 %s423, 4
          %s431 = int_to_ptr.vmem [resolvable:$true] %s430
          %433 = dma.hbm_to_vmem [thread:$0]  %s428, 128, %s431, %s420
        $region52: #{tpu_custom_call.1} parent=43 // pred_fallthru
          _
        // Predicated region
        $region53: #{tpu_custom_call.1} parent=43 // pred_check
          %p434 = pneg %p118
        $region54: #{tpu_custom_call.1} parent=43 // pred_check_branch
          %436 = sbr.rel (%p434) target = $region56
        $region55: #{tpu_custom_call.1} parent=43 // pred_region
          %p437 = scmp.lt.s32.totalorder %s39, 1
          %s438 = scalar_select %p437, %s39, 1
          %s439 = scalar_lea.vmem %s2, %s438
        $region56: #{tpu_custom_call.1} parent=43 // pred_fallthru
          _
      $region44: #{tpu_custom_call.1} parent=5 // pred_fallthru
        _
      %p440 = scmp.le.s32.totalorder 1, %s32
      %p441 = scmp.lt.s32.totalorder %s32, 3
      %p442 = pnand %p440, %p441
      %p443 = pneg %p442
      // Predicated region
      $region57: #{tpu_custom_call.1} parent=5 // pred_check
        _
      $region58: #{tpu_custom_call.1} parent=5 // pred_check_branch
        %445 = sbr.rel (%p442) target = $region60
      $region59: #{tpu_custom_call.1} parent=5 // pred_region
        %s446 = ssub.s32 %s32, 1
        %s447 = sand.u32 %s59, 1
        %s448 = scalar_lea.sflag [#allocation6], %s447
        %s449 = sand.u32 %s59, 1
        %s450 = smul.addr %s449, 8
        %s451 = scalar_lea.vmem [#allocation5], %s450
        // Predicated region
        $region61: #{tpu_custom_call.1} parent=59 // pred_check
          %p452 = pneg %p72
        $region62: #{tpu_custom_call.1} parent=59 // pred_check_branch
          %454 = sbr.rel (%p452) target = $region64
        $region63: #{tpu_custom_call.1} parent=59 // pred_region
          %455 = dma.done %s448, 128
        $region64: #{tpu_custom_call.1} parent=59 // pred_fallthru
          _
        %s456 = sand.u32 %s37, 1
        %s457 = scalar_lea.sflag [#allocation9], %s456
        %s458 = sand.u32 %s85, 1
        %s459 = smul.addr %s458, 8
        %s460 = scalar_lea.vmem [#allocation8], %s459
        // Predicated region
        $region65: #{tpu_custom_call.1} parent=59 // pred_check
          %p461 = pneg %p98
        $region66: #{tpu_custom_call.1} parent=59 // pred_check_branch
          %463 = sbr.rel (%p461) target = $region68
        $region67: #{tpu_custom_call.1} parent=59 // pred_region
          %464 = dma.done %s457, 128
        $region68: #{tpu_custom_call.1} parent=59 // pred_fallthru
          _
        // Predicated region
        $region69: #{tpu_custom_call.1} parent=59 // pred_check
          %p465 = pneg %p145
        $region70: #{tpu_custom_call.1} parent=59 // pred_check_branch
          %467 = sbr.rel (%p465) target = $region72
        $region71: #{tpu_custom_call.1} parent=59 // pred_region
          %468 = dma.done [#allocation9], 512
        $region72: #{tpu_custom_call.1} parent=59 // pred_fallthru
          _
        // Predicated region
        $region73: #{tpu_custom_call.1} parent=59 // pred_check
          %p469 = pneg %p187
        $region74: #{tpu_custom_call.1} parent=59 // pred_check_branch
          %471 = sbr.rel (%p469) target = $region76
        $region75: #{tpu_custom_call.1} parent=59 // pred_region
          %472 = dma.done [#allocation12], 512
        $region76: #{tpu_custom_call.1} parent=59 // pred_fallthru
          _
        // Predicated region
        $region77: #{tpu_custom_call.1} parent=59 // pred_check
          %p473 = pneg %p229
        $region78: #{tpu_custom_call.1} parent=59 // pred_check_branch
          %475 = sbr.rel (%p473) target = $region80
        $region79: #{tpu_custom_call.1} parent=59 // pred_region
          %476 = dma.done [#allocation12], 512
        $region80: #{tpu_custom_call.1} parent=59 // pred_fallthru
          _
        %s477 = sand.u32 %s59, 1
        %s478 = scalar_lea.sflag [#allocation6], %s477
        %s479 = sand.u32 %s59, 1
        %s480 = smul.addr %s479, 8
        %s481 = scalar_lea.vmem [#allocation5], %s480
        %p482 = pneg %p72
        %p483 = pneg %p69
        %s484 = sand.u32 %s37, 1
        %s485 = scalar_lea.sflag [#allocation9], %s484
        %s486 = sand.u32 %s85, 1
        %s487 = smul.addr %s486, 8
        %s488 = scalar_lea.vmem [#allocation8], %s487
        %p489 = pneg %p98
        %p490 = pneg %p95
        %p491 = scmp.lt.s32.totalorder %s41, 1
        %s492 = scalar_select %p491, %s41, 1
        %s493 = scalar_lea.vmem %s2, %s492
        %p494 = pneg %p124
        %p495 = pneg %p121
        %p496 = pneg %p145
        %p497 = pneg %p142
        %p498 = pneg %p166
        %p499 = pneg %p163
        %p500 = pneg %p187
        %p501 = pneg %p184
        %p502 = pneg %p208
        %p503 = pneg %p205
        %p504 = pneg %p229
        %p505 = pneg %p226
        %p506 = pneg %p250
        %p507 = pneg %p247
        %p508 = pneg %p271
        %p509 = pneg %p268
        %p510 = pneg %p299
        %p511 = pneg %p296
        %s512 = sand.u32 %s286, 1
        %s513 = scalar_lea.sflag [#allocation7], %s512
        %s514 = sand.u32 %s286, 1
        %s515 = smul.addr %s514, 8
        %s516 = scalar_lea.vmem [#allocation14], %s515
        %p517 = pneg %p327
        %p518 = pneg %p324
        %s519 = sand.u32 %s314, 1
        %s520 = scalar_lea.sflag [#allocation16], %s519
        %s521 = sand.u32 %s314, 1
        %s522 = smul.addr %s521, 32
        %s523 = scalar_lea.vmem [#allocation15], %s522
        %p524 = scmp.lt.s32.totalorder %s41, 1
        %s525 = scalar_select %p524, %s41, 1
        %s526 = scalar_lea.vmem %s2, %s525
        %p527 = scmp.eq.s32.totalorder %s42, 0
        // Predicated region
        $region81: #{tpu_custom_call.1} parent=59 // pred_check
          %p528 = pneg %p527
        $region82: #{tpu_custom_call.1} parent=59 // pred_check_branch
          %530 = sbr.rel (%p528) target = $region84
        $region83: #{tpu_custom_call.1} parent=59 // pred_region
          %v531 = vld [vmem:[%s460] sm:$0xff]
          %v532 = vld [vmem:[#allocation11] sm:$0xff]
          %v533 = vld [vmem:[#allocation11 + $0x8] sm:$0xff]
          %v534 = vld [vmem:[#allocation11 + $0x10] sm:$0xff]
          %v535 = vld [vmem:[#allocation11 + $0x18] sm:$0xff]
          %v536 = vld [vmem:[%s6] sm:$0x1]
          %v538 = vlaneseq
          %v539 = vshrl.u32 %v538, 7
          %v540 = vsub.s32 0, %v539
          %v541 = vrot.slane %v536, %v540
          %vm543 = vcmask 261120
          %v545 = vsel %vm543, %v531, 0
          %547 = vmatprep.subr.mxu0 0.0
          %548 = vmatpush1.msra.mxu0 %v532
          %549 = vmatprep.subr.mxu0 0.0
          %550 = vmatpush1.msra.mxu0 %v533
          %551 = vmatprep.subr.mxu0 0.0
          %552 = vmatpush1.msra.mxu0 %v534
          %553 = vmatprep.subr.mxu0 0.0
          %554 = vmatpush1.msra.mxu0 %v535
          %555 = vmatprep.subr.mxu0 0.0
          %556 = vmatpush1.msra.mxu0 0.0
          %557 = vmatprep.subr.mxu0 0.0
          %558 = vmatpush1.msra.mxu0 0.0
          %559 = vmatprep.subr.mxu0 0.0
          %560 = vmatpush1.msra.mxu0 0.0
          %561 = vmatprep.subr.mxu0 0.0
          %562 = vmatpush1.msra.mxu0 0.0
          %563 = vmatprep.subr.mxu0 0.0
          %564 = vmatpush1.msra.mxu0 0.0
          %565 = vmatprep.subr.mxu0 0.0
          %566 = vmatpush1.msra.mxu0 0.0
          %567 = vmatprep.subr.mxu0 0.0
          %568 = vmatpush1.msra.mxu0 0.0
          %569 = vmatprep.subr.mxu0 0.0
          %570 = vmatpush1.msra.mxu0 0.0
          %571 = vmatprep.subr.mxu0 0.0
          %572 = vmatpush1.msra.mxu0 0.0
          %573 = vmatprep.subr.mxu0 0.0
          %574 = vmatpush1.msra.mxu0 0.0
          %575 = vmatprep.subr.mxu0 0.0
          %576 = vmatpush1.msra.mxu0 0.0
          %577 = vmatprep.subr.mxu0 0.0
          %578 = vmatpush1.msra.mxu0 0.0
          %579 = vmatprep.subr.mxu0 0.0
          %580 = vmatpush1.msra.mxu0 0.0
          %581 = vmatprep.subr.mxu0 0.0
          %582 = vmatpush1.msra.mxu0 0.0
          %583 = vmatprep.subr.mxu0 0.0
          %584 = vmatpush1.msra.mxu0 0.0
          %585 = vmatprep.subr.mxu0 0.0
          %586 = vmatpush1.msra.mxu0 0.0
          %587 = vmatprep.subr.mxu0 0.0
          %588 = vmatpush1.msra.mxu0 0.0
          %589 = vmatprep.subr.mxu0 0.0
          %590 = vmatpush1.msra.mxu0 0.0
          %591 = vmatprep.subr.mxu0 0.0
          %592 = vmatpush1.msra.mxu0 0.0
          %593 = vmatprep.subr.mxu0 0.0
          %594 = vmatpush1.msra.mxu0 0.0
          %595 = vmatprep.subr.mxu0 0.0
          %596 = vmatpush1.msra.mxu0 0.0
          %597 = vmatprep.subr.mxu0 0.0
          %598 = vmatpush1.msra.mxu0 0.0
          %599 = vmatprep.subr.mxu0 0.0
          %600 = vmatpush1.msra.mxu0 0.0
          %601 = vmatprep.subr.mxu0 0.0
          %602 = vmatpush1.msra.mxu0 0.0
          %603 = vmatprep.subr.mxu0 0.0
          %604 = vmatpush1.msra.mxu0 0.0
          %605 = vmatprep.subr.mxu0 0.0
          %606 = vmatpush1.msra.mxu0 0.0
          %607 = vmatprep.subr.mxu0 0.0
          %608 = vmatpush1.msra.mxu0 0.0
          %609 = vmatprep.subr.mxu0 0.0
          %610 = vmatpush1.msra.mxu0 0.0
          %611 = vmatprep.mubr.f32.mxu0 0.0
          %612 = vmatmul.mubr.f32.gmra.mrb[0].mxu0 %v545
          %v613 = vpop.f32.mrb[0].mxu0
          %v614 = vadd.f32 %v541, %v613
          %v615 = vpop.f32.mrb[0].mxu0
          %616 = vdwg.mxu0
          %vm617 = vcmask 523264
          %618 = vst.msk [vmem:[#allocation2] sm:$0xff] %vm617, %v614
        $region84: #{tpu_custom_call.1} parent=59 // pred_fallthru
          _
        %v619 = vld [vmem:[%s451] sm:$0xff]
        %v620 = vld [vmem:[%s526] sm:$0x1]
        %v621 = vld [vmem:[#allocation10] sm:$0xff]
        %v622 = vld [vmem:[#allocation10 + $0x8] sm:$0xff]
        %v623 = vld [vmem:[#allocation10 + $0x10] sm:$0xff]
        %v624 = vld [vmem:[#allocation10 + $0x18] sm:$0xff]
        %v625 = vld [vmem:[%s4] sm:$0x1]
        %v627 = vlaneseq
        %v628 = vshrl.u32 %v627, 7
        %v629 = vsub.s32 0, %v628
        %v630 = vrot.slane %v625, %v629
        %vm632 = vcmask 261120
        %v634 = vsel %vm632, %v619, 0
        %636 = vmatprep.subr.mxu0 0.0
        %637 = vmatpush1.msra.mxu0 %v621
        %638 = vmatprep.subr.mxu0 0.0
        %639 = vmatpush1.msra.mxu0 %v622
        %640 = vmatprep.subr.mxu0 0.0
        %641 = vmatpush1.msra.mxu0 %v623
        %642 = vmatprep.subr.mxu0 0.0
        %643 = vmatpush1.msra.mxu0 %v624
        %644 = vmatprep.subr.mxu0 0.0
        %645 = vmatpush1.msra.mxu0 0.0
        %646 = vmatprep.subr.mxu0 0.0
        %647 = vmatpush1.msra.mxu0 0.0
        %648 = vmatprep.subr.mxu0 0.0
        %649 = vmatpush1.msra.mxu0 0.0
        %650 = vmatprep.subr.mxu0 0.0
        %651 = vmatpush1.msra.mxu0 0.0
        %652 = vmatprep.subr.mxu0 0.0
        %653 = vmatpush1.msra.mxu0 0.0
        %654 = vmatprep.subr.mxu0 0.0
        %655 = vmatpush1.msra.mxu0 0.0
        %656 = vmatprep.subr.mxu0 0.0
        %657 = vmatpush1.msra.mxu0 0.0
        %658 = vmatprep.subr.mxu0 0.0
        %659 = vmatpush1.msra.mxu0 0.0
        %660 = vmatprep.subr.mxu0 0.0
        %661 = vmatpush1.msra.mxu0 0.0
        %662 = vmatprep.subr.mxu0 0.0
        %663 = vmatpush1.msra.mxu0 0.0
        %664 = vmatprep.subr.mxu0 0.0
        %665 = vmatpush1.msra.mxu0 0.0
        %666 = vmatprep.subr.mxu0 0.0
        %667 = vmatpush1.msra.mxu0 0.0
        %668 = vmatprep.subr.mxu0 0.0
        %669 = vmatpush1.msra.mxu0 0.0
        %670 = vmatprep.subr.mxu0 0.0
        %671 = vmatpush1.msra.mxu0 0.0
        %672 = vmatprep.subr.mxu0 0.0
        %673 = vmatpush1.msra.mxu0 0.0
        %674 = vmatprep.subr.mxu0 0.0
        %675 = vmatpush1.msra.mxu0 0.0
        %676 = vmatprep.subr.mxu0 0.0
        %677 = vmatpush1.msra.mxu0 0.0
        %678 = vmatprep.subr.mxu0 0.0
        %679 = vmatpush1.msra.mxu0 0.0
        %680 = vmatprep.subr.mxu0 0.0
        %681 = vmatpush1.msra.mxu0 0.0
        %682 = vmatprep.subr.mxu0 0.0
        %683 = vmatpush1.msra.mxu0 0.0
        %684 = vmatprep.subr.mxu0 0.0
        %685 = vmatpush1.msra.mxu0 0.0
        %686 = vmatprep.subr.mxu0 0.0
        %687 = vmatpush1.msra.mxu0 0.0
        %688 = vmatprep.subr.mxu0 0.0
        %689 = vmatpush1.msra.mxu0 0.0
        %690 = vmatprep.subr.mxu0 0.0
        %691 = vmatpush1.msra.mxu0 0.0
        %692 = vmatprep.subr.mxu0 0.0
        %693 = vmatpush1.msra.mxu0 0.0
        %694 = vmatprep.subr.mxu0 0.0
        %695 = vmatpush1.msra.mxu0 0.0
        %696 = vmatprep.subr.mxu0 0.0
        %697 = vmatpush1.msra.mxu0 0.0
        %698 = vmatprep.subr.mxu0 0.0
        %699 = vmatpush1.msra.mxu0 0.0
        %700 = vmatprep.mubr.f32.mxu0 0.0
        %701 = vmatmul.mubr.f32.gmra.mrb[0].mxu0 %v634
        %v702 = vpop.f32.mrb[0].mxu0
        %v703 = vadd.f32 %v630, %v702
        %v704 = vpop.f32.mrb[0].mxu0
        %705 = vdwg.mxu0
        %v706 = vmul.f32 %v703, 0.35355338
        %v707 = vld [vmem:[#allocation2] sm:$0xff]
        %v709 = vlaneseq
        %v710 = vshrl.u32 %v709, 7
        %v711 = vsub.s32 0, %v710
        %v712 = vrot.slane %v620, %v711
        %vm714 = vcmask 64512
        %v716 = vsel %vm714, %v706, 0
        %v719 = vsel %vm714, %v707, 0
        %721 = vmatprep.subr.mxu0 0.0
        %722 = vmatpush1.xpose.msra.mxu0 %v719
        %723 = vmatprep.subr.mxu0 0.0
        %724 = vmatpush1.xpose.msra.mxu0 0.0
        %725 = vmatprep.subr.mxu0 0.0
        %726 = vmatpush1.xpose.msra.mxu0 0.0
        %727 = vmatprep.subr.mxu0 0.0
        %728 = vmatpush1.xpose.msra.mxu0 0.0
        %729 = vmatprep.subr.mxu0 0.0
        %730 = vmatpush1.xpose.msra.mxu0 0.0
        %731 = vmatprep.subr.mxu0 0.0
        %732 = vmatpush1.xpose.msra.mxu0 0.0
        %733 = vmatprep.subr.mxu0 0.0
        %734 = vmatpush1.xpose.msra.mxu0 0.0
        %735 = vmatprep.subr.mxu0 0.0
        %736 = vmatpush1.xpose.msra.mxu0 0.0
        %737 = vmatprep.subr.mxu0 0.0
        %738 = vmatpush1.xpose.msra.mxu0 0.0
        %739 = vmatprep.subr.mxu0 0.0
        %740 = vmatpush1.xpose.msra.mxu0 0.0
        %741 = vmatprep.subr.mxu0 0.0
        %742 = vmatpush1.xpose.msra.mxu0 0.0
        %743 = vmatprep.subr.mxu0 0.0
        %744 = vmatpush1.xpose.msra.mxu0 0.0
        %745 = vmatprep.subr.mxu0 0.0
        %746 = vmatpush1.xpose.msra.mxu0 0.0
        %747 = vmatprep.subr.mxu0 0.0
        %748 = vmatpush1.xpose.msra.mxu0 0.0
        %749 = vmatprep.subr.mxu0 0.0
        %750 = vmatpush1.xpose.msra.mxu0 0.0
        %751 = vmatprep.subr.mxu0 0.0
        %752 = vmatpush1.xpose.msra.mxu0 0.0
        %753 = vmatprep.subr.mxu0 0.0
        %754 = vmatpush1.xpose.msra.mxu0 0.0
        %755 = vmatprep.subr.mxu0 0.0
        %756 = vmatpush1.xpose.msra.mxu0 0.0
        %757 = vmatprep.subr.mxu0 0.0
        %758 = vmatpush1.xpose.msra.mxu0 0.0
        %759 = vmatprep.subr.mxu0 0.0
        %760 = vmatpush1.xpose.msra.mxu0 0.0
        %761 = vmatprep.subr.mxu0 0.0
        %762 = vmatpush1.xpose.msra.mxu0 0.0
        %763 = vmatprep.subr.mxu0 0.0
        %764 = vmatpush1.xpose.msra.mxu0 0.0
        %765 = vmatprep.subr.mxu0 0.0
        %766 = vmatpush1.xpose.msra.mxu0 0.0
        %767 = vmatprep.subr.mxu0 0.0
        %768 = vmatpush1.xpose.msra.mxu0 0.0
        %769 = vmatprep.subr.mxu0 0.0
        %770 = vmatpush1.xpose.msra.mxu0 0.0
        %771 = vmatprep.subr.mxu0 0.0
        %772 = vmatpush1.xpose.msra.mxu0 0.0
        %773 = vmatprep.subr.mxu0 0.0
        %774 = vmatpush1.xpose.msra.mxu0 0.0
        %775 = vmatprep.subr.mxu0 0.0
        %776 = vmatpush1.xpose.msra.mxu0 0.0
        %777 = vmatprep.subr.mxu0 0.0
        %778 = vmatpush1.xpose.msra.mxu0 0.0
        %779 = vmatprep.subr.mxu0 0.0
        %780 = vmatpush1.xpose.msra.mxu0 0.0
        %781 = vmatprep.subr.mxu0 0.0
        %782 = vmatpush1.xpose.msra.mxu0 0.0
        %783 = vmatprep.subr.mxu0 0.0
        %784 = vmatpush1.xpose.msra.mxu0 0.0
        %785 = vmatprep.mubr.f32.mxu0 0.0
        %786 = vmatmul.mubr.f32.gmra.mrb[0].mxu0 %v716
        %v787 = vpop.f32.mrb[0].mxu0
        %v788 = vadd.f32 %v712, %v787
        %v789 = vpop.f32.mrb[0].mxu0
        %790 = vdwg.mxu0
        %v791 = vsel %vm714, %v788, -inf
        %792 = vmax.xlane.f32.xlu0 %v791
        %v793 = vpop.xlane.xlu0 %792
        %v794 = vsub.f32 %v788, %v793
        %v795 = vmul.f32 %v794, 1.442695
        %v796 = vpow.pop %v795
        %v797 = vsel %vm714, %v796, 0.0
        %798 = vadd.xlane.f32.xlu0 %v797
        %v799 = vpop.xlane.xlu0 %798
        %v800 = vrcp.pop %v799
        %v801 = vmul.f32 %v796, %v800
        %802 = vst.msk [vmem:[%s523] sm:$0xff] %vm714, %v801
        %803 = vrot.lane.b32.xlu0 %v707, 96
        %v804 = vpop.permute.xlu0 %803
        %v807 = vsel %vm714, %v801, 0
        %809 = vmatprep.subr.mxu0 0.0
        %810 = vmatpush1.msra.mxu0 %v804
        %811 = vmatprep.subr.mxu0 0.0
        %812 = vmatpush1.msra.mxu0 0.0
        %813 = vmatprep.subr.mxu0 0.0
        %814 = vmatpush1.msra.mxu0 0.0
        %815 = vmatprep.subr.mxu0 0.0
        %816 = vmatpush1.msra.mxu0 0.0
        %817 = vmatprep.subr.mxu0 0.0
        %818 = vmatpush1.msra.mxu0 0.0
        %819 = vmatprep.subr.mxu0 0.0
        %820 = vmatpush1.msra.mxu0 0.0
        %821 = vmatprep.subr.mxu0 0.0
        %822 = vmatpush1.msra.mxu0 0.0
        %823 = vmatprep.subr.mxu0 0.0
        %824 = vmatpush1.msra.mxu0 0.0
        %825 = vmatprep.subr.mxu0 0.0
        %826 = vmatpush1.msra.mxu0 0.0
        %827 = vmatprep.subr.mxu0 0.0
        %828 = vmatpush1.msra.mxu0 0.0
        %829 = vmatprep.subr.mxu0 0.0
        %830 = vmatpush1.msra.mxu0 0.0
        %831 = vmatprep.subr.mxu0 0.0
        %832 = vmatpush1.msra.mxu0 0.0
        %833 = vmatprep.subr.mxu0 0.0
        %834 = vmatpush1.msra.mxu0 0.0
        %835 = vmatprep.subr.mxu0 0.0
        %836 = vmatpush1.msra.mxu0 0.0
        %837 = vmatprep.subr.mxu0 0.0
        %838 = vmatpush1.msra.mxu0 0.0
        %839 = vmatprep.subr.mxu0 0.0
        %840 = vmatpush1.msra.mxu0 0.0
        %841 = vmatprep.subr.mxu0 0.0
        %842 = vmatpush1.msra.mxu0 0.0
        %843 = vmatprep.subr.mxu0 0.0
        %844 = vmatpush1.msra.mxu0 0.0
        %845 = vmatprep.subr.mxu0 0.0
        %846 = vmatpush1.msra.mxu0 0.0
        %847 = vmatprep.subr.mxu0 0.0
        %848 = vmatpush1.msra.mxu0 0.0
        %849 = vmatprep.subr.mxu0 0.0
        %850 = vmatpush1.msra.mxu0 0.0
        %851 = vmatprep.subr.mxu0 0.0
        %852 = vmatpush1.msra.mxu0 0.0
        %853 = vmatprep.subr.mxu0 0.0
        %854 = vmatpush1.msra.mxu0 0.0
        %855 = vmatprep.subr.mxu0 0.0
        %856 = vmatpush1.msra.mxu0 0.0
        %857 = vmatprep.subr.mxu0 0.0
        %858 = vmatpush1.msra.mxu0 0.0
        %859 = vmatprep.subr.mxu0 0.0
        %860 = vmatpush1.msra.mxu0 0.0
        %861 = vmatprep.subr.mxu0 0.0
        %862 = vmatpush1.msra.mxu0 0.0
        %863 = vmatprep.subr.mxu0 0.0
        %864 = vmatpush1.msra.mxu0 0.0
        %865 = vmatprep.subr.mxu0 0.0
        %866 = vmatpush1.msra.mxu0 0.0
        %867 = vmatprep.subr.mxu0 0.0
        %868 = vmatpush1.msra.mxu0 0.0
        %869 = vmatprep.subr.mxu0 0.0
        %870 = vmatpush1.msra.mxu0 0.0
        %871 = vmatprep.subr.mxu0 0.0
        %872 = vmatpush1.msra.mxu0 0.0
        %873 = vmatprep.mubr.f32.mxu0 0.0
        %874 = vmatmul.mubr.f32.gmra.mrb[0].mxu0 %v807
        %v875 = vpop.f32.mrb[0].mxu0
        %v876 = vadd.f32 0.0, %v875
        %v877 = vpop.f32.mrb[0].mxu0
        %878 = vdwg.mxu0
        %879 = vst.msk [vmem:[#allocation3] sm:$0xff] %vm714, %v876
        %880 = vrot.lane.b32.xlu0 %v706, 120
        %v881 = vpop.permute.xlu0 %880
        %882 = vrot.lane.b32.xlu0 %v707, 120
        %v883 = vpop.permute.xlu0 %882
        %v884 = vsel %vm714, %v881, 0
        %v886 = vsel %vm714, %v883, 0
        %888 = vmatprep.subr.mxu0 0.0
        %889 = vmatpush1.xpose.msra.mxu0 %v886
        %890 = vmatprep.subr.mxu0 0.0
        %891 = vmatpush1.xpose.msra.mxu0 0.0
        %892 = vmatprep.subr.mxu0 0.0
        %893 = vmatpush1.xpose.msra.mxu0 0.0
        %894 = vmatprep.subr.mxu0 0.0
        %895 = vmatpush1.xpose.msra.mxu0 0.0
        %896 = vmatprep.subr.mxu0 0.0
        %897 = vmatpush1.xpose.msra.mxu0 0.0
        %898 = vmatprep.subr.mxu0 0.0
        %899 = vmatpush1.xpose.msra.mxu0 0.0
        %900 = vmatprep.subr.mxu0 0.0
        %901 = vmatpush1.xpose.msra.mxu0 0.0
        %902 = vmatprep.subr.mxu0 0.0
        %903 = vmatpush1.xpose.msra.mxu0 0.0
        %904 = vmatprep.subr.mxu0 0.0
        %905 = vmatpush1.xpose.msra.mxu0 0.0
        %906 = vmatprep.subr.mxu0 0.0
        %907 = vmatpush1.xpose.msra.mxu0 0.0
        %908 = vmatprep.subr.mxu0 0.0
        %909 = vmatpush1.xpose.msra.mxu0 0.0
        %910 = vmatprep.subr.mxu0 0.0
        %911 = vmatpush1.xpose.msra.mxu0 0.0
        %912 = vmatprep.subr.mxu0 0.0
        %913 = vmatpush1.xpose.msra.mxu0 0.0
        %914 = vmatprep.subr.mxu0 0.0
        %915 = vmatpush1.xpose.msra.mxu0 0.0
        %916 = vmatprep.subr.mxu0 0.0
        %917 = vmatpush1.xpose.msra.mxu0 0.0
        %918 = vmatprep.subr.mxu0 0.0
        %919 = vmatpush1.xpose.msra.mxu0 0.0
        %920 = vmatprep.subr.mxu0 0.0
        %921 = vmatpush1.xpose.msra.mxu0 0.0
        %922 = vmatprep.subr.mxu0 0.0
        %923 = vmatpush1.xpose.msra.mxu0 0.0
        %924 = vmatprep.subr.mxu0 0.0
        %925 = vmatpush1.xpose.msra.mxu0 0.0
        %926 = vmatprep.subr.mxu0 0.0
        %927 = vmatpush1.xpose.msra.mxu0 0.0
        %928 = vmatprep.subr.mxu0 0.0
        %929 = vmatpush1.xpose.msra.mxu0 0.0
        %930 = vmatprep.subr.mxu0 0.0
        %931 = vmatpush1.xpose.msra.mxu0 0.0
        %932 = vmatprep.subr.mxu0 0.0
        %933 = vmatpush1.xpose.msra.mxu0 0.0
        %934 = vmatprep.subr.mxu0 0.0
        %935 = vmatpush1.xpose.msra.mxu0 0.0
        %936 = vmatprep.subr.mxu0 0.0
        %937 = vmatpush1.xpose.msra.mxu0 0.0
        %938 = vmatprep.subr.mxu0 0.0
        %939 = vmatpush1.xpose.msra.mxu0 0.0
        %940 = vmatprep.subr.mxu0 0.0
        %941 = vmatpush1.xpose.msra.mxu0 0.0
        %942 = vmatprep.subr.mxu0 0.0
        %943 = vmatpush1.xpose.msra.mxu0 0.0
        %944 = vmatprep.subr.mxu0 0.0
        %945 = vmatpush1.xpose.msra.mxu0 0.0
        %946 = vmatprep.subr.mxu0 0.0
        %947 = vmatpush1.xpose.msra.mxu0 0.0
        %948 = vmatprep.subr.mxu0 0.0
        %949 = vmatpush1.xpose.msra.mxu0 0.0
        %950 = vmatprep.subr.mxu0 0.0
        %951 = vmatpush1.xpose.msra.mxu0 0.0
        %952 = vmatprep.mubr.f32.mxu0 0.0
        %953 = vmatmul.mubr.f32.gmra.mrb[0].mxu0 %v884
        %v954 = vpop.f32.mrb[0].mxu0
        %v955 = vadd.f32 %v712, %v954
        %v956 = vpop.f32.mrb[0].mxu0
        %957 = vdwg.mxu0
        %v958 = vsel %vm714, %v955, -inf
        %959 = vmax.xlane.f32.xlu0 %v958
        %v960 = vpop.xlane.xlu0 %959
        %v961 = vsub.f32 %v955, %v960
        %v962 = vmul.f32 %v961, 1.442695
        %v963 = vpow.pop %v962
        %v964 = vsel %vm714, %v963, 0.0
        %965 = vadd.xlane.f32.xlu0 %v964
        %v966 = vpop.xlane.xlu0 %965
        %v967 = vrcp.pop %v966
        %v968 = vmul.f32 %v963, %v967
        %s969 = scalar_lea.vmem %s523, 8 [#allocation15]
        %970 = vst.msk [vmem:[%s969] sm:$0xff] %vm714, %v968
        %971 = vrot.lane.b32.xlu0 %v707, 88
        %v972 = vpop.permute.xlu0 %971
        %v975 = vsel %vm714, %v968, 0
        %977 = vmatprep.subr.mxu0 0.0
        %978 = vmatpush1.msra.mxu0 %v972
        %979 = vmatprep.subr.mxu0 0.0
        %980 = vmatpush1.msra.mxu0 0.0
        %981 = vmatprep.subr.mxu0 0.0
        %982 = vmatpush1.msra.mxu0 0.0
        %983 = vmatprep.subr.mxu0 0.0
        %984 = vmatpush1.msra.mxu0 0.0
        %985 = vmatprep.subr.mxu0 0.0
        %986 = vmatpush1.msra.mxu0 0.0
        %987 = vmatprep.subr.mxu0 0.0
        %988 = vmatpush1.msra.mxu0 0.0
        %989 = vmatprep.subr.mxu0 0.0
        %990 = vmatpush1.msra.mxu0 0.0
        %991 = vmatprep.subr.mxu0 0.0
        %992 = vmatpush1.msra.mxu0 0.0
        %993 = vmatprep.subr.mxu0 0.0
        %994 = vmatpush1.msra.mxu0 0.0
        %995 = vmatprep.subr.mxu0 0.0
        %996 = vmatpush1.msra.mxu0 0.0
        %997 = vmatprep.subr.mxu0 0.0
        %998 = vmatpush1.msra.mxu0 0.0
        %999 = vmatprep.subr.mxu0 0.0
        %1000 = vmatpush1.msra.mxu0 0.0
        %1001 = vmatprep.subr.mxu0 0.0
        %1002 = vmatpush1.msra.mxu0 0.0
        %1003 = vmatprep.subr.mxu0 0.0
        %1004 = vmatpush1.msra.mxu0 0.0
        %1005 = vmatprep.subr.mxu0 0.0
        %1006 = vmatpush1.msra.mxu0 0.0
        %1007 = vmatprep.subr.mxu0 0.0
        %1008 = vmatpush1.msra.mxu0 0.0
        %1009 = vmatprep.subr.mxu0 0.0
        %1010 = vmatpush1.msra.mxu0 0.0
        %1011 = vmatprep.subr.mxu0 0.0
        %1012 = vmatpush1.msra.mxu0 0.0
        %1013 = vmatprep.subr.mxu0 0.0
        %1014 = vmatpush1.msra.mxu0 0.0
        %1015 = vmatprep.subr.mxu0 0.0
        %1016 = vmatpush1.msra.mxu0 0.0
        %1017 = vmatprep.subr.mxu0 0.0
        %1018 = vmatpush1.msra.mxu0 0.0
        %1019 = vmatprep.subr.mxu0 0.0
        %1020 = vmatpush1.msra.mxu0 0.0
        %1021 = vmatprep.subr.mxu0 0.0
        %1022 = vmatpush1.msra.mxu0 0.0
        %1023 = vmatprep.subr.mxu0 0.0
        %1024 = vmatpush1.msra.mxu0 0.0
        %1025 = vmatprep.subr.mxu0 0.0
        %1026 = vmatpush1.msra.mxu0 0.0
        %1027 = vmatprep.subr.mxu0 0.0
        %1028 = vmatpush1.msra.mxu0 0.0
        %1029 = vmatprep.subr.mxu0 0.0
        %1030 = vmatpush1.msra.mxu0 0.0
        %1031 = vmatprep.subr.mxu0 0.0
        %1032 = vmatpush1.msra.mxu0 0.0
        %1033 = vmatprep.subr.mxu0 0.0
        %1034 = vmatpush1.msra.mxu0 0.0
        %1035 = vmatprep.subr.mxu0 0.0
        %1036 = vmatpush1.msra.mxu0 0.0
        %1037 = vmatprep.subr.mxu0 0.0
        %1038 = vmatpush1.msra.mxu0 0.0
        %1039 = vmatprep.subr.mxu0 0.0
        %1040 = vmatpush1.msra.mxu0 0.0
        %1041 = vmatprep.mubr.f32.mxu0 0.0
        %1042 = vmatmul.mubr.f32.gmra.mrb[0].mxu0 %v975
        %v1043 = vpop.f32.mrb[0].mxu0
        %v1044 = vadd.f32 0.0, %v1043
        %v1045 = vpop.f32.mrb[0].mxu0
        %1046 = vdwg.mxu0
        %1048 = vrot.lane.b32.xlu0 %v1044, 8
        %v1049 = vpop.permute.xlu0 %1048
        %vm1051 = vcmask 130112
        %1052 = vst.msk [vmem:[#allocation3] sm:$0xff] %vm1051, %v1049
        %1053 = vrot.lane.b32.xlu0 %v706, 112
        %v1054 = vpop.permute.xlu0 %1053
        %1055 = vrot.lane.b32.xlu0 %v707, 112
        %v1056 = vpop.permute.xlu0 %1055
        %v1057 = vsel %vm714, %v1054, 0
        %v1059 = vsel %vm714, %v1056, 0
        %1061 = vmatprep.subr.mxu0 0.0
        %1062 = vmatpush1.xpose.msra.mxu0 %v1059
        %1063 = vmatprep.subr.mxu0 0.0
        %1064 = vmatpush1.xpose.msra.mxu0 0.0
        %1065 = vmatprep.subr.mxu0 0.0
        %1066 = vmatpush1.xpose.msra.mxu0 0.0
        %1067 = vmatprep.subr.mxu0 0.0
        %1068 = vmatpush1.xpose.msra.mxu0 0.0
        %1069 = vmatprep.subr.mxu0 0.0
        %1070 = vmatpush1.xpose.msra.mxu0 0.0
        %1071 = vmatprep.subr.mxu0 0.0
        %1072 = vmatpush1.xpose.msra.mxu0 0.0
        %1073 = vmatprep.subr.mxu0 0.0
        %1074 = vmatpush1.xpose.msra.mxu0 0.0
        %1075 = vmatprep.subr.mxu0 0.0
        %1076 = vmatpush1.xpose.msra.mxu0 0.0
        %1077 = vmatprep.subr.mxu0 0.0
        %1078 = vmatpush1.xpose.msra.mxu0 0.0
        %1079 = vmatprep.subr.mxu0 0.0
        %1080 = vmatpush1.xpose.msra.mxu0 0.0
        %1081 = vmatprep.subr.mxu0 0.0
        %1082 = vmatpush1.xpose.msra.mxu0 0.0
        %1083 = vmatprep.subr.mxu0 0.0
        %1084 = vmatpush1.xpose.msra.mxu0 0.0
        %1085 = vmatprep.subr.mxu0 0.0
        %1086 = vmatpush1.xpose.msra.mxu0 0.0
        %1087 = vmatprep.subr.mxu0 0.0
        %1088 = vmatpush1.xpose.msra.mxu0 0.0
        %1089 = vmatprep.subr.mxu0 0.0
        %1090 = vmatpush1.xpose.msra.mxu0 0.0
        %1091 = vmatprep.subr.mxu0 0.0
        %1092 = vmatpush1.xpose.msra.mxu0 0.0
        %1093 = vmatprep.subr.mxu0 0.0
        %1094 = vmatpush1.xpose.msra.mxu0 0.0
        %1095 = vmatprep.subr.mxu0 0.0
        %1096 = vmatpush1.xpose.msra.mxu0 0.0
        %1097 = vmatprep.subr.mxu0 0.0
        %1098 = vmatpush1.xpose.msra.mxu0 0.0
        %1099 = vmatprep.subr.mxu0 0.0
        %1100 = vmatpush1.xpose.msra.mxu0 0.0
        %1101 = vmatprep.subr.mxu0 0.0
        %1102 = vmatpush1.xpose.msra.mxu0 0.0
        %1103 = vmatprep.subr.mxu0 0.0
        %1104 = vmatpush1.xpose.msra.mxu0 0.0
        %1105 = vmatprep.subr.mxu0 0.0
        %1106 = vmatpush1.xpose.msra.mxu0 0.0
        %1107 = vmatprep.subr.mxu0 0.0
        %1108 = vmatpush1.xpose.msra.mxu0 0.0
        %1109 = vmatprep.subr.mxu0 0.0
        %1110 = vmatpush1.xpose.msra.mxu0 0.0
        %1111 = vmatprep.subr.mxu0 0.0
        %1112 = vmatpush1.xpose.msra.mxu0 0.0
        %1113 = vmatprep.subr.mxu0 0.0
        %1114 = vmatpush1.xpose.msra.mxu0 0.0
        %1115 = vmatprep.subr.mxu0 0.0
        %1116 = vmatpush1.xpose.msra.mxu0 0.0
        %1117 = vmatprep.subr.mxu0 0.0
        %1118 = vmatpush1.xpose.msra.mxu0 0.0
        %1119 = vmatprep.subr.mxu0 0.0
        %1120 = vmatpush1.xpose.msra.mxu0 0.0
        %1121 = vmatprep.subr.mxu0 0.0
        %1122 = vmatpush1.xpose.msra.mxu0 0.0
        %1123 = vmatprep.subr.mxu0 0.0
        %1124 = vmatpush1.xpose.msra.mxu0 0.0
        %1125 = vmatprep.mubr.f32.mxu0 0.0
        %1126 = vmatmul.mubr.f32.gmra.mrb[0].mxu0 %v1057
        %v1127 = vpop.f32.mrb[0].mxu0
        %v1128 = vadd.f32 %v712, %v1127
        %v1129 = vpop.f32.mrb[0].mxu0
        %1130 = vdwg.mxu0
        %v1131 = vsel %vm714, %v1128, -inf
        %1132 = vmax.xlane.f32.xlu0 %v1131
        %v1133 = vpop.xlane.xlu0 %1132
        %v1134 = vsub.f32 %v1128, %v1133
        %v1135 = vmul.f32 %v1134, 1.442695
        %v1136 = vpow.pop %v1135
        %v1137 = vsel %vm714, %v1136, 0.0
        %1138 = vadd.xlane.f32.xlu0 %v1137
        %v1139 = vpop.xlane.xlu0 %1138
        %v1140 = vrcp.pop %v1139
        %v1141 = vmul.f32 %v1136, %v1140
        %s1142 = scalar_lea.vmem %s523, 16 [#allocation15]
        %1143 = vst.msk [vmem:[%s1142] sm:$0xff] %vm714, %v1141
        %1144 = vrot.lane.b32.xlu0 %v707, 80
        %v1145 = vpop.permute.xlu0 %1144
        %v1148 = vsel %vm714, %v1141, 0
        %1150 = vmatprep.subr.mxu0 0.0
        %1151 = vmatpush1.msra.mxu0 %v1145
        %1152 = vmatprep.subr.mxu0 0.0
        %1153 = vmatpush1.msra.mxu0 0.0
        %1154 = vmatprep.subr.mxu0 0.0
        %1155 = vmatpush1.msra.mxu0 0.0
        %1156 = vmatprep.subr.mxu0 0.0
        %1157 = vmatpush1.msra.mxu0 0.0
        %1158 = vmatprep.subr.mxu0 0.0
        %1159 = vmatpush1.msra.mxu0 0.0
        %1160 = vmatprep.subr.mxu0 0.0
        %1161 = vmatpush1.msra.mxu0 0.0
        %1162 = vmatprep.subr.mxu0 0.0
        %1163 = vmatpush1.msra.mxu0 0.0
        %1164 = vmatprep.subr.mxu0 0.0
        %1165 = vmatpush1.msra.mxu0 0.0
        %1166 = vmatprep.subr.mxu0 0.0
        %1167 = vmatpush1.msra.mxu0 0.0
        %1168 = vmatprep.subr.mxu0 0.0
        %1169 = vmatpush1.msra.mxu0 0.0
        %1170 = vmatprep.subr.mxu0 0.0
        %1171 = vmatpush1.msra.mxu0 0.0
        %1172 = vmatprep.subr.mxu0 0.0
        %1173 = vmatpush1.msra.mxu0 0.0
        %1174 = vmatprep.subr.mxu0 0.0
        %1175 = vmatpush1.msra.mxu0 0.0
        %1176 = vmatprep.subr.mxu0 0.0
        %1177 = vmatpush1.msra.mxu0 0.0
        %1178 = vmatprep.subr.mxu0 0.0
        %1179 = vmatpush1.msra.mxu0 0.0
        %1180 = vmatprep.subr.mxu0 0.0
        %1181 = vmatpush1.msra.mxu0 0.0
        %1182 = vmatprep.subr.mxu0 0.0
        %1183 = vmatpush1.msra.mxu0 0.0
        %1184 = vmatprep.subr.mxu0 0.0
        %1185 = vmatpush1.msra.mxu0 0.0
        %1186 = vmatprep.subr.mxu0 0.0
        %1187 = vmatpush1.msra.mxu0 0.0
        %1188 = vmatprep.subr.mxu0 0.0
        %1189 = vmatpush1.msra.mxu0 0.0
        %1190 = vmatprep.subr.mxu0 0.0
        %1191 = vmatpush1.msra.mxu0 0.0
        %1192 = vmatprep.subr.mxu0 0.0
        %1193 = vmatpush1.msra.mxu0 0.0
        %1194 = vmatprep.subr.mxu0 0.0
        %1195 = vmatpush1.msra.mxu0 0.0
        %1196 = vmatprep.subr.mxu0 0.0
        %1197 = vmatpush1.msra.mxu0 0.0
        %1198 = vmatprep.subr.mxu0 0.0
        %1199 = vmatpush1.msra.mxu0 0.0
        %1200 = vmatprep.subr.mxu0 0.0
        %1201 = vmatpush1.msra.mxu0 0.0
        %1202 = vmatprep.subr.mxu0 0.0
        %1203 = vmatpush1.msra.mxu0 0.0
        %1204 = vmatprep.subr.mxu0 0.0
        %1205 = vmatpush1.msra.mxu0 0.0
        %1206 = vmatprep.subr.mxu0 0.0
        %1207 = vmatpush1.msra.mxu0 0.0
        %1208 = vmatprep.subr.mxu0 0.0
        %1209 = vmatpush1.msra.mxu0 0.0
        %1210 = vmatprep.subr.mxu0 0.0
        %1211 = vmatpush1.msra.mxu0 0.0
        %1212 = vmatprep.subr.mxu0 0.0
        %1213 = vmatpush1.msra.mxu0 0.0
        %1214 = vmatprep.mubr.f32.mxu0 0.0
        %1215 = vmatmul.mubr.f32.gmra.mrb[0].mxu0 %v1148
        %v1216 = vpop.f32.mrb[0].mxu0
        %v1217 = vadd.f32 0.0, %v1216
        %v1218 = vpop.f32.mrb[0].mxu0
        %1219 = vdwg.mxu0
        %1221 = vrot.lane.b32.xlu0 %v1217, 16
        %v1222 = vpop.permute.xlu0 %1221
        %vm1224 = vcmask 195712
        %1225 = vst.msk [vmem:[#allocation3] sm:$0xff] %vm1224, %v1222
        %1226 = vrot.lane.b32.xlu0 %v706, 104
        %v1227 = vpop.permute.xlu0 %1226
        %1228 = vrot.lane.b32.xlu0 %v707, 104
        %v1229 = vpop.permute.xlu0 %1228
        %v1230 = vsel %vm714, %v1227, 0
        %v1232 = vsel %vm714, %v1229, 0
        %1234 = vmatprep.subr.mxu0 0.0
        %1235 = vmatpush1.xpose.msra.mxu0 %v1232
        %1236 = vmatprep.subr.mxu0 0.0
        %1237 = vmatpush1.xpose.msra.mxu0 0.0
        %1238 = vmatprep.subr.mxu0 0.0
        %1239 = vmatpush1.xpose.msra.mxu0 0.0
        %1240 = vmatprep.subr.mxu0 0.0
        %1241 = vmatpush1.xpose.msra.mxu0 0.0
        %1242 = vmatprep.subr.mxu0 0.0
        %1243 = vmatpush1.xpose.msra.mxu0 0.0
        %1244 = vmatprep.subr.mxu0 0.0
        %1245 = vmatpush1.xpose.msra.mxu0 0.0
        %1246 = vmatprep.subr.mxu0 0.0
        %1247 = vmatpush1.xpose.msra.mxu0 0.0
        %1248 = vmatprep.subr.mxu0 0.0
        %1249 = vmatpush1.xpose.msra.mxu0 0.0
        %1250 = vmatprep.subr.mxu0 0.0
        %1251 = vmatpush1.xpose.msra.mxu0 0.0
        %1252 = vmatprep.subr.mxu0 0.0
        %1253 = vmatpush1.xpose.msra.mxu0 0.0
        %1254 = vmatprep.subr.mxu0 0.0
        %1255 = vmatpush1.xpose.msra.mxu0 0.0
        %1256 = vmatprep.subr.mxu0 0.0
        %1257 = vmatpush1.xpose.msra.mxu0 0.0
        %1258 = vmatprep.subr.mxu0 0.0
        %1259 = vmatpush1.xpose.msra.mxu0 0.0
        %1260 = vmatprep.subr.mxu0 0.0
        %1261 = vmatpush1.xpose.msra.mxu0 0.0
        %1262 = vmatprep.subr.mxu0 0.0
        %1263 = vmatpush1.xpose.msra.mxu0 0.0
        %1264 = vmatprep.subr.mxu0 0.0
        %1265 = vmatpush1.xpose.msra.mxu0 0.0
        %1266 = vmatprep.subr.mxu0 0.0
        %1267 = vmatpush1.xpose.msra.mxu0 0.0
        %1268 = vmatprep.subr.mxu0 0.0
        %1269 = vmatpush1.xpose.msra.mxu0 0.0
        %1270 = vmatprep.subr.mxu0 0.0
        %1271 = vmatpush1.xpose.msra.mxu0 0.0
        %1272 = vmatprep.subr.mxu0 0.0
        %1273 = vmatpush1.xpose.msra.mxu0 0.0
        %1274 = vmatprep.subr.mxu0 0.0
        %1275 = vmatpush1.xpose.msra.mxu0 0.0
        %1276 = vmatprep.subr.mxu0 0.0
        %1277 = vmatpush1.xpose.msra.mxu0 0.0
        %1278 = vmatprep.subr.mxu0 0.0
        %1279 = vmatpush1.xpose.msra.mxu0 0.0
        %1280 = vmatprep.subr.mxu0 0.0
        %1281 = vmatpush1.xpose.msra.mxu0 0.0
        %1282 = vmatprep.subr.mxu0 0.0
        %1283 = vmatpush1.xpose.msra.mxu0 0.0
        %1284 = vmatprep.subr.mxu0 0.0
        %1285 = vmatpush1.xpose.msra.mxu0 0.0
        %1286 = vmatprep.subr.mxu0 0.0
        %1287 = vmatpush1.xpose.msra.mxu0 0.0
        %1288 = vmatprep.subr.mxu0 0.0
        %1289 = vmatpush1.xpose.msra.mxu0 0.0
        %1290 = vmatprep.subr.mxu0 0.0
        %1291 = vmatpush1.xpose.msra.mxu0 0.0
        %1292 = vmatprep.subr.mxu0 0.0
        %1293 = vmatpush1.xpose.msra.mxu0 0.0
        %1294 = vmatprep.subr.mxu0 0.0
        %1295 = vmatpush1.xpose.msra.mxu0 0.0
        %1296 = vmatprep.subr.mxu0 0.0
        %1297 = vmatpush1.xpose.msra.mxu0 0.0
        %1298 = vmatprep.mubr.f32.mxu0 0.0
        %1299 = vmatmul.mubr.f32.gmra.mrb[0].mxu0 %v1230
        %v1300 = vpop.f32.mrb[0].mxu0
        %v1301 = vadd.f32 %v712, %v1300
        %v1302 = vpop.f32.mrb[0].mxu0
        %1303 = vdwg.mxu0
        %v1304 = vsel %vm714, %v1301, -inf
        %1305 = vmax.xlane.f32.xlu0 %v1304
        %v1306 = vpop.xlane.xlu0 %1305
        %v1307 = vsub.f32 %v1301, %v1306
        %v1308 = vmul.f32 %v1307, 1.442695
        %v1309 = vpow.pop %v1308
        %v1310 = vsel %vm714, %v1309, 0.0
        %1311 = vadd.xlane.f32.xlu0 %v1310
        %v1312 = vpop.xlane.xlu0 %1311
        %v1313 = vrcp.pop %v1312
        %v1314 = vmul.f32 %v1309, %v1313
        %s1315 = scalar_lea.vmem %s523, 24 [#allocation15]
        %1316 = vst.msk [vmem:[%s1315] sm:$0xff] %vm714, %v1314
        %1317 = vrot.lane.b32.xlu0 %v707, 72
        %v1318 = vpop.permute.xlu0 %1317
        %v1321 = vsel %vm714, %v1314, 0
        %1323 = vmatprep.subr.mxu0 0.0
        %1324 = vmatpush1.msra.mxu0 %v1318
        %1325 = vmatprep.subr.mxu0 0.0
        %1326 = vmatpush1.msra.mxu0 0.0
        %1327 = vmatprep.subr.mxu0 0.0
        %1328 = vmatpush1.msra.mxu0 0.0
        %1329 = vmatprep.subr.mxu0 0.0
        %1330 = vmatpush1.msra.mxu0 0.0
        %1331 = vmatprep.subr.mxu0 0.0
        %1332 = vmatpush1.msra.mxu0 0.0
        %1333 = vmatprep.subr.mxu0 0.0
        %1334 = vmatpush1.msra.mxu0 0.0
        %1335 = vmatprep.subr.mxu0 0.0
        %1336 = vmatpush1.msra.mxu0 0.0
        %1337 = vmatprep.subr.mxu0 0.0
        %1338 = vmatpush1.msra.mxu0 0.0
        %1339 = vmatprep.subr.mxu0 0.0
        %1340 = vmatpush1.msra.mxu0 0.0
        %1341 = vmatprep.subr.mxu0 0.0
        %1342 = vmatpush1.msra.mxu0 0.0
        %1343 = vmatprep.subr.mxu0 0.0
        %1344 = vmatpush1.msra.mxu0 0.0
        %1345 = vmatprep.subr.mxu0 0.0
        %1346 = vmatpush1.msra.mxu0 0.0
        %1347 = vmatprep.subr.mxu0 0.0
        %1348 = vmatpush1.msra.mxu0 0.0
        %1349 = vmatprep.subr.mxu0 0.0
        %1350 = vmatpush1.msra.mxu0 0.0
        %1351 = vmatprep.subr.mxu0 0.0
        %1352 = vmatpush1.msra.mxu0 0.0
        %1353 = vmatprep.subr.mxu0 0.0
        %1354 = vmatpush1.msra.mxu0 0.0
        %1355 = vmatprep.subr.mxu0 0.0
        %1356 = vmatpush1.msra.mxu0 0.0
        %1357 = vmatprep.subr.mxu0 0.0
        %1358 = vmatpush1.msra.mxu0 0.0
        %1359 = vmatprep.subr.mxu0 0.0
        %1360 = vmatpush1.msra.mxu0 0.0
        %1361 = vmatprep.subr.mxu0 0.0
        %1362 = vmatpush1.msra.mxu0 0.0
        %1363 = vmatprep.subr.mxu0 0.0
        %1364 = vmatpush1.msra.mxu0 0.0
        %1365 = vmatprep.subr.mxu0 0.0
        %1366 = vmatpush1.msra.mxu0 0.0
        %1367 = vmatprep.subr.mxu0 0.0
        %1368 = vmatpush1.msra.mxu0 0.0
        %1369 = vmatprep.subr.mxu0 0.0
        %1370 = vmatpush1.msra.mxu0 0.0
        %1371 = vmatprep.subr.mxu0 0.0
        %1372 = vmatpush1.msra.mxu0 0.0
        %1373 = vmatprep.subr.mxu0 0.0
        %1374 = vmatpush1.msra.mxu0 0.0
        %1375 = vmatprep.subr.mxu0 0.0
        %1376 = vmatpush1.msra.mxu0 0.0
        %1377 = vmatprep.subr.mxu0 0.0
        %1378 = vmatpush1.msra.mxu0 0.0
        %1379 = vmatprep.subr.mxu0 0.0
        %1380 = vmatpush1.msra.mxu0 0.0
        %1381 = vmatprep.subr.mxu0 0.0
        %1382 = vmatpush1.msra.mxu0 0.0
        %1383 = vmatprep.subr.mxu0 0.0
        %1384 = vmatpush1.msra.mxu0 0.0
        %1385 = vmatprep.subr.mxu0 0.0
        %1386 = vmatpush1.msra.mxu0 0.0
        %1387 = vmatprep.mubr.f32.mxu0 0.0
        %1388 = vmatmul.mubr.f32.gmra.mrb[0].mxu0 %v1321
        %v1389 = vpop.f32.mrb[0].mxu0
        %v1390 = vadd.f32 0.0, %v1389
        %v1391 = vpop.f32.mrb[0].mxu0
        %1392 = vdwg.mxu0
        %1394 = vrot.lane.b32.xlu0 %v1390, 24
        %v1395 = vpop.permute.xlu0 %1394
        %vm1397 = vcmask 261312
        %1398 = vst.msk [vmem:[#allocation3] sm:$0xff] %vm1397, %v1395
        %v1399 = vld [vmem:[#allocation3] sm:$0xff]
        %v1400 = vld [vmem:[#allocation13] sm:$0xff]
        %v1401 = vld [vmem:[#allocation13 + $0x8] sm:$0xff]
        %v1402 = vld [vmem:[#allocation13 + $0x10] sm:$0xff]
        %v1403 = vld [vmem:[#allocation13 + $0x18] sm:$0xff]
        %v1404 = vld [vmem:[%s8] sm:$0x1]
        %v1406 = vlaneseq
        %v1407 = vshrl.u32 %v1406, 7
        %v1408 = vsub.s32 0, %v1407
        %v1409 = vrot.slane %v1404, %v1408
        %v1412 = vsel %vm632, %v1399, 0
        %1414 = vmatprep.subr.mxu0 0.0
        %1415 = vmatpush1.msra.mxu0 %v1400
        %1416 = vmatprep.subr.mxu0 0.0
        %1417 = vmatpush1.msra.mxu0 %v1401
        %1418 = vmatprep.subr.mxu0 0.0
        %1419 = vmatpush1.msra.mxu0 %v1402
        %1420 = vmatprep.subr.mxu0 0.0
        %1421 = vmatpush1.msra.mxu0 %v1403
        %1422 = vmatprep.subr.mxu0 0.0
        %1423 = vmatpush1.msra.mxu0 0.0
        %1424 = vmatprep.subr.mxu0 0.0
        %1425 = vmatpush1.msra.mxu0 0.0
        %1426 = vmatprep.subr.mxu0 0.0
        %1427 = vmatpush1.msra.mxu0 0.0
        %1428 = vmatprep.subr.mxu0 0.0
        %1429 = vmatpush1.msra.mxu0 0.0
        %1430 = vmatprep.subr.mxu0 0.0
        %1431 = vmatpush1.msra.mxu0 0.0
        %1432 = vmatprep.subr.mxu0 0.0
        %1433 = vmatpush1.msra.mxu0 0.0
        %1434 = vmatprep.subr.mxu0 0.0
        %1435 = vmatpush1.msra.mxu0 0.0
        %1436 = vmatprep.subr.mxu0 0.0
        %1437 = vmatpush1.msra.mxu0 0.0
        %1438 = vmatprep.subr.mxu0 0.0
        %1439 = vmatpush1.msra.mxu0 0.0
        %1440 = vmatprep.subr.mxu0 0.0
        %1441 = vmatpush1.msra.mxu0 0.0
        %1442 = vmatprep.subr.mxu0 0.0
        %1443 = vmatpush1.msra.mxu0 0.0
        %1444 = vmatprep.subr.mxu0 0.0
        %1445 = vmatpush1.msra.mxu0 0.0
        %1446 = vmatprep.subr.mxu0 0.0
        %1447 = vmatpush1.msra.mxu0 0.0
        %1448 = vmatprep.subr.mxu0 0.0
        %1449 = vmatpush1.msra.mxu0 0.0
        %1450 = vmatprep.subr.mxu0 0.0
        %1451 = vmatpush1.msra.mxu0 0.0
        %1452 = vmatprep.subr.mxu0 0.0
        %1453 = vmatpush1.msra.mxu0 0.0
        %1454 = vmatprep.subr.mxu0 0.0
        %1455 = vmatpush1.msra.mxu0 0.0
        %1456 = vmatprep.subr.mxu0 0.0
        %1457 = vmatpush1.msra.mxu0 0.0
        %1458 = vmatprep.subr.mxu0 0.0
        %1459 = vmatpush1.msra.mxu0 0.0
        %1460 = vmatprep.subr.mxu0 0.0
        %1461 = vmatpush1.msra.mxu0 0.0
        %1462 = vmatprep.subr.mxu0 0.0
        %1463 = vmatpush1.msra.mxu0 0.0
        %1464 = vmatprep.subr.mxu0 0.0
        %1465 = vmatpush1.msra.mxu0 0.0
        %1466 = vmatprep.subr.mxu0 0.0
        %1467 = vmatpush1.msra.mxu0 0.0
        %1468 = vmatprep.subr.mxu0 0.0
        %1469 = vmatpush1.msra.mxu0 0.0
        %1470 = vmatprep.subr.mxu0 0.0
        %1471 = vmatpush1.msra.mxu0 0.0
        %1472 = vmatprep.subr.mxu0 0.0
        %1473 = vmatpush1.msra.mxu0 0.0
        %1474 = vmatprep.subr.mxu0 0.0
        %1475 = vmatpush1.msra.mxu0 0.0
        %1476 = vmatprep.subr.mxu0 0.0
        %1477 = vmatpush1.msra.mxu0 0.0
        %1478 = vmatprep.mubr.f32.mxu0 0.0
        %1479 = vmatmul.mubr.f32.gmra.mrb[0].mxu0 %v1412
        %v1480 = vpop.f32.mrb[0].mxu0
        %v1481 = vadd.f32 %v1409, %v1480
        %v1482 = vpop.f32.mrb[0].mxu0
        %1483 = vdwg.mxu0
        %s1484 = sld [smem:[#allocation4]]
        %v1485 = vstv %s1484
        %v1486 = vmul.f32 %v1481, %v1485
        %1487 = vst.msk [vmem:[%s516] sm:$0xff] %vm632, %v1486
        %s1488 = sand.u32 %s286, 1
        %s1489 = scalar_lea.sflag [#allocation7], %s1488
        %s1490 = sand.u32 %s286, 1
        %s1491 = smul.addr %s1490, 8
        %s1492 = scalar_lea.vmem [#allocation14], %s1491
        %s1493 = sand.u32 %s314, 1
        %s1494 = scalar_lea.sflag [#allocation16], %s1493
        %s1495 = sand.u32 %s314, 1
        %s1496 = smul.addr %s1495, 32
        %s1497 = scalar_lea.vmem [#allocation15], %s1496
        // Predicated region
        $region85: #{tpu_custom_call.1} parent=59 // pred_check
          %p1498 = pneg %p296
        $region86: #{tpu_custom_call.1} parent=59 // pred_check_branch
          %1500 = sbr.rel (%p1498) target = $region88
        $region87: #{tpu_custom_call.1} parent=59 // pred_region
          %s1502 = ssub.s32 128, 128
          %1503 = vsyncadd %s1489, %s1502
          %s1504 = sadd.s32 %s42, %s41
          %s1505 = smul.addr %s1504, 128
          %s1506 = scalar_lea.hbm %s10, %s1505
          %s1508 = sshll.u32 %s1492, 4
          %s1509 = int_to_ptr.vmem [resolvable:$true] %s1508
          %1511 = dma.vmem_to_hbm [thread:$0]  %s1509, 128, %s1506, %s1489
        $region88: #{tpu_custom_call.1} parent=59 // pred_fallthru
          _
        // Predicated region
        $region89: #{tpu_custom_call.1} parent=59 // pred_check
          %p1512 = pneg %p324
        $region90: #{tpu_custom_call.1} parent=59 // pred_check_branch
          %1514 = sbr.rel (%p1512) target = $region92
        $region91: #{tpu_custom_call.1} parent=59 // pred_region
          %s1516 = ssub.s32 512, 512
          %1517 = vsyncadd %s1494, %s1516
          %s1518 = smul.addr %s41, 4
          %s1519 = sadd.s32 %s42, %s1518
          %s1520 = smul.addr %s1519, 128
          %s1521 = scalar_lea.hbm %s11, %s1520
          %s1522 = sshll.u32 %s1497, 4
          %s1523 = int_to_ptr.vmem [resolvable:$true] %s1522
          %1528 = dma.vmem_to_hbm [thread:$0]  %s1523, 512, %s1521, %s1494, 128, 128, 8
        $region92: #{tpu_custom_call.1} parent=59 // pred_fallthru
          _
      $region60: #{tpu_custom_call.1} parent=5 // pred_fallthru
        _
      %p1529 = scmp.le.s32.totalorder 2, %s32
      // Predicated region
      $region93: #{tpu_custom_call.1} parent=5 // pred_check
        %p1530 = pneg %p1529
      $region94: #{tpu_custom_call.1} parent=5 // pred_check_branch
        %1532 = sbr.rel (%p1530) target = $region96
      $region95: #{tpu_custom_call.1} parent=5 // pred_region
        %s1533 = ssub.s32 %s32, 2
        // Predicated region
        $region97: #{tpu_custom_call.1} parent=95 // pred_check
          %p1534 = pneg %p302
        $region98: #{tpu_custom_call.1} parent=95 // pred_check_branch
          %1536 = sbr.rel (%p1534) target = $region100
        $region99: #{tpu_custom_call.1} parent=95 // pred_region
          %s1537 = sand.u32 %s287, 1
          %s1538 = scalar_lea.sflag [#allocation7], %s1537
          %s1539 = sand.u32 %s287, 1
          %s1540 = smul.addr %s1539, 8
          %s1541 = scalar_lea.vmem [#allocation14], %s1540
          %1542 = dma.done %s1538, 128
        $region100: #{tpu_custom_call.1} parent=95 // pred_fallthru
          _
        // Predicated region
        $region101: #{tpu_custom_call.1} parent=95 // pred_check
          %p1543 = pneg %p330
        $region102: #{tpu_custom_call.1} parent=95 // pred_check_branch
          %1545 = sbr.rel (%p1543) target = $region104
        $region103: #{tpu_custom_call.1} parent=95 // pred_region
          %s1546 = sand.u32 %s315, 1
          %s1547 = scalar_lea.sflag [#allocation16], %s1546
          %s1548 = sand.u32 %s315, 1
          %s1549 = smul.addr %s1548, 32
          %s1550 = scalar_lea.vmem [#allocation15], %s1549
          %1551 = dma.done %s1547, 512
        $region104: #{tpu_custom_call.1} parent=95 // pred_fallthru
          _
      $region96: #{tpu_custom_call.1} parent=5 // pred_fallthru
        _
    $region6: #{tpu_custom_call.1} parent=1 // loop_footer
      %s36 = sadd.s32 1, %s32
    $region7: #{tpu_custom_call.1} parent=1 // loop_footer_branch
      %31 = sbr.rel target = $region3
    $region8: #{tpu_custom_call.1} parent=1 // loop_exit
      _
    %1552 = vsyncpa [#allocation6], 1
    %s1553 = scalar_lea.sflag [#allocation6], 1
    %1554 = vsyncpa %s1553, 1
    %1555 = vsyncpa [#allocation9], 1
    %s1556 = scalar_lea.sflag [#allocation9], 1
    %1557 = vsyncpa %s1556, 1
    %1558 = vsyncpa [#allocation12], 1
    %1559 = vsyncpa [#allocation7], 1
    %s1560 = scalar_lea.sflag [#allocation7], 1
    %1561 = vsyncpa %s1560, 1
    %1562 = vsyncpa [#allocation16], 1
    %s1563 = scalar_lea.sflag [#allocation16], 1
    %1564 = vsyncpa %s1563, 1

</llo_original>
